<compile_context>
chip_gen: v6e
topology: v6e:2x2x1
jax: 0.10.0
libtpu: 0.0.40
codegen_flags: <defaults>
</compile_context>

<pallas_src>
import jax
import jax.numpy as jnp
from jax.experimental import pallas as pl
from jax.experimental.pallas import tpu as pltpu


# ----------------------------------------------------------------------------
# Fused kernel factory (static num_layers / T / B / H).
# Ref order: [x2d, x_static, (w_ih_t, w_hh_t, bias) * L,
#             w1_lstm_t, w1_static_t, b1, w2_t, b2_smem] , out
# Kernel gate column order: [i, f, o, g] (reordered from PyTorch's [i, f, g, o]
# at pack time so the sigmoid block is one contiguous 3H-lane slice).
# Weights are pre-transposed to (in_dim, out_dim).
# ----------------------------------------------------------------------------
def _make_fused_kernel(num_layers, T, B, H):
    H3 = 3 * H
    H4 = 4 * H

    def kernel(*refs):
        x_ref, xs_ref = refs[0], refs[1]
        layer_refs = [tuple(refs[2 + 3 * l: 5 + 3 * l]) for l in range(num_layers)]
        off = 2 + 3 * num_layers
        w1l_ref, w1s_ref, b1_ref, w2_ref, b2_ref = refs[off: off + 5]
        o_ref = refs[off + 5]

        # ---- Layer 0: hoisted input projection, one matmul for all T steps --
        wih0_ref, _, b0_ref = layer_refs[0]
        gx_all = (jnp.dot(x_ref[...], wih0_ref[...],
                          preferred_element_type=jnp.float32)
                  + b0_ref[...])                                  # (B*T, 4H)
        gx3 = gx_all.reshape(B, T, H4)                            # batch-major
        # Static middle-dim slices; no h-dependency, so the scheduler can
        # overlap these XLU extracts with the recurrence.
        gx_list = [gx3[:, t, :] for t in range(T)]                # T x (B, 4H)

        def run_layer(gx_list, whh_ref, nxt):
            """Run one LSTM layer; optionally emit the next layer's gx tiles."""
            whh = whh_ref[...]                                    # (H, 4H)
            if nxt is not None:
                wih_n = nxt[0][...]                               # (H, 4H)
                b_n = nxt[1][...]                                 # (1, 4H)
            h = jnp.zeros((B, H), jnp.float32)
            c = jnp.zeros((B, H), jnp.float32)
            next_gx = []
            # Fully unrolled static time loop; h/c and gx tiles stay in vregs.
            for t in range(T):
                g = gx_list[t] + jnp.dot(h, whh,
                                         preferred_element_type=jnp.float32)
                # Columns are [i | f | o | g]: sigmoid on first 3H lanes only,
                # tanh on the last H lanes only.
                sg = jax.nn.sigmoid(g[:, :H3])                    # (B, 3H)
                gg = jnp.tanh(g[:, H3:])                          # (B, H)
                i_g = sg[:, 0 * H:1 * H]
                f_g = sg[:, 1 * H:2 * H]
                o_g = sg[:, 2 * H:H3]
                c = f_g * c + i_g * gg
                h = o_g * jnp.tanh(c)
                if nxt is not None:
                    # Next layer's input projection, computed incrementally
                    # (lane-dense (B,4H) tile kept in vregs; replaces the old
                    # masked (B,H) scratch store + reload + big matmul).
                    next_gx.append(jnp.dot(h, wih_n,
                                           preferred_element_type=jnp.float32)
                                   + b_n)
            return h, next_gx

        # ---- stacked LSTM layers -------------------------------------------
        h_last = None
        for l in range(num_layers):
            _, whh_ref, _ = layer_refs[l]
            nxt = None
            if l + 1 < num_layers:
                nxt = (layer_refs[l + 1][0], layer_refs[l + 1][2])
            h_last, gx_list = run_layer(gx_list, whh_ref, nxt)
            # TODO(synk): inter-layer dropout skipped (eval-mode == identity).

        # ---- FC head: concat folded into split matmuls ----------------------
        hid = (jnp.dot(h_last, w1l_ref[...], preferred_element_type=jnp.float32)
               + jnp.dot(xs_ref[...], w1s_ref[...],
                         preferred_element_type=jnp.float32)
               + b1_ref[...])
        hid = jnp.maximum(hid, 0.0)           # ReLU; dropout is identity in eval.
        out = (jnp.dot(hid, w2_ref[...], preferred_element_type=jnp.float32)
               + b2_ref[0])                   # scalar bias from SMEM
        o_ref[...] = out.astype(o_ref.dtype)

    return kernel


# ----------------------------------------------------------------------------
# Full model forward (one pallas_call, no wrapper-side transpose).
# ----------------------------------------------------------------------------
@jax.jit
def lstm_classifier_v2_forward(x_temp, x_static, params):
    B, T, D = x_temp.shape
    H = params["lstm_layers"][0][1].shape[0]          # w_hh_t is (H, 4H)
    num_layers = len(params["lstm_layers"])

    # Batch-major flatten is metadata-only in XLA (no transpose, no extra
    # HBM round trip, no separate dispatch).
    x2d = x_temp.astype(jnp.float32).reshape(B * T, D)

    inputs = [x2d, x_static.astype(jnp.float32)]
    for (w_ih_t, w_hh_t, bias_row) in params["lstm_layers"]:
        inputs += [w_ih_t, w_hh_t, bias_row]
    inputs += [params["fc_w1l_t"], params["fc_w1s_t"], params["fc_b1"],
               params["fc_w2_t"], params["fc_b2"]]

    vmem = pl.BlockSpec(memory_space=pltpu.MemorySpace.VMEM)
    smem = pl.BlockSpec(memory_space=pltpu.MemorySpace.SMEM)
    in_specs = [vmem] * (len(inputs) - 1) + [smem]    # last input (b2) -> SMEM

    return pl.pallas_call(
        _make_fused_kernel(num_layers, T, B, H),
        out_shape=jax.ShapeDtypeStruct((B, 1), jnp.float32),
        in_specs=in_specs,
        out_specs=vmem,
    )(*inputs)


# ----------------------------------------------------------------------------
# Parameter init (PyTorch nn.LSTM / nn.Linear layout) + pack to kernel layout.
# ----------------------------------------------------------------------------
def init_torch_params(key, lstm_input_size, lstm_hidden_size, lstm_num_layers,
                      n_static_feats):
    """Deterministic params in PyTorch shapes / gate order [i, f, g, o]."""
    H = lstm_hidden_size
    lstm = []
    for layer in range(lstm_num_layers):
        in_dim = lstm_input_size if layer == 0 else H
        key, k1, k2, k3, k4 = jax.random.split(key, 5)
        bound = 1.0 / jnp.sqrt(H)
        w_ih = jax.random.uniform(k1, (4 * H, in_dim), jnp.float32, -bound, bound)
        w_hh = jax.random.uniform(k2, (4 * H, H), jnp.float32, -bound, bound)
        b_ih = jax.random.uniform(k3, (4 * H,), jnp.float32, -bound, bound)
        b_hh = jax.random.uniform(k4, (4 * H,), jnp.float32, -bound, bound)
        lstm.append((w_ih, w_hh, b_ih, b_hh))

    fc_in = H + n_static_feats
    key, k1, k2, k3, k4 = jax.random.split(key, 5)
    b1 = 1.0 / jnp.sqrt(fc_in)
    w1 = jax.random.uniform(k1, (128, fc_in), jnp.float32, -b1, b1)   # Linear(fc_in, 128)
    bb1 = jax.random.uniform(k2, (128,), jnp.float32, -b1, b1)
    b2 = 1.0 / jnp.sqrt(128.0)
    w2 = jax.random.uniform(k3, (1, 128), jnp.float32, -b2, b2)       # Linear(128, 1)
    bb2 = jax.random.uniform(k4, (1,), jnp.float32, -b2, b2)
    return {"lstm": lstm, "fc_w1": w1, "fc_b1": bb1, "fc_w2": w2, "fc_b2": bb2}


def pack_params(torch_params, lstm_hidden_size):
    """Convert PyTorch-layout params to the kernel layout (done once, offline):
       - fold b_ih + b_hh,
       - transpose weights to (in_dim, out_dim),
       - reorder gate columns [i, f, g, o] -> [i, f, o, g],
       - split FC1 weights into the lstm / static halves (concat folded)."""
    H = lstm_hidden_size
    perm = jnp.concatenate([jnp.arange(0, 2 * H),        # i, f
                            jnp.arange(3 * H, 4 * H),    # o
                            jnp.arange(2 * H, 3 * H)])   # g
    lstm_layers = []
    for (w_ih, w_hh, b_ih, b_hh) in torch_params["lstm"]:
        lstm_layers.append((
            jnp.transpose(w_ih[perm]),                   # (in_dim, 4H)
            jnp.transpose(w_hh[perm]),                   # (H, 4H)
            (b_ih + b_hh)[perm].reshape(1, 4 * H),       # (1, 4H)
        ))
    w1_t = jnp.transpose(torch_params["fc_w1"])          # (H + S, 128)
    return {
        "lstm_layers": lstm_layers,
        "fc_w1l_t": w1_t[:H],                            # (H, 128)
        "fc_w1s_t": w1_t[H:],                            # (S, 128)
        "fc_b1": torch_params["fc_b1"].reshape(1, 128),
        "fc_w2_t": jnp.transpose(torch_params["fc_w2"]), # (128, 1)
        "fc_b2": torch_params["fc_b2"].reshape(1,),      # scalar, lives in SMEM
    }


if __name__ == "__main__":
    # Small shapes consistent with the module's forward.
    B, T = 8, 8
    lstm_input_size = 16
    lstm_hidden_size = 32
    lstm_num_layers = 2
    n_static_feats = 8

    key = jax.random.PRNGKey(0)
    kx, ks, kp = jax.random.split(key, 3)
    x_temp = jax.random.normal(kx, (B, T, lstm_input_size), jnp.float32)
    x_static = jax.random.normal(ks, (B, n_static_feats), jnp.float32)

    torch_params = init_torch_params(kp, lstm_input_size, lstm_hidden_size,
                                     lstm_num_layers, n_static_feats)
    params = pack_params(torch_params, lstm_hidden_size)

    logits = lstm_classifier_v2_forward(x_temp, x_static, params)
    logits = jax.block_until_ready(logits)
    assert logits.shape == (B, 1)
    assert bool(jnp.all(jnp.isfinite(logits)))
    print("KERNEL_OK")
</pallas_src>

<mosaic_0001>
module attributes {stable_mosaic.version = 11 : i64} {
  func.func @kernel(%arg0: memref<64x16xf32, #tpu.memory_space<vmem>>, %arg1: memref<8x8xf32, #tpu.memory_space<vmem>>, %arg2: memref<16x128xf32, #tpu.memory_space<vmem>>, %arg3: memref<32x128xf32, #tpu.memory_space<vmem>>, %arg4: memref<1x128xf32, #tpu.memory_space<vmem>>, %arg5: memref<32x128xf32, #tpu.memory_space<vmem>>, %arg6: memref<32x128xf32, #tpu.memory_space<vmem>>, %arg7: memref<1x128xf32, #tpu.memory_space<vmem>>, %arg8: memref<32x128xf32, #tpu.memory_space<vmem>>, %arg9: memref<8x128xf32, #tpu.memory_space<vmem>>, %arg10: memref<1x128xf32, #tpu.memory_space<vmem>>, %arg11: memref<128x1xf32, #tpu.memory_space<vmem>>, %arg12: memref<1xf32, #tpu.memory_space<smem>>, %arg13: memref<8x1xf32, #tpu.memory_space<vmem>>) attributes {dimension_semantics = [], scalar_prefetch = 0 : i64, scratch_operands = 0 : i64, tpu.core_type = #tpu.core_type<tc>} {
    %c0 = arith.constant 0 : index
    %c0_0 = arith.constant 0 : index
    %0 = vector.load %arg0[%c0, %c0_0] : memref<64x16xf32, #tpu.memory_space<vmem>>, vector<64x16xf32>
    %c0_1 = arith.constant 0 : index
    %c0_2 = arith.constant 0 : index
    %1 = vector.load %arg2[%c0_1, %c0_2] : memref<16x128xf32, #tpu.memory_space<vmem>>, vector<16x128xf32>
    %cst = arith.constant dense<0.000000e+00> : vector<64x128xf32>
    %2 = tpu.matmul %0, %1, %cst {dimension_numbers = #tpu.dot_dimension_numbers<[1], [0], [0], [1], [0, 0, 1, 1], [], []>} : vector<64x16xf32>, vector<16x128xf32>, vector<64x128xf32> -> vector<64x128xf32>
    %c0_3 = arith.constant 0 : index
    %c0_4 = arith.constant 0 : index
    %3 = vector.load %arg4[%c0_3, %c0_4] : memref<1x128xf32, #tpu.memory_space<vmem>>, vector<1x128xf32>
    %4 = vector.broadcast %3 : vector<1x128xf32> to vector<64x128xf32>
    %5 = arith.addf %2, %4 : vector<64x128xf32>
    %6 = vector.shape_cast %5 : vector<64x128xf32> to vector<8x8x128xf32>
    %7 = vector.extract_strided_slice %6 {offsets = [0, 0, 0], sizes = [8, 1, 128], strides = [1, 1, 1]} : vector<8x8x128xf32> to vector<8x1x128xf32>
    %8 = vector.shape_cast %7 : vector<8x1x128xf32> to vector<8x128xf32>
    %9 = vector.extract_strided_slice %6 {offsets = [0, 1, 0], sizes = [8, 1, 128], strides = [1, 1, 1]} : vector<8x8x128xf32> to vector<8x1x128xf32>
    %10 = vector.shape_cast %9 : vector<8x1x128xf32> to vector<8x128xf32>
    %11 = vector.extract_strided_slice %6 {offsets = [0, 2, 0], sizes = [8, 1, 128], strides = [1, 1, 1]} : vector<8x8x128xf32> to vector<8x1x128xf32>
    %12 = vector.shape_cast %11 : vector<8x1x128xf32> to vector<8x128xf32>
    %13 = vector.extract_strided_slice %6 {offsets = [0, 3, 0], sizes = [8, 1, 128], strides = [1, 1, 1]} : vector<8x8x128xf32> to vector<8x1x128xf32>
    %14 = vector.shape_cast %13 : vector<8x1x128xf32> to vector<8x128xf32>
    %15 = vector.extract_strided_slice %6 {offsets = [0, 4, 0], sizes = [8, 1, 128], strides = [1, 1, 1]} : vector<8x8x128xf32> to vector<8x1x128xf32>
    %16 = vector.shape_cast %15 : vector<8x1x128xf32> to vector<8x128xf32>
    %17 = vector.extract_strided_slice %6 {offsets = [0, 5, 0], sizes = [8, 1, 128], strides = [1, 1, 1]} : vector<8x8x128xf32> to vector<8x1x128xf32>
    %18 = vector.shape_cast %17 : vector<8x1x128xf32> to vector<8x128xf32>
    %19 = vector.extract_strided_slice %6 {offsets = [0, 6, 0], sizes = [8, 1, 128], strides = [1, 1, 1]} : vector<8x8x128xf32> to vector<8x1x128xf32>
    %20 = vector.shape_cast %19 : vector<8x1x128xf32> to vector<8x128xf32>
    %21 = vector.extract_strided_slice %6 {offsets = [0, 7, 0], sizes = [8, 1, 128], strides = [1, 1, 1]} : vector<8x8x128xf32> to vector<8x1x128xf32>
    %22 = vector.shape_cast %21 : vector<8x1x128xf32> to vector<8x128xf32>
    %c0_5 = arith.constant 0 : index
    %c0_6 = arith.constant 0 : index
    %23 = vector.load %arg3[%c0_5, %c0_6] : memref<32x128xf32, #tpu.memory_space<vmem>>, vector<32x128xf32>
    %c0_7 = arith.constant 0 : index
    %c0_8 = arith.constant 0 : index
    %24 = vector.load %arg5[%c0_7, %c0_8] : memref<32x128xf32, #tpu.memory_space<vmem>>, vector<32x128xf32>
    %c0_9 = arith.constant 0 : index
    %c0_10 = arith.constant 0 : index
    %25 = vector.load %arg7[%c0_9, %c0_10] : memref<1x128xf32, #tpu.memory_space<vmem>>, vector<1x128xf32>
    %cst_11 = arith.constant 0.000000e+00 : f32
    %26 = vector.broadcast %cst_11 : f32 to vector<8x32xf32>
    %cst_12 = arith.constant 0.000000e+00 : f32
    %27 = vector.broadcast %cst_12 : f32 to vector<8x32xf32>
    %cst_13 = arith.constant dense<0.000000e+00> : vector<8x128xf32>
    %28 = tpu.matmul %26, %23, %cst_13 {dimension_numbers = #tpu.dot_dimension_numbers<[1], [0], [0], [1], [0, 0, 1, 1], [], []>} : vector<8x32xf32>, vector<32x128xf32>, vector<8x128xf32> -> vector<8x128xf32>
    %29 = arith.addf %8, %28 : vector<8x128xf32>
    %30 = vector.extract_strided_slice %29 {offsets = [0, 0], sizes = [8, 96], strides = [1, 1]} : vector<8x128xf32> to vector<8x96xf32>
    %31 = arith.negf %30 : vector<8x96xf32>
    %32 = math.exp %31 : vector<8x96xf32>
    %cst_14 = arith.constant 1.000000e+00 : f32
    %33 = vector.broadcast %cst_14 : f32 to vector<8x96xf32>
    %34 = arith.addf %33, %32 : vector<8x96xf32>
    %35 = arith.divf %33, %34 : vector<8x96xf32>
    %36 = vector.extract_strided_slice %29 {offsets = [0, 96], sizes = [8, 32], strides = [1, 1]} : vector<8x128xf32> to vector<8x32xf32>
    %37 = math.tanh %36 : vector<8x32xf32>
    %38 = vector.extract_strided_slice %35 {offsets = [0, 0], sizes = [8, 32], strides = [1, 1]} : vector<8x96xf32> to vector<8x32xf32>
    %39 = vector.extract_strided_slice %35 {offsets = [0, 32], sizes = [8, 32], strides = [1, 1]} : vector<8x96xf32> to vector<8x32xf32>
    %40 = vector.extract_strided_slice %35 {offsets = [0, 64], sizes = [8, 32], strides = [1, 1]} : vector<8x96xf32> to vector<8x32xf32>
    %41 = arith.mulf %39, %27 : vector<8x32xf32>
    %42 = arith.mulf %38, %37 : vector<8x32xf32>
    %43 = arith.addf %41, %42 : vector<8x32xf32>
    %44 = math.tanh %43 : vector<8x32xf32>
    %45 = arith.mulf %40, %44 : vector<8x32xf32>
    %cst_15 = arith.constant dense<0.000000e+00> : vector<8x128xf32>
    %46 = tpu.matmul %45, %24, %cst_15 {dimension_numbers = #tpu.dot_dimension_numbers<[1], [0], [0], [1], [0, 0, 1, 1], [], []>} : vector<8x32xf32>, vector<32x128xf32>, vector<8x128xf32> -> vector<8x128xf32>
    %47 = vector.broadcast %25 : vector<1x128xf32> to vector<8x128xf32>
    %48 = arith.addf %46, %47 : vector<8x128xf32>
    %cst_16 = arith.constant dense<0.000000e+00> : vector<8x128xf32>
    %49 = tpu.matmul %45, %23, %cst_16 {dimension_numbers = #tpu.dot_dimension_numbers<[1], [0], [0], [1], [0, 0, 1, 1], [], []>} : vector<8x32xf32>, vector<32x128xf32>, vector<8x128xf32> -> vector<8x128xf32>
    %50 = arith.addf %10, %49 : vector<8x128xf32>
    %51 = vector.extract_strided_slice %50 {offsets = [0, 0], sizes = [8, 96], strides = [1, 1]} : vector<8x128xf32> to vector<8x96xf32>
    %52 = arith.negf %51 : vector<8x96xf32>
    %53 = math.exp %52 : vector<8x96xf32>
    %cst_17 = arith.constant 1.000000e+00 : f32
    %54 = vector.broadcast %cst_17 : f32 to vector<8x96xf32>
    %55 = arith.addf %54, %53 : vector<8x96xf32>
    %56 = arith.divf %54, %55 : vector<8x96xf32>
    %57 = vector.extract_strided_slice %50 {offsets = [0, 96], sizes = [8, 32], strides = [1, 1]} : vector<8x128xf32> to vector<8x32xf32>
    %58 = math.tanh %57 : vector<8x32xf32>
    %59 = vector.extract_strided_slice %56 {offsets = [0, 0], sizes = [8, 32], strides = [1, 1]} : vector<8x96xf32> to vector<8x32xf32>
    %60 = vector.extract_strided_slice %56 {offsets = [0, 32], sizes = [8, 32], strides = [1, 1]} : vector<8x96xf32> to vector<8x32xf32>
    %61 = vector.extract_strided_slice %56 {offsets = [0, 64], sizes = [8, 32], strides = [1, 1]} : vector<8x96xf32> to vector<8x32xf32>
    %62 = arith.mulf %60, %43 : vector<8x32xf32>
    %63 = arith.mulf %59, %58 : vector<8x32xf32>
    %64 = arith.addf %62, %63 : vector<8x32xf32>
    %65 = math.tanh %64 : vector<8x32xf32>
    %66 = arith.mulf %61, %65 : vector<8x32xf32>
    %cst_18 = arith.constant dense<0.000000e+00> : vector<8x128xf32>
    %67 = tpu.matmul %66, %24, %cst_18 {dimension_numbers = #tpu.dot_dimension_numbers<[1], [0], [0], [1], [0, 0, 1, 1], [], []>} : vector<8x32xf32>, vector<32x128xf32>, vector<8x128xf32> -> vector<8x128xf32>
    %68 = vector.broadcast %25 : vector<1x128xf32> to vector<8x128xf32>
    %69 = arith.addf %67, %68 : vector<8x128xf32>
    %cst_19 = arith.constant dense<0.000000e+00> : vector<8x128xf32>
    %70 = tpu.matmul %66, %23, %cst_19 {dimension_numbers = #tpu.dot_dimension_numbers<[1], [0], [0], [1], [0, 0, 1, 1], [], []>} : vector<8x32xf32>, vector<32x128xf32>, vector<8x128xf32> -> vector<8x128xf32>
    %71 = arith.addf %12, %70 : vector<8x128xf32>
    %72 = vector.extract_strided_slice %71 {offsets = [0, 0], sizes = [8, 96], strides = [1, 1]} : vector<8x128xf32> to vector<8x96xf32>
    %73 = arith.negf %72 : vector<8x96xf32>
    %74 = math.exp %73 : vector<8x96xf32>
    %cst_20 = arith.constant 1.000000e+00 : f32
    %75 = vector.broadcast %cst_20 : f32 to vector<8x96xf32>
    %76 = arith.addf %75, %74 : vector<8x96xf32>
    %77 = arith.divf %75, %76 : vector<8x96xf32>
    %78 = vector.extract_strided_slice %71 {offsets = [0, 96], sizes = [8, 32], strides = [1, 1]} : vector<8x128xf32> to vector<8x32xf32>
    %79 = math.tanh %78 : vector<8x32xf32>
    %80 = vector.extract_strided_slice %77 {offsets = [0, 0], sizes = [8, 32], strides = [1, 1]} : vector<8x96xf32> to vector<8x32xf32>
    %81 = vector.extract_strided_slice %77 {offsets = [0, 32], sizes = [8, 32], strides = [1, 1]} : vector<8x96xf32> to vector<8x32xf32>
    %82 = vector.extract_strided_slice %77 {offsets = [0, 64], sizes = [8, 32], strides = [1, 1]} : vector<8x96xf32> to vector<8x32xf32>
    %83 = arith.mulf %81, %64 : vector<8x32xf32>
    %84 = arith.mulf %80, %79 : vector<8x32xf32>
    %85 = arith.addf %83, %84 : vector<8x32xf32>
    %86 = math.tanh %85 : vector<8x32xf32>
    %87 = arith.mulf %82, %86 : vector<8x32xf32>
    %cst_21 = arith.constant dense<0.000000e+00> : vector<8x128xf32>
    %88 = tpu.matmul %87, %24, %cst_21 {dimension_numbers = #tpu.dot_dimension_numbers<[1], [0], [0], [1], [0, 0, 1, 1], [], []>} : vector<8x32xf32>, vector<32x128xf32>, vector<8x128xf32> -> vector<8x128xf32>
    %89 = vector.broadcast %25 : vector<1x128xf32> to vector<8x128xf32>
    %90 = arith.addf %88, %89 : vector<8x128xf32>
    %cst_22 = arith.constant dense<0.000000e+00> : vector<8x128xf32>
    %91 = tpu.matmul %87, %23, %cst_22 {dimension_numbers = #tpu.dot_dimension_numbers<[1], [0], [0], [1], [0, 0, 1, 1], [], []>} : vector<8x32xf32>, vector<32x128xf32>, vector<8x128xf32> -> vector<8x128xf32>
    %92 = arith.addf %14, %91 : vector<8x128xf32>
    %93 = vector.extract_strided_slice %92 {offsets = [0, 0], sizes = [8, 96], strides = [1, 1]} : vector<8x128xf32> to vector<8x96xf32>
    %94 = arith.negf %93 : vector<8x96xf32>
    %95 = math.exp %94 : vector<8x96xf32>
    %cst_23 = arith.constant 1.000000e+00 : f32
    %96 = vector.broadcast %cst_23 : f32 to vector<8x96xf32>
    %97 = arith.addf %96, %95 : vector<8x96xf32>
    %98 = arith.divf %96, %97 : vector<8x96xf32>
    %99 = vector.extract_strided_slice %92 {offsets = [0, 96], sizes = [8, 32], strides = [1, 1]} : vector<8x128xf32> to vector<8x32xf32>
    %100 = math.tanh %99 : vector<8x32xf32>
    %101 = vector.extract_strided_slice %98 {offsets = [0, 0], sizes = [8, 32], strides = [1, 1]} : vector<8x96xf32> to vector<8x32xf32>
    %102 = vector.extract_strided_slice %98 {offsets = [0, 32], sizes = [8, 32], strides = [1, 1]} : vector<8x96xf32> to vector<8x32xf32>
    %103 = vector.extract_strided_slice %98 {offsets = [0, 64], sizes = [8, 32], strides = [1, 1]} : vector<8x96xf32> to vector<8x32xf32>
    %104 = arith.mulf %102, %85 : vector<8x32xf32>
    %105 = arith.mulf %101, %100 : vector<8x32xf32>
    %106 = arith.addf %104, %105 : vector<8x32xf32>
    %107 = math.tanh %106 : vector<8x32xf32>
    %108 = arith.mulf %103, %107 : vector<8x32xf32>
    %cst_24 = arith.constant dense<0.000000e+00> : vector<8x128xf32>
    %109 = tpu.matmul %108, %24, %cst_24 {dimension_numbers = #tpu.dot_dimension_numbers<[1], [0], [0], [1], [0, 0, 1, 1], [], []>} : vector<8x32xf32>, vector<32x128xf32>, vector<8x128xf32> -> vector<8x128xf32>
    %110 = vector.broadcast %25 : vector<1x128xf32> to vector<8x128xf32>
    %111 = arith.addf %109, %110 : vector<8x128xf32>
    %cst_25 = arith.constant dense<0.000000e+00> : vector<8x128xf32>
    %112 = tpu.matmul %108, %23, %cst_25 {dimension_numbers = #tpu.dot_dimension_numbers<[1], [0], [0], [1], [0, 0, 1, 1], [], []>} : vector<8x32xf32>, vector<32x128xf32>, vector<8x128xf32> -> vector<8x128xf32>
    %113 = arith.addf %16, %112 : vector<8x128xf32>
    %114 = vector.extract_strided_slice %113 {offsets = [0, 0], sizes = [8, 96], strides = [1, 1]} : vector<8x128xf32> to vector<8x96xf32>
    %115 = arith.negf %114 : vector<8x96xf32>
    %116 = math.exp %115 : vector<8x96xf32>
    %cst_26 = arith.constant 1.000000e+00 : f32
    %117 = vector.broadcast %cst_26 : f32 to vector<8x96xf32>
    %118 = arith.addf %117, %116 : vector<8x96xf32>
    %119 = arith.divf %117, %118 : vector<8x96xf32>
    %120 = vector.extract_strided_slice %113 {offsets = [0, 96], sizes = [8, 32], strides = [1, 1]} : vector<8x128xf32> to vector<8x32xf32>
    %121 = math.tanh %120 : vector<8x32xf32>
    %122 = vector.extract_strided_slice %119 {offsets = [0, 0], sizes = [8, 32], strides = [1, 1]} : vector<8x96xf32> to vector<8x32xf32>
    %123 = vector.extract_strided_slice %119 {offsets = [0, 32], sizes = [8, 32], strides = [1, 1]} : vector<8x96xf32> to vector<8x32xf32>
    %124 = vector.extract_strided_slice %119 {offsets = [0, 64], sizes = [8, 32], strides = [1, 1]} : vector<8x96xf32> to vector<8x32xf32>
    %125 = arith.mulf %123, %106 : vector<8x32xf32>
    %126 = arith.mulf %122, %121 : vector<8x32xf32>
    %127 = arith.addf %125, %126 : vector<8x32xf32>
    %128 = math.tanh %127 : vector<8x32xf32>
    %129 = arith.mulf %124, %128 : vector<8x32xf32>
    %cst_27 = arith.constant dense<0.000000e+00> : vector<8x128xf32>
    %130 = tpu.matmul %129, %24, %cst_27 {dimension_numbers = #tpu.dot_dimension_numbers<[1], [0], [0], [1], [0, 0, 1, 1], [], []>} : vector<8x32xf32>, vector<32x128xf32>, vector<8x128xf32> -> vector<8x128xf32>
    %131 = vector.broadcast %25 : vector<1x128xf32> to vector<8x128xf32>
    %132 = arith.addf %130, %131 : vector<8x128xf32>
    %cst_28 = arith.constant dense<0.000000e+00> : vector<8x128xf32>
    %133 = tpu.matmul %129, %23, %cst_28 {dimension_numbers = #tpu.dot_dimension_numbers<[1], [0], [0], [1], [0, 0, 1, 1], [], []>} : vector<8x32xf32>, vector<32x128xf32>, vector<8x128xf32> -> vector<8x128xf32>
    %134 = arith.addf %18, %133 : vector<8x128xf32>
    %135 = vector.extract_strided_slice %134 {offsets = [0, 0], sizes = [8, 96], strides = [1, 1]} : vector<8x128xf32> to vector<8x96xf32>
    %136 = arith.negf %135 : vector<8x96xf32>
    %137 = math.exp %136 : vector<8x96xf32>
    %cst_29 = arith.constant 1.000000e+00 : f32
    %138 = vector.broadcast %cst_29 : f32 to vector<8x96xf32>
    %139 = arith.addf %138, %137 : vector<8x96xf32>
    %140 = arith.divf %138, %139 : vector<8x96xf32>
    %141 = vector.extract_strided_slice %134 {offsets = [0, 96], sizes = [8, 32], strides = [1, 1]} : vector<8x128xf32> to vector<8x32xf32>
    %142 = math.tanh %141 : vector<8x32xf32>
    %143 = vector.extract_strided_slice %140 {offsets = [0, 0], sizes = [8, 32], strides = [1, 1]} : vector<8x96xf32> to vector<8x32xf32>
    %144 = vector.extract_strided_slice %140 {offsets = [0, 32], sizes = [8, 32], strides = [1, 1]} : vector<8x96xf32> to vector<8x32xf32>
    %145 = vector.extract_strided_slice %140 {offsets = [0, 64], sizes = [8, 32], strides = [1, 1]} : vector<8x96xf32> to vector<8x32xf32>
    %146 = arith.mulf %144, %127 : vector<8x32xf32>
    %147 = arith.mulf %143, %142 : vector<8x32xf32>
    %148 = arith.addf %146, %147 : vector<8x32xf32>
    %149 = math.tanh %148 : vector<8x32xf32>
    %150 = arith.mulf %145, %149 : vector<8x32xf32>
    %cst_30 = arith.constant dense<0.000000e+00> : vector<8x128xf32>
    %151 = tpu.matmul %150, %24, %cst_30 {dimension_numbers = #tpu.dot_dimension_numbers<[1], [0], [0], [1], [0, 0, 1, 1], [], []>} : vector<8x32xf32>, vector<32x128xf32>, vector<8x128xf32> -> vector<8x128xf32>
    %152 = vector.broadcast %25 : vector<1x128xf32> to vector<8x128xf32>
    %153 = arith.addf %151, %152 : vector<8x128xf32>
    %cst_31 = arith.constant dense<0.000000e+00> : vector<8x128xf32>
    %154 = tpu.matmul %150, %23, %cst_31 {dimension_numbers = #tpu.dot_dimension_numbers<[1], [0], [0], [1], [0, 0, 1, 1], [], []>} : vector<8x32xf32>, vector<32x128xf32>, vector<8x128xf32> -> vector<8x128xf32>
    %155 = arith.addf %20, %154 : vector<8x128xf32>
    %156 = vector.extract_strided_slice %155 {offsets = [0, 0], sizes = [8, 96], strides = [1, 1]} : vector<8x128xf32> to vector<8x96xf32>
    %157 = arith.negf %156 : vector<8x96xf32>
    %158 = math.exp %157 : vector<8x96xf32>
    %cst_32 = arith.constant 1.000000e+00 : f32
    %159 = vector.broadcast %cst_32 : f32 to vector<8x96xf32>
    %160 = arith.addf %159, %158 : vector<8x96xf32>
    %161 = arith.divf %159, %160 : vector<8x96xf32>
    %162 = vector.extract_strided_slice %155 {offsets = [0, 96], sizes = [8, 32], strides = [1, 1]} : vector<8x128xf32> to vector<8x32xf32>
    %163 = math.tanh %162 : vector<8x32xf32>
    %164 = vector.extract_strided_slice %161 {offsets = [0, 0], sizes = [8, 32], strides = [1, 1]} : vector<8x96xf32> to vector<8x32xf32>
    %165 = vector.extract_strided_slice %161 {offsets = [0, 32], sizes = [8, 32], strides = [1, 1]} : vector<8x96xf32> to vector<8x32xf32>
    %166 = vector.extract_strided_slice %161 {offsets = [0, 64], sizes = [8, 32], strides = [1, 1]} : vector<8x96xf32> to vector<8x32xf32>
    %167 = arith.mulf %165, %148 : vector<8x32xf32>
    %168 = arith.mulf %164, %163 : vector<8x32xf32>
    %169 = arith.addf %167, %168 : vector<8x32xf32>
    %170 = math.tanh %169 : vector<8x32xf32>
    %171 = arith.mulf %166, %170 : vector<8x32xf32>
    %cst_33 = arith.constant dense<0.000000e+00> : vector<8x128xf32>
    %172 = tpu.matmul %171, %24, %cst_33 {dimension_numbers = #tpu.dot_dimension_numbers<[1], [0], [0], [1], [0, 0, 1, 1], [], []>} : vector<8x32xf32>, vector<32x128xf32>, vector<8x128xf32> -> vector<8x128xf32>
    %173 = vector.broadcast %25 : vector<1x128xf32> to vector<8x128xf32>
    %174 = arith.addf %172, %173 : vector<8x128xf32>
    %cst_34 = arith.constant dense<0.000000e+00> : vector<8x128xf32>
    %175 = tpu.matmul %171, %23, %cst_34 {dimension_numbers = #tpu.dot_dimension_numbers<[1], [0], [0], [1], [0, 0, 1, 1], [], []>} : vector<8x32xf32>, vector<32x128xf32>, vector<8x128xf32> -> vector<8x128xf32>
    %176 = arith.addf %22, %175 : vector<8x128xf32>
    %177 = vector.extract_strided_slice %176 {offsets = [0, 0], sizes = [8, 96], strides = [1, 1]} : vector<8x128xf32> to vector<8x96xf32>
    %178 = arith.negf %177 : vector<8x96xf32>
    %179 = math.exp %178 : vector<8x96xf32>
    %cst_35 = arith.constant 1.000000e+00 : f32
    %180 = vector.broadcast %cst_35 : f32 to vector<8x96xf32>
    %181 = arith.addf %180, %179 : vector<8x96xf32>
    %182 = arith.divf %180, %181 : vector<8x96xf32>
    %183 = vector.extract_strided_slice %176 {offsets = [0, 96], sizes = [8, 32], strides = [1, 1]} : vector<8x128xf32> to vector<8x32xf32>
    %184 = math.tanh %183 : vector<8x32xf32>
    %185 = vector.extract_strided_slice %182 {offsets = [0, 0], sizes = [8, 32], strides = [1, 1]} : vector<8x96xf32> to vector<8x32xf32>
    %186 = vector.extract_strided_slice %182 {offsets = [0, 32], sizes = [8, 32], strides = [1, 1]} : vector<8x96xf32> to vector<8x32xf32>
    %187 = vector.extract_strided_slice %182 {offsets = [0, 64], sizes = [8, 32], strides = [1, 1]} : vector<8x96xf32> to vector<8x32xf32>
    %188 = arith.mulf %186, %169 : vector<8x32xf32>
    %189 = arith.mulf %185, %184 : vector<8x32xf32>
    %190 = arith.addf %188, %189 : vector<8x32xf32>
    %191 = math.tanh %190 : vector<8x32xf32>
    %192 = arith.mulf %187, %191 : vector<8x32xf32>
    %cst_36 = arith.constant dense<0.000000e+00> : vector<8x128xf32>
    %193 = tpu.matmul %192, %24, %cst_36 {dimension_numbers = #tpu.dot_dimension_numbers<[1], [0], [0], [1], [0, 0, 1, 1], [], []>} : vector<8x32xf32>, vector<32x128xf32>, vector<8x128xf32> -> vector<8x128xf32>
    %194 = vector.broadcast %25 : vector<1x128xf32> to vector<8x128xf32>
    %195 = arith.addf %193, %194 : vector<8x128xf32>
    %c0_37 = arith.constant 0 : index
    %c0_38 = arith.constant 0 : index
    %196 = vector.load %arg6[%c0_37, %c0_38] : memref<32x128xf32, #tpu.memory_space<vmem>>, vector<32x128xf32>
    %cst_39 = arith.constant 0.000000e+00 : f32
    %197 = vector.broadcast %cst_39 : f32 to vector<8x32xf32>
    %cst_40 = arith.constant 0.000000e+00 : f32
    %198 = vector.broadcast %cst_40 : f32 to vector<8x32xf32>
    %cst_41 = arith.constant dense<0.000000e+00> : vector<8x128xf32>
    %199 = tpu.matmul %197, %196, %cst_41 {dimension_numbers = #tpu.dot_dimension_numbers<[1], [0], [0], [1], [0, 0, 1, 1], [], []>} : vector<8x32xf32>, vector<32x128xf32>, vector<8x128xf32> -> vector<8x128xf32>
    %200 = arith.addf %48, %199 : vector<8x128xf32>
    %201 = vector.extract_strided_slice %200 {offsets = [0, 0], sizes = [8, 96], strides = [1, 1]} : vector<8x128xf32> to vector<8x96xf32>
    %202 = arith.negf %201 : vector<8x96xf32>
    %203 = math.exp %202 : vector<8x96xf32>
    %cst_42 = arith.constant 1.000000e+00 : f32
    %204 = vector.broadcast %cst_42 : f32 to vector<8x96xf32>
    %205 = arith.addf %204, %203 : vector<8x96xf32>
    %206 = arith.divf %204, %205 : vector<8x96xf32>
    %207 = vector.extract_strided_slice %200 {offsets = [0, 96], sizes = [8, 32], strides = [1, 1]} : vector<8x128xf32> to vector<8x32xf32>
    %208 = math.tanh %207 : vector<8x32xf32>
    %209 = vector.extract_strided_slice %206 {offsets = [0, 0], sizes = [8, 32], strides = [1, 1]} : vector<8x96xf32> to vector<8x32xf32>
    %210 = vector.extract_strided_slice %206 {offsets = [0, 32], sizes = [8, 32], strides = [1, 1]} : vector<8x96xf32> to vector<8x32xf32>
    %211 = vector.extract_strided_slice %206 {offsets = [0, 64], sizes = [8, 32], strides = [1, 1]} : vector<8x96xf32> to vector<8x32xf32>
    %212 = arith.mulf %210, %198 : vector<8x32xf32>
    %213 = arith.mulf %209, %208 : vector<8x32xf32>
    %214 = arith.addf %212, %213 : vector<8x32xf32>
    %215 = math.tanh %214 : vector<8x32xf32>
    %216 = arith.mulf %211, %215 : vector<8x32xf32>
    %cst_43 = arith.constant dense<0.000000e+00> : vector<8x128xf32>
    %217 = tpu.matmul %216, %196, %cst_43 {dimension_numbers = #tpu.dot_dimension_numbers<[1], [0], [0], [1], [0, 0, 1, 1], [], []>} : vector<8x32xf32>, vector<32x128xf32>, vector<8x128xf32> -> vector<8x128xf32>
    %218 = arith.addf %69, %217 : vector<8x128xf32>
    %219 = vector.extract_strided_slice %218 {offsets = [0, 0], sizes = [8, 96], strides = [1, 1]} : vector<8x128xf32> to vector<8x96xf32>
    %220 = arith.negf %219 : vector<8x96xf32>
    %221 = math.exp %220 : vector<8x96xf32>
    %cst_44 = arith.constant 1.000000e+00 : f32
    %222 = vector.broadcast %cst_44 : f32 to vector<8x96xf32>
    %223 = arith.addf %222, %221 : vector<8x96xf32>
    %224 = arith.divf %222, %223 : vector<8x96xf32>
    %225 = vector.extract_strided_slice %218 {offsets = [0, 96], sizes = [8, 32], strides = [1, 1]} : vector<8x128xf32> to vector<8x32xf32>
    %226 = math.tanh %225 : vector<8x32xf32>
    %227 = vector.extract_strided_slice %224 {offsets = [0, 0], sizes = [8, 32], strides = [1, 1]} : vector<8x96xf32> to vector<8x32xf32>
    %228 = vector.extract_strided_slice %224 {offsets = [0, 32], sizes = [8, 32], strides = [1, 1]} : vector<8x96xf32> to vector<8x32xf32>
    %229 = vector.extract_strided_slice %224 {offsets = [0, 64], sizes = [8, 32], strides = [1, 1]} : vector<8x96xf32> to vector<8x32xf32>
    %230 = arith.mulf %228, %214 : vector<8x32xf32>
    %231 = arith.mulf %227, %226 : vector<8x32xf32>
    %232 = arith.addf %230, %231 : vector<8x32xf32>
    %233 = math.tanh %232 : vector<8x32xf32>
    %234 = arith.mulf %229, %233 : vector<8x32xf32>
    %cst_45 = arith.constant dense<0.000000e+00> : vector<8x128xf32>
    %235 = tpu.matmul %234, %196, %cst_45 {dimension_numbers = #tpu.dot_dimension_numbers<[1], [0], [0], [1], [0, 0, 1, 1], [], []>} : vector<8x32xf32>, vector<32x128xf32>, vector<8x128xf32> -> vector<8x128xf32>
    %236 = arith.addf %90, %235 : vector<8x128xf32>
    %237 = vector.extract_strided_slice %236 {offsets = [0, 0], sizes = [8, 96], strides = [1, 1]} : vector<8x128xf32> to vector<8x96xf32>
    %238 = arith.negf %237 : vector<8x96xf32>
    %239 = math.exp %238 : vector<8x96xf32>
    %cst_46 = arith.constant 1.000000e+00 : f32
    %240 = vector.broadcast %cst_46 : f32 to vector<8x96xf32>
    %241 = arith.addf %240, %239 : vector<8x96xf32>
    %242 = arith.divf %240, %241 : vector<8x96xf32>
    %243 = vector.extract_strided_slice %236 {offsets = [0, 96], sizes = [8, 32], strides = [1, 1]} : vector<8x128xf32> to vector<8x32xf32>
    %244 = math.tanh %243 : vector<8x32xf32>
    %245 = vector.extract_strided_slice %242 {offsets = [0, 0], sizes = [8, 32], strides = [1, 1]} : vector<8x96xf32> to vector<8x32xf32>
    %246 = vector.extract_strided_slice %242 {offsets = [0, 32], sizes = [8, 32], strides = [1, 1]} : vector<8x96xf32> to vector<8x32xf32>
    %247 = vector.extract_strided_slice %242 {offsets = [0, 64], sizes = [8, 32], strides = [1, 1]} : vector<8x96xf32> to vector<8x32xf32>
    %248 = arith.mulf %246, %232 : vector<8x32xf32>
    %249 = arith.mulf %245, %244 : vector<8x32xf32>
    %250 = arith.addf %248, %249 : vector<8x32xf32>
    %251 = math.tanh %250 : vector<8x32xf32>
    %252 = arith.mulf %247, %251 : vector<8x32xf32>
    %cst_47 = arith.constant dense<0.000000e+00> : vector<8x128xf32>
    %253 = tpu.matmul %252, %196, %cst_47 {dimension_numbers = #tpu.dot_dimension_numbers<[1], [0], [0], [1], [0, 0, 1, 1], [], []>} : vector<8x32xf32>, vector<32x128xf32>, vector<8x128xf32> -> vector<8x128xf32>
    %254 = arith.addf %111, %253 : vector<8x128xf32>
    %255 = vector.extract_strided_slice %254 {offsets = [0, 0], sizes = [8, 96], strides = [1, 1]} : vector<8x128xf32> to vector<8x96xf32>
    %256 = arith.negf %255 : vector<8x96xf32>
    %257 = math.exp %256 : vector<8x96xf32>
    %cst_48 = arith.constant 1.000000e+00 : f32
    %258 = vector.broadcast %cst_48 : f32 to vector<8x96xf32>
    %259 = arith.addf %258, %257 : vector<8x96xf32>
    %260 = arith.divf %258, %259 : vector<8x96xf32>
    %261 = vector.extract_strided_slice %254 {offsets = [0, 96], sizes = [8, 32], strides = [1, 1]} : vector<8x128xf32> to vector<8x32xf32>
    %262 = math.tanh %261 : vector<8x32xf32>
    %263 = vector.extract_strided_slice %260 {offsets = [0, 0], sizes = [8, 32], strides = [1, 1]} : vector<8x96xf32> to vector<8x32xf32>
    %264 = vector.extract_strided_slice %260 {offsets = [0, 32], sizes = [8, 32], strides = [1, 1]} : vector<8x96xf32> to vector<8x32xf32>
    %265 = vector.extract_strided_slice %260 {offsets = [0, 64], sizes = [8, 32], strides = [1, 1]} : vector<8x96xf32> to vector<8x32xf32>
    %266 = arith.mulf %264, %250 : vector<8x32xf32>
    %267 = arith.mulf %263, %262 : vector<8x32xf32>
    %268 = arith.addf %266, %267 : vector<8x32xf32>
    %269 = math.tanh %268 : vector<8x32xf32>
    %270 = arith.mulf %265, %269 : vector<8x32xf32>
    %cst_49 = arith.constant dense<0.000000e+00> : vector<8x128xf32>
    %271 = tpu.matmul %270, %196, %cst_49 {dimension_numbers = #tpu.dot_dimension_numbers<[1], [0], [0], [1], [0, 0, 1, 1], [], []>} : vector<8x32xf32>, vector<32x128xf32>, vector<8x128xf32> -> vector<8x128xf32>
    %272 = arith.addf %132, %271 : vector<8x128xf32>
    %273 = vector.extract_strided_slice %272 {offsets = [0, 0], sizes = [8, 96], strides = [1, 1]} : vector<8x128xf32> to vector<8x96xf32>
    %274 = arith.negf %273 : vector<8x96xf32>
    %275 = math.exp %274 : vector<8x96xf32>
    %cst_50 = arith.constant 1.000000e+00 : f32
    %276 = vector.broadcast %cst_50 : f32 to vector<8x96xf32>
    %277 = arith.addf %276, %275 : vector<8x96xf32>
    %278 = arith.divf %276, %277 : vector<8x96xf32>
    %279 = vector.extract_strided_slice %272 {offsets = [0, 96], sizes = [8, 32], strides = [1, 1]} : vector<8x128xf32> to vector<8x32xf32>
    %280 = math.tanh %279 : vector<8x32xf32>
    %281 = vector.extract_strided_slice %278 {offsets = [0, 0], sizes = [8, 32], strides = [1, 1]} : vector<8x96xf32> to vector<8x32xf32>
    %282 = vector.extract_strided_slice %278 {offsets = [0, 32], sizes = [8, 32], strides = [1, 1]} : vector<8x96xf32> to vector<8x32xf32>
    %283 = vector.extract_strided_slice %278 {offsets = [0, 64], sizes = [8, 32], strides = [1, 1]} : vector<8x96xf32> to vector<8x32xf32>
    %284 = arith.mulf %282, %268 : vector<8x32xf32>
    %285 = arith.mulf %281, %280 : vector<8x32xf32>
    %286 = arith.addf %284, %285 : vector<8x32xf32>
    %287 = math.tanh %286 : vector<8x32xf32>
    %288 = arith.mulf %283, %287 : vector<8x32xf32>
    %cst_51 = arith.constant dense<0.000000e+00> : vector<8x128xf32>
    %289 = tpu.matmul %288, %196, %cst_51 {dimension_numbers = #tpu.dot_dimension_numbers<[1], [0], [0], [1], [0, 0, 1, 1], [], []>} : vector<8x32xf32>, vector<32x128xf32>, vector<8x128xf32> -> vector<8x128xf32>
    %290 = arith.addf %153, %289 : vector<8x128xf32>
    %291 = vector.extract_strided_slice %290 {offsets = [0, 0], sizes = [8, 96], strides = [1, 1]} : vector<8x128xf32> to vector<8x96xf32>
    %292 = arith.negf %291 : vector<8x96xf32>
    %293 = math.exp %292 : vector<8x96xf32>
    %cst_52 = arith.constant 1.000000e+00 : f32
    %294 = vector.broadcast %cst_52 : f32 to vector<8x96xf32>
    %295 = arith.addf %294, %293 : vector<8x96xf32>
    %296 = arith.divf %294, %295 : vector<8x96xf32>
    %297 = vector.extract_strided_slice %290 {offsets = [0, 96], sizes = [8, 32], strides = [1, 1]} : vector<8x128xf32> to vector<8x32xf32>
    %298 = math.tanh %297 : vector<8x32xf32>
    %299 = vector.extract_strided_slice %296 {offsets = [0, 0], sizes = [8, 32], strides = [1, 1]} : vector<8x96xf32> to vector<8x32xf32>
    %300 = vector.extract_strided_slice %296 {offsets = [0, 32], sizes = [8, 32], strides = [1, 1]} : vector<8x96xf32> to vector<8x32xf32>
    %301 = vector.extract_strided_slice %296 {offsets = [0, 64], sizes = [8, 32], strides = [1, 1]} : vector<8x96xf32> to vector<8x32xf32>
    %302 = arith.mulf %300, %286 : vector<8x32xf32>
    %303 = arith.mulf %299, %298 : vector<8x32xf32>
    %304 = arith.addf %302, %303 : vector<8x32xf32>
    %305 = math.tanh %304 : vector<8x32xf32>
    %306 = arith.mulf %301, %305 : vector<8x32xf32>
    %cst_53 = arith.constant dense<0.000000e+00> : vector<8x128xf32>
    %307 = tpu.matmul %306, %196, %cst_53 {dimension_numbers = #tpu.dot_dimension_numbers<[1], [0], [0], [1], [0, 0, 1, 1], [], []>} : vector<8x32xf32>, vector<32x128xf32>, vector<8x128xf32> -> vector<8x128xf32>
    %308 = arith.addf %174, %307 : vector<8x128xf32>
    %309 = vector.extract_strided_slice %308 {offsets = [0, 0], sizes = [8, 96], strides = [1, 1]} : vector<8x128xf32> to vector<8x96xf32>
    %310 = arith.negf %309 : vector<8x96xf32>
    %311 = math.exp %310 : vector<8x96xf32>
    %cst_54 = arith.constant 1.000000e+00 : f32
    %312 = vector.broadcast %cst_54 : f32 to vector<8x96xf32>
    %313 = arith.addf %312, %311 : vector<8x96xf32>
    %314 = arith.divf %312, %313 : vector<8x96xf32>
    %315 = vector.extract_strided_slice %308 {offsets = [0, 96], sizes = [8, 32], strides = [1, 1]} : vector<8x128xf32> to vector<8x32xf32>
    %316 = math.tanh %315 : vector<8x32xf32>
    %317 = vector.extract_strided_slice %314 {offsets = [0, 0], sizes = [8, 32], strides = [1, 1]} : vector<8x96xf32> to vector<8x32xf32>
    %318 = vector.extract_strided_slice %314 {offsets = [0, 32], sizes = [8, 32], strides = [1, 1]} : vector<8x96xf32> to vector<8x32xf32>
    %319 = vector.extract_strided_slice %314 {offsets = [0, 64], sizes = [8, 32], strides = [1, 1]} : vector<8x96xf32> to vector<8x32xf32>
    %320 = arith.mulf %318, %304 : vector<8x32xf32>
    %321 = arith.mulf %317, %316 : vector<8x32xf32>
    %322 = arith.addf %320, %321 : vector<8x32xf32>
    %323 = math.tanh %322 : vector<8x32xf32>
    %324 = arith.mulf %319, %323 : vector<8x32xf32>
    %cst_55 = arith.constant dense<0.000000e+00> : vector<8x128xf32>
    %325 = tpu.matmul %324, %196, %cst_55 {dimension_numbers = #tpu.dot_dimension_numbers<[1], [0], [0], [1], [0, 0, 1, 1], [], []>} : vector<8x32xf32>, vector<32x128xf32>, vector<8x128xf32> -> vector<8x128xf32>
    %326 = arith.addf %195, %325 : vector<8x128xf32>
    %327 = vector.extract_strided_slice %326 {offsets = [0, 0], sizes = [8, 96], strides = [1, 1]} : vector<8x128xf32> to vector<8x96xf32>
    %328 = arith.negf %327 : vector<8x96xf32>
    %329 = math.exp %328 : vector<8x96xf32>
    %cst_56 = arith.constant 1.000000e+00 : f32
    %330 = vector.broadcast %cst_56 : f32 to vector<8x96xf32>
    %331 = arith.addf %330, %329 : vector<8x96xf32>
    %332 = arith.divf %330, %331 : vector<8x96xf32>
    %333 = vector.extract_strided_slice %326 {offsets = [0, 96], sizes = [8, 32], strides = [1, 1]} : vector<8x128xf32> to vector<8x32xf32>
    %334 = math.tanh %333 : vector<8x32xf32>
    %335 = vector.extract_strided_slice %332 {offsets = [0, 0], sizes = [8, 32], strides = [1, 1]} : vector<8x96xf32> to vector<8x32xf32>
    %336 = vector.extract_strided_slice %332 {offsets = [0, 32], sizes = [8, 32], strides = [1, 1]} : vector<8x96xf32> to vector<8x32xf32>
    %337 = vector.extract_strided_slice %332 {offsets = [0, 64], sizes = [8, 32], strides = [1, 1]} : vector<8x96xf32> to vector<8x32xf32>
    %338 = arith.mulf %336, %322 : vector<8x32xf32>
    %339 = arith.mulf %335, %334 : vector<8x32xf32>
    %340 = arith.addf %338, %339 : vector<8x32xf32>
    %341 = math.tanh %340 : vector<8x32xf32>
    %342 = arith.mulf %337, %341 : vector<8x32xf32>
    %c0_57 = arith.constant 0 : index
    %c0_58 = arith.constant 0 : index
    %343 = vector.load %arg8[%c0_57, %c0_58] : memref<32x128xf32, #tpu.memory_space<vmem>>, vector<32x128xf32>
    %cst_59 = arith.constant dense<0.000000e+00> : vector<8x128xf32>
    %344 = tpu.matmul %342, %343, %cst_59 {dimension_numbers = #tpu.dot_dimension_numbers<[1], [0], [0], [1], [0, 0, 1, 1], [], []>} : vector<8x32xf32>, vector<32x128xf32>, vector<8x128xf32> -> vector<8x128xf32>
    %c0_60 = arith.constant 0 : index
    %c0_61 = arith.constant 0 : index
    %345 = vector.load %arg1[%c0_60, %c0_61] : memref<8x8xf32, #tpu.memory_space<vmem>>, vector<8x8xf32>
    %c0_62 = arith.constant 0 : index
    %c0_63 = arith.constant 0 : index
    %346 = vector.load %arg9[%c0_62, %c0_63] : memref<8x128xf32, #tpu.memory_space<vmem>>, vector<8x128xf32>
    %cst_64 = arith.constant dense<0.000000e+00> : vector<8x128xf32>
    %347 = tpu.matmul %345, %346, %cst_64 {dimension_numbers = #tpu.dot_dimension_numbers<[1], [0], [0], [1], [0, 0, 1, 1], [], []>} : vector<8x8xf32>, vector<8x128xf32>, vector<8x128xf32> -> vector<8x128xf32>
    %348 = arith.addf %344, %347 : vector<8x128xf32>
    %c0_65 = arith.constant 0 : index
    %c0_66 = arith.constant 0 : index
    %349 = vector.load %arg10[%c0_65, %c0_66] : memref<1x128xf32, #tpu.memory_space<vmem>>, vector<1x128xf32>
    %350 = vector.broadcast %349 : vector<1x128xf32> to vector<8x128xf32>
    %351 = arith.addf %348, %350 : vector<8x128xf32>
    %cst_67 = arith.constant 0.000000e+00 : f32
    %352 = vector.broadcast %cst_67 : f32 to vector<8x128xf32>
    %353 = arith.maximumf %351, %352 : vector<8x128xf32>
    %c0_68 = arith.constant 0 : index
    %c0_69 = arith.constant 0 : index
    %354 = vector.load %arg11[%c0_68, %c0_69] : memref<128x1xf32, #tpu.memory_space<vmem>>, vector<128x1xf32>
    %cst_70 = arith.constant dense<0.000000e+00> : vector<8x1xf32>
    %355 = tpu.matmul %353, %354, %cst_70 {dimension_numbers = #tpu.dot_dimension_numbers<[1], [0], [0], [1], [0, 0, 1, 1], [], []>} : vector<8x128xf32>, vector<128x1xf32>, vector<8x1xf32> -> vector<8x1xf32>
    %c0_71 = arith.constant 0 : index
    %356 = memref.load %arg12[%c0_71] : memref<1xf32, #tpu.memory_space<smem>>
    %357 = vector.broadcast %356 : f32 to vector<8x1xf32>
    %358 = arith.addf %355, %357 : vector<8x1xf32>
    %c0_72 = arith.constant 0 : index
    %c0_73 = arith.constant 0 : index
    %359 = vector.load %arg13[%c0_72, %c0_73] : memref<8x1xf32, #tpu.memory_space<vmem>>, vector<8x1xf32>
    tpu.vector_store %arg13[%c0_72, %c0_73], %358 {strides = array<i32>} : memref<8x1xf32, #tpu.memory_space<vmem>>, vector<8x1xf32>,
    return
  }
}

</mosaic_0001>

<llo_original>
// kernel: lstm_classifier_v2_forward.1
$region0: #{lstm_classifier_v2_forward.1}
  #allocation0 [shape = 'u32[]', space=smem, size = 0x4, offset = 0x4, fixed_abs, tag = 'smem constant byte address 0x4 - core index']
  #allocation1 [shape = 'u32[144,128]{1,0:T(1,128)}', space=vmem, size = 0x12000, scoped, tag = 'internal scratch']
  #allocation2 [shape = 'f32[1]{0:T(128)S(6)}', space=smem, size = 0x200, scoped, tag = 'scoped memory for lstm_classifier_v2_forward.1']
  %s0 = inlined_call_operand.vmem [shape: f32[64,16], index: 0, kind: input, shape index: {}]
  %s1 = inlined_call_operand.hbm [shape: f32[8,8], index: 1, kind: input, shape index: {}]
  %s2 = inlined_call_operand.hbm [shape: f32[16,128], index: 2, kind: input, shape index: {}]
  %s3 = inlined_call_operand.vmem [shape: f32[32,128], index: 3, kind: input, shape index: {}]
  %s4 = inlined_call_operand.vmem [shape: f32[1,128], index: 4, kind: input, shape index: {}]
  %s5 = inlined_call_operand.vmem [shape: f32[32,128], index: 5, kind: input, shape index: {}]
  %s6 = inlined_call_operand.hbm [shape: f32[32,128], index: 6, kind: input, shape index: {}]
  %s7 = inlined_call_operand.vmem [shape: f32[1,128], index: 7, kind: input, shape index: {}]
  %s8 = inlined_call_operand.hbm [shape: f32[32,128], index: 8, kind: input, shape index: {}]
  %s9 = inlined_call_operand.vmem [shape: f32[8,128], index: 9, kind: input, shape index: {}]
  %s10 = inlined_call_operand.hbm [shape: f32[1,128], index: 10, kind: input, shape index: {}]
  %s11 = inlined_call_operand.vmem [shape: f32[128,1], index: 11, kind: input, shape index: {}]
  %s12 = inlined_call_operand.<no memory space> [shape: f32[1], index: 12, kind: input, shape index: {}]
  %s13 = inlined_call_operand.vmem [shape: f32[8,1], index: 13, kind: output, shape index: {}]
  %s14 = sld [smem:[#allocation0]]
  $region82: #{lstm_classifier_v2_forward.1} parent=0
    _
  %s16 = ssub.s32 1, %s14
  %s17 = scalar_select 0, %s16, %s14
  %18 = sst [smem:[#allocation2]] %s12
  $region1: #{lstm_classifier_v2_forward.1} parent=0
    #allocation3 [shape = 'u8[4096]{0}', space=vmem, size = 0x1000, scoped, tag = 'input window, operand 1, single buffered']
    #allocation4 [shape = 's32[1]{0}', space=sflag, size = 0x4, scoped, tag = 'scoped memory for lstm_classifier_v2_forward.1']
    #allocation5 [shape = 'u8[8192]{0}', space=vmem, size = 0x2000, scoped, tag = 'input window, operand 2, single buffered']
    #allocation6 [shape = 's32[1]{0}', space=sflag, size = 0x4, scoped, tag = 'scoped memory for lstm_classifier_v2_forward.1']
    #allocation7 [shape = 'u8[16384]{0}', space=vmem, size = 0x4000, scoped, tag = 'input window, operand 6, single buffered']
    #allocation8 [shape = 'u8[16384]{0}', space=vmem, size = 0x4000, scoped, tag = 'input window, operand 8, single buffered']
    #allocation9 [shape = 's32[1]{0}', space=sflag, size = 0x4, scoped, tag = 'scoped memory for lstm_classifier_v2_forward.1']
    #allocation10 [shape = 'u8[512]{0}', space=vmem, size = 0x400, scoped, tag = 'input window, operand 10, single buffered']
    %19 = vsyncpa [#allocation4], 0
    %20 = vsyncpa [#allocation6], 0
    %21 = vsyncpa [#allocation9], 0
    // Predicated region
    $region2: #{lstm_classifier_v2_forward.1} parent=1 // pred_check
      _
    $region3: #{lstm_classifier_v2_forward.1} parent=1 // pred_check_branch
      %23 = sbr.rel (0) target = $region5
    $region4: #{lstm_classifier_v2_forward.1} parent=1 // pred_region
      _
    $region5: #{lstm_classifier_v2_forward.1} parent=1 // pred_fallthru
      _
    // Predicated region
    $region6: #{lstm_classifier_v2_forward.1} parent=1 // pred_check
      _
    $region7: #{lstm_classifier_v2_forward.1} parent=1 // pred_check_branch
      %25 = sbr.rel (0) target = $region9
    $region8: #{lstm_classifier_v2_forward.1} parent=1 // pred_region
      %s27 = ssub.s32 128, 128
      %28 = vsyncadd [#allocation4], %s27
      %s30 = sshll.u32 [#allocation3], 4
      %s31 = int_to_ptr.vmem [resolvable:$true] %s30
      %33 = dma.hbm_to_vmem [thread:$0]  %s1, 128, %s31, [#allocation4]
    $region9: #{lstm_classifier_v2_forward.1} parent=1 // pred_fallthru
      _
    // Predicated region
    $region10: #{lstm_classifier_v2_forward.1} parent=1 // pred_check
      _
    $region11: #{lstm_classifier_v2_forward.1} parent=1 // pred_check_branch
      %35 = sbr.rel (0) target = $region13
    $region12: #{lstm_classifier_v2_forward.1} parent=1 // pred_region
      %s37 = ssub.s32 256, 256
      %38 = vsyncadd [#allocation6], %s37
      %s39 = sshll.u32 [#allocation5], 4
      %s40 = int_to_ptr.vmem [resolvable:$true] %s39
      %45 = dma.hbm_to_vmem [thread:$0]  %s2, 256, %s40, [#allocation6], 128, 128, 8
    $region13: #{lstm_classifier_v2_forward.1} parent=1 // pred_fallthru
      _
    // Predicated region
    $region14: #{lstm_classifier_v2_forward.1} parent=1 // pred_check
      _
    $region15: #{lstm_classifier_v2_forward.1} parent=1 // pred_check_branch
      %47 = sbr.rel (0) target = $region17
    $region16: #{lstm_classifier_v2_forward.1} parent=1 // pred_region
      _
    $region17: #{lstm_classifier_v2_forward.1} parent=1 // pred_fallthru
      _
    // Predicated region
    $region18: #{lstm_classifier_v2_forward.1} parent=1 // pred_check
      _
    $region19: #{lstm_classifier_v2_forward.1} parent=1 // pred_check_branch
      %49 = sbr.rel (0) target = $region21
    $region20: #{lstm_classifier_v2_forward.1} parent=1 // pred_region
      _
    $region21: #{lstm_classifier_v2_forward.1} parent=1 // pred_fallthru
      _
    // Predicated region
    $region22: #{lstm_classifier_v2_forward.1} parent=1 // pred_check
      _
    $region23: #{lstm_classifier_v2_forward.1} parent=1 // pred_check_branch
      %51 = sbr.rel (0) target = $region25
    $region24: #{lstm_classifier_v2_forward.1} parent=1 // pred_region
      _
    $region25: #{lstm_classifier_v2_forward.1} parent=1 // pred_fallthru
      _
    // Predicated region
    $region26: #{lstm_classifier_v2_forward.1} parent=1 // pred_check
      _
    $region27: #{lstm_classifier_v2_forward.1} parent=1 // pred_check_branch
      %53 = sbr.rel (0) target = $region29
    $region28: #{lstm_classifier_v2_forward.1} parent=1 // pred_region
      %s55 = ssub.s32 512, 512
      %56 = vsyncadd [#allocation6], %s55
      %s57 = sshll.u32 [#allocation7], 4
      %s58 = int_to_ptr.vmem [resolvable:$true] %s57
      %63 = dma.hbm_to_vmem [thread:$0]  %s6, 512, %s58, [#allocation6], 128, 128, 8
    $region29: #{lstm_classifier_v2_forward.1} parent=1 // pred_fallthru
      _
    // Predicated region
    $region30: #{lstm_classifier_v2_forward.1} parent=1 // pred_check
      _
    $region31: #{lstm_classifier_v2_forward.1} parent=1 // pred_check_branch
      %65 = sbr.rel (0) target = $region33
    $region32: #{lstm_classifier_v2_forward.1} parent=1 // pred_region
      _
    $region33: #{lstm_classifier_v2_forward.1} parent=1 // pred_fallthru
      _
    // Predicated region
    $region34: #{lstm_classifier_v2_forward.1} parent=1 // pred_check
      _
    $region35: #{lstm_classifier_v2_forward.1} parent=1 // pred_check_branch
      %67 = sbr.rel (0) target = $region37
    $region36: #{lstm_classifier_v2_forward.1} parent=1 // pred_region
      %s69 = ssub.s32 512, 512
      %70 = vsyncadd [#allocation9], %s69
      %s71 = sshll.u32 [#allocation8], 4
      %s72 = int_to_ptr.vmem [resolvable:$true] %s71
      %77 = dma.hbm_to_vmem [thread:$0]  %s8, 512, %s72, [#allocation9], 128, 128, 8
    $region37: #{lstm_classifier_v2_forward.1} parent=1 // pred_fallthru
      _
    // Predicated region
    $region38: #{lstm_classifier_v2_forward.1} parent=1 // pred_check
      _
    $region39: #{lstm_classifier_v2_forward.1} parent=1 // pred_check_branch
      %79 = sbr.rel (0) target = $region41
    $region40: #{lstm_classifier_v2_forward.1} parent=1 // pred_region
      _
    $region41: #{lstm_classifier_v2_forward.1} parent=1 // pred_fallthru
      _
    // Predicated region
    $region42: #{lstm_classifier_v2_forward.1} parent=1 // pred_check
      _
    $region43: #{lstm_classifier_v2_forward.1} parent=1 // pred_check_branch
      %81 = sbr.rel (0) target = $region45
    $region44: #{lstm_classifier_v2_forward.1} parent=1 // pred_region
      %s83 = ssub.s32 16, 16
      %84 = vsyncadd [#allocation9], %s83
      %s86 = sshll.u32 [#allocation10], 4
      %s87 = int_to_ptr.vmem [resolvable:$true] %s86
      %89 = dma.hbm_to_vmem [thread:$0]  %s10, 16, %s87, [#allocation9]
    $region45: #{lstm_classifier_v2_forward.1} parent=1 // pred_fallthru
      _
    // Predicated region
    $region46: #{lstm_classifier_v2_forward.1} parent=1 // pred_check
      _
    $region47: #{lstm_classifier_v2_forward.1} parent=1 // pred_check_branch
      %91 = sbr.rel (0) target = $region49
    $region48: #{lstm_classifier_v2_forward.1} parent=1 // pred_region
      _
    $region49: #{lstm_classifier_v2_forward.1} parent=1 // pred_fallthru
      _
    // Predicated region
    $region50: #{lstm_classifier_v2_forward.1} parent=1 // pred_check
      _
    $region51: #{lstm_classifier_v2_forward.1} parent=1 // pred_check_branch
      %93 = sbr.rel (0) target = $region53
    $region52: #{lstm_classifier_v2_forward.1} parent=1 // pred_region
      _
    $region53: #{lstm_classifier_v2_forward.1} parent=1 // pred_fallthru
      _
    // Predicated region
    $region54: #{lstm_classifier_v2_forward.1} parent=1 // pred_check
      _
    $region55: #{lstm_classifier_v2_forward.1} parent=1 // pred_check_branch
      %95 = sbr.rel (0) target = $region57
    $region56: #{lstm_classifier_v2_forward.1} parent=1 // pred_region
      %96 = dma.done [#allocation4], 128
    $region57: #{lstm_classifier_v2_forward.1} parent=1 // pred_fallthru
      _
    // Predicated region
    $region58: #{lstm_classifier_v2_forward.1} parent=1 // pred_check
      _
    $region59: #{lstm_classifier_v2_forward.1} parent=1 // pred_check_branch
      %98 = sbr.rel (0) target = $region61
    $region60: #{lstm_classifier_v2_forward.1} parent=1 // pred_region
      %99 = dma.done [#allocation6], 256
    $region61: #{lstm_classifier_v2_forward.1} parent=1 // pred_fallthru
      _
    // Predicated region
    $region62: #{lstm_classifier_v2_forward.1} parent=1 // pred_check
      _
    $region63: #{lstm_classifier_v2_forward.1} parent=1 // pred_check_branch
      %101 = sbr.rel (0) target = $region65
    $region64: #{lstm_classifier_v2_forward.1} parent=1 // pred_region
      %102 = dma.done [#allocation6], 512
    $region65: #{lstm_classifier_v2_forward.1} parent=1 // pred_fallthru
      _
    // Predicated region
    $region66: #{lstm_classifier_v2_forward.1} parent=1 // pred_check
      _
    $region67: #{lstm_classifier_v2_forward.1} parent=1 // pred_check_branch
      %104 = sbr.rel (0) target = $region69
    $region68: #{lstm_classifier_v2_forward.1} parent=1 // pred_region
      %105 = dma.done [#allocation9], 512
    $region69: #{lstm_classifier_v2_forward.1} parent=1 // pred_fallthru
      _
    // Predicated region
    $region70: #{lstm_classifier_v2_forward.1} parent=1 // pred_check
      _
    $region71: #{lstm_classifier_v2_forward.1} parent=1 // pred_check_branch
      %107 = sbr.rel (0) target = $region73
    $region72: #{lstm_classifier_v2_forward.1} parent=1 // pred_region
      %108 = dma.done [#allocation9], 16
    $region73: #{lstm_classifier_v2_forward.1} parent=1 // pred_fallthru
      _
    %v109 = vld [vmem:[%s0] sm:$0xff]
    %v110 = vld [vmem:[%s0 + $0x8] sm:$0xff]
    %v111 = vld [vmem:[%s0 + $0x10] sm:$0xff]
    %v112 = vld [vmem:[%s0 + $0x18] sm:$0xff]
    %v113 = vld [vmem:[%s0 + $0x20] sm:$0xff]
    %v114 = vld [vmem:[%s0 + $0x28] sm:$0xff]
    %v115 = vld [vmem:[%s0 + $0x30] sm:$0xff]
    %v116 = vld [vmem:[%s0 + $0x38] sm:$0xff]
    %v117 = vld [vmem:[#allocation5] sm:$0xff]
    %v118 = vld [vmem:[#allocation5 + $0x8] sm:$0xff]
    %v119 = vld [vmem:[%s4] sm:$0x1]
    %v121 = vlaneseq
    %v122 = vshrl.u32 %v121, 7
    %v123 = vsub.s32 0, %v122
    %v124 = vrot.slane %v119, %v123
    %vm126 = vcmask 130048
    %v128 = vsel %vm126, %v109, 0
    %v131 = vsel %vm126, %v110, 0
    %v134 = vsel %vm126, %v111, 0
    %v137 = vsel %vm126, %v112, 0
    %v140 = vsel %vm126, %v113, 0
    %v143 = vsel %vm126, %v114, 0
    %v146 = vsel %vm126, %v115, 0
    %v149 = vsel %vm126, %v116, 0
    %151 = vmatprep.subr.mxu0 0.0
    %152 = vmatpush1.msra.mxu0 0.0
    %153 = vmatprep.subr.mxu0 0.0
    %154 = vmatpush1.msra.mxu0 0.0
    %155 = vmatprep.subr.mxu0 0.0
    %156 = vmatpush1.msra.mxu0 0.0
    %157 = vmatprep.subr.mxu0 0.0
    %158 = vmatpush1.msra.mxu0 0.0
    %159 = vmatprep.subr.mxu0 0.0
    %160 = vmatpush1.msra.mxu0 0.0
    %161 = vmatprep.subr.mxu0 0.0
    %162 = vmatpush1.msra.mxu0 0.0
    %163 = vmatprep.subr.mxu0 0.0
    %164 = vmatpush1.msra.mxu0 0.0
    %165 = vmatprep.subr.mxu0 0.0
    %166 = vmatpush1.msra.mxu0 0.0
    %167 = vmatprep.subr.mxu0 0.0
    %168 = vmatpush1.msra.mxu0 0.0
    %169 = vmatprep.subr.mxu0 0.0
    %170 = vmatpush1.msra.mxu0 0.0
    %171 = vmatprep.subr.mxu0 0.0
    %172 = vmatpush1.msra.mxu0 0.0
    %173 = vmatprep.subr.mxu0 0.0
    %174 = vmatpush1.msra.mxu0 0.0
    %175 = vmatprep.subr.mxu0 0.0
    %176 = vmatpush1.msra.mxu0 0.0
    %177 = vmatprep.subr.mxu0 0.0
    %178 = vmatpush1.msra.mxu0 0.0
    %179 = vmatprep.subr.mxu0 0.0
    %180 = vmatpush1.msra.mxu0 %v118
    %181 = vmatprep.subr.mxu0 0.0
    %182 = vmatpush1.msra.mxu0 %v117
    %183 = vmatprep.subr.mxu0 0.0
    %184 = vmatpush2.msra.mxu0 0.0
    %185 = vmatprep.subr.mxu0 0.0
    %186 = vmatpush2.msra.mxu0 0.0
    %187 = vmatprep.subr.mxu0 0.0
    %188 = vmatpush2.msra.mxu0 0.0
    %189 = vmatprep.subr.mxu0 0.0
    %190 = vmatpush2.msra.mxu0 0.0
    %191 = vmatprep.subr.mxu0 0.0
    %192 = vmatpush2.msra.mxu0 0.0
    %193 = vmatprep.subr.mxu0 0.0
    %194 = vmatpush2.msra.mxu0 0.0
    %195 = vmatprep.subr.mxu0 0.0
    %196 = vmatpush2.msra.mxu0 0.0
    %197 = vmatprep.subr.mxu0 0.0
    %198 = vmatpush2.msra.mxu0 0.0
    %199 = vmatprep.subr.mxu0 0.0
    %200 = vmatpush2.msra.mxu0 0.0
    %201 = vmatprep.subr.mxu0 0.0
    %202 = vmatpush2.msra.mxu0 0.0
    %203 = vmatprep.subr.mxu0 0.0
    %204 = vmatpush2.msra.mxu0 0.0
    %205 = vmatprep.subr.mxu0 0.0
    %206 = vmatpush2.msra.mxu0 0.0
    %207 = vmatprep.subr.mxu0 0.0
    %208 = vmatpush2.msra.mxu0 0.0
    %209 = vmatprep.subr.mxu0 0.0
    %210 = vmatpush2.msra.mxu0 0.0
    %211 = vmatprep.subr.mxu0 0.0
    %212 = vmatpush2.msra.mxu0 0.0
    %213 = vmatprep.subr.mxu0 0.0
    %214 = vmatpush2.msra.mxu0 0.0
    %215 = vmatprep.mubr.f32.mxu0 0.0
    %216 = vmatmul.mubr.f32.gmra.mxu0 %v128
    %v217 = vpop.f32.mrf.mxu0
    %v218 = vadd.f32 %v124, %v217
    %v219 = vpop.f32.mrf.mxu0
    %220 = vmatprep.mubr.f32.mxu0 0.0
    %221 = vmatmul.mubr.f32.gmra.mxu0 %v131
    %v222 = vpop.f32.mrf.mxu0
    %v223 = vadd.f32 %v124, %v222
    %v224 = vpop.f32.mrf.mxu0
    %225 = vmatprep.mubr.f32.mxu0 0.0
    %226 = vmatmul.mubr.f32.gmra.mxu0 %v134
    %v227 = vpop.f32.mrf.mxu0
    %v228 = vadd.f32 %v124, %v227
    %v229 = vpop.f32.mrf.mxu0
    %230 = vmatprep.mubr.f32.mxu0 0.0
    %231 = vmatmul.mubr.f32.gmra.mxu0 %v137
    %v232 = vpop.f32.mrf.mxu0
    %v233 = vadd.f32 %v124, %v232
    %v234 = vpop.f32.mrf.mxu0
    %235 = vmatprep.mubr.f32.mxu0 0.0
    %236 = vmatmul.mubr.f32.gmra.mxu0 %v140
    %v237 = vpop.f32.mrf.mxu0
    %v238 = vadd.f32 %v124, %v237
    %v239 = vpop.f32.mrf.mxu0
    %240 = vmatprep.mubr.f32.mxu0 0.0
    %241 = vmatmul.mubr.f32.gmra.mxu0 %v143
    %v242 = vpop.f32.mrf.mxu0
    %v243 = vadd.f32 %v124, %v242
    %v244 = vpop.f32.mrf.mxu0
    %245 = vmatprep.mubr.f32.mxu0 0.0
    %246 = vmatmul.mubr.f32.gmra.mxu0 %v146
    %v247 = vpop.f32.mrf.mxu0
    %v248 = vadd.f32 %v124, %v247
    %v249 = vpop.f32.mrf.mxu0
    %250 = vmatprep.mubr.f32.mxu0 0.0
    %251 = vmatmul.mubr.f32.gmra.mxu0 %v149
    %v252 = vpop.f32.mrf.mxu0
    %v253 = vadd.f32 %v124, %v252
    %v254 = vpop.f32.mrf.mxu0
    %255 = vdwg.mxu0
    %v256 = vld [vmem:[%s3] sm:$0xff]
    %v257 = vld [vmem:[%s3 + $0x8] sm:$0xff]
    %v258 = vld [vmem:[%s3 + $0x10] sm:$0xff]
    %v259 = vld [vmem:[%s3 + $0x18] sm:$0xff]
    %v260 = vld [vmem:[%s5] sm:$0xff]
    %v261 = vld [vmem:[%s5 + $0x8] sm:$0xff]
    %v262 = vld [vmem:[%s5 + $0x10] sm:$0xff]
    %v263 = vld [vmem:[%s5 + $0x18] sm:$0xff]
    %v264 = vld [vmem:[%s7] sm:$0x1]
    %vm265 = vcmask 261120
    %v267 = vsel %vm265, 0.0, 0
    %269 = vmatprep.subr.mxu0 0.0
    %270 = vmatpush1.msra.mxu0 0.0
    %271 = vmatprep.subr.mxu0 0.0
    %272 = vmatpush1.msra.mxu0 0.0
    %273 = vmatprep.subr.mxu0 0.0
    %274 = vmatpush1.msra.mxu0 0.0
    %275 = vmatprep.subr.mxu0 0.0
    %276 = vmatpush1.msra.mxu0 0.0
    %277 = vmatprep.subr.mxu0 0.0
    %278 = vmatpush1.msra.mxu0 0.0
    %279 = vmatprep.subr.mxu0 0.0
    %280 = vmatpush1.msra.mxu0 0.0
    %281 = vmatprep.subr.mxu0 0.0
    %282 = vmatpush1.msra.mxu0 0.0
    %283 = vmatprep.subr.mxu0 0.0
    %284 = vmatpush1.msra.mxu0 0.0
    %285 = vmatprep.subr.mxu0 0.0
    %286 = vmatpush1.msra.mxu0 0.0
    %287 = vmatprep.subr.mxu0 0.0
    %288 = vmatpush1.msra.mxu0 0.0
    %289 = vmatprep.subr.mxu0 0.0
    %290 = vmatpush1.msra.mxu0 0.0
    %291 = vmatprep.subr.mxu0 0.0
    %292 = vmatpush1.msra.mxu0 0.0
    %293 = vmatprep.subr.mxu0 0.0
    %294 = vmatpush1.msra.mxu0 %v259
    %295 = vmatprep.subr.mxu0 0.0
    %296 = vmatpush1.msra.mxu0 %v258
    %297 = vmatprep.subr.mxu0 0.0
    %298 = vmatpush1.msra.mxu0 %v257
    %299 = vmatprep.subr.mxu0 0.0
    %300 = vmatpush1.msra.mxu0 %v256
    %301 = vmatprep.subr.mxu0 0.0
    %302 = vmatpush2.msra.mxu0 0.0
    %303 = vmatprep.subr.mxu0 0.0
    %304 = vmatpush2.msra.mxu0 0.0
    %305 = vmatprep.subr.mxu0 0.0
    %306 = vmatpush2.msra.mxu0 0.0
    %307 = vmatprep.subr.mxu0 0.0
    %308 = vmatpush2.msra.mxu0 0.0
    %309 = vmatprep.subr.mxu0 0.0
    %310 = vmatpush2.msra.mxu0 0.0
    %311 = vmatprep.subr.mxu0 0.0
    %312 = vmatpush2.msra.mxu0 0.0
    %313 = vmatprep.subr.mxu0 0.0
    %314 = vmatpush2.msra.mxu0 0.0
    %315 = vmatprep.subr.mxu0 0.0
    %316 = vmatpush2.msra.mxu0 0.0
    %317 = vmatprep.subr.mxu0 0.0
    %318 = vmatpush2.msra.mxu0 0.0
    %319 = vmatprep.subr.mxu0 0.0
    %320 = vmatpush2.msra.mxu0 0.0
    %321 = vmatprep.subr.mxu0 0.0
    %322 = vmatpush2.msra.mxu0 0.0
    %323 = vmatprep.subr.mxu0 0.0
    %324 = vmatpush2.msra.mxu0 0.0
    %325 = vmatprep.subr.mxu0 0.0
    %326 = vmatpush2.msra.mxu0 0.0
    %327 = vmatprep.subr.mxu0 0.0
    %328 = vmatpush2.msra.mxu0 0.0
    %329 = vmatprep.subr.mxu0 0.0
    %330 = vmatpush2.msra.mxu0 0.0
    %331 = vmatprep.subr.mxu0 0.0
    %332 = vmatpush2.msra.mxu0 0.0
    %333 = vmatprep.mubr.f32.mxu0 0.0
    %334 = vmatmul.mubr.f32.gmra.mxu0 %v267
    %v335 = vpop.f32.mrf.mxu0
    %v336 = vadd.f32 0.0, %v335
    %v337 = vpop.f32.mrf.mxu0
    %338 = vdwg.mxu0
    %v340 = vrot.slane %v336, 1
    %v341 = vrot.slane %v336, 2
    %v342 = vrot.slane %v336, 3
    %v343 = vrot.slane %v336, 4
    %v344 = vrot.slane %v336, 5
    %v345 = vrot.slane %v336, 6
    %v346 = vrot.slane %v336, 7
    %v355 = vadd.f32 %v218, %v336
    %v356 = vadd.f32 %v223, %v340
    %v357 = vadd.f32 %v228, %v341
    %v358 = vadd.f32 %v233, %v342
    %v359 = vadd.f32 %v238, %v343
    %v360 = vadd.f32 %v243, %v344
    %v361 = vadd.f32 %v248, %v345
    %v362 = vadd.f32 %v253, %v346
    %v363 = vxor.u32 %v355, 2147483648
    %v364 = vxor.u32 %v356, 2147483648
    %v365 = vxor.u32 %v357, 2147483648
    %v366 = vxor.u32 %v358, 2147483648
    %v367 = vxor.u32 %v359, 2147483648
    %v368 = vxor.u32 %v360, 2147483648
    %v369 = vxor.u32 %v361, 2147483648
    %v370 = vxor.u32 %v362, 2147483648
    %v371 = vmul.f32 %v363, 1.442695
    %v372 = vpow.pop %v371
    %v373 = vmul.f32 %v364, 1.442695
    %v374 = vpow.pop %v373
    %v375 = vmul.f32 %v365, 1.442695
    %v376 = vpow.pop %v375
    %v377 = vmul.f32 %v366, 1.442695
    %v378 = vpow.pop %v377
    %v379 = vmul.f32 %v367, 1.442695
    %v380 = vpow.pop %v379
    %v381 = vmul.f32 %v368, 1.442695
    %v382 = vpow.pop %v381
    %v383 = vmul.f32 %v369, 1.442695
    %v384 = vpow.pop %v383
    %v385 = vmul.f32 %v370, 1.442695
    %v386 = vpow.pop %v385
    %v387 = vadd.f32 %v372, 1.0
    %v388 = vadd.f32 %v374, 1.0
    %v389 = vadd.f32 %v376, 1.0
    %v390 = vadd.f32 %v378, 1.0
    %v391 = vadd.f32 %v380, 1.0
    %v392 = vadd.f32 %v382, 1.0
    %v393 = vadd.f32 %v384, 1.0
    %v394 = vadd.f32 %v386, 1.0
    %v395 = vrcp.pop %v387
    %v396 = vmul.f32 1.0, %v395
    %v397 = vrcp.pop %v388
    %v398 = vmul.f32 1.0, %v397
    %v399 = vrcp.pop %v389
    %v400 = vmul.f32 1.0, %v399
    %v401 = vrcp.pop %v390
    %v402 = vmul.f32 1.0, %v401
    %v403 = vrcp.pop %v391
    %v404 = vmul.f32 1.0, %v403
    %v405 = vrcp.pop %v392
    %v406 = vmul.f32 1.0, %v405
    %v407 = vrcp.pop %v393
    %v408 = vmul.f32 1.0, %v407
    %v409 = vrcp.pop %v394
    %v410 = vmul.f32 1.0, %v409
    %v411 = vtanh.pop %v355
    %v412 = vtanh.pop %v356
    %v413 = vtanh.pop %v357
    %v414 = vtanh.pop %v358
    %v415 = vtanh.pop %v359
    %v416 = vtanh.pop %v360
    %v417 = vtanh.pop %v361
    %v418 = vtanh.pop %v362
    %v419 = vmul.f32 %v396, 0.0
    %v420 = vmul.f32 %v398, 0.0
    %v421 = vmul.f32 %v400, 0.0
    %v422 = vmul.f32 %v402, 0.0
    %v423 = vmul.f32 %v404, 0.0
    %v424 = vmul.f32 %v406, 0.0
    %v425 = vmul.f32 %v408, 0.0
    %v426 = vmul.f32 %v410, 0.0
    %435 = vrot.lane.b32.xlu0 %v411, 32
    %v436 = vpop.permute.xlu0 %435
    %437 = vrot.lane.b32.xlu0 %v412, 32
    %v438 = vpop.permute.xlu0 %437
    %439 = vrot.lane.b32.xlu0 %v413, 32
    %v440 = vpop.permute.xlu0 %439
    %441 = vrot.lane.b32.xlu0 %v414, 32
    %v442 = vpop.permute.xlu0 %441
    %443 = vrot.lane.b32.xlu0 %v415, 32
    %v444 = vpop.permute.xlu0 %443
    %445 = vrot.lane.b32.xlu0 %v416, 32
    %v446 = vpop.permute.xlu0 %445
    %447 = vrot.lane.b32.xlu0 %v417, 32
    %v448 = vpop.permute.xlu0 %447
    %449 = vrot.lane.b32.xlu0 %v418, 32
    %v450 = vpop.permute.xlu0 %449
    %v459 = vmul.f32 %v396, %v436
    %v460 = vmul.f32 %v398, %v438
    %v461 = vmul.f32 %v400, %v440
    %v462 = vmul.f32 %v402, %v442
    %v463 = vmul.f32 %v404, %v444
    %v464 = vmul.f32 %v406, %v446
    %v465 = vmul.f32 %v408, %v448
    %v466 = vmul.f32 %v410, %v450
    %475 = vrot.lane.b32.xlu0 %v459, 32
    %v476 = vpop.permute.xlu0 %475
    %477 = vrot.lane.b32.xlu0 %v460, 32
    %v478 = vpop.permute.xlu0 %477
    %479 = vrot.lane.b32.xlu0 %v461, 32
    %v480 = vpop.permute.xlu0 %479
    %481 = vrot.lane.b32.xlu0 %v462, 32
    %v482 = vpop.permute.xlu0 %481
    %483 = vrot.lane.b32.xlu0 %v463, 32
    %v484 = vpop.permute.xlu0 %483
    %485 = vrot.lane.b32.xlu0 %v464, 32
    %v486 = vpop.permute.xlu0 %485
    %487 = vrot.lane.b32.xlu0 %v465, 32
    %v488 = vpop.permute.xlu0 %487
    %489 = vrot.lane.b32.xlu0 %v466, 32
    %v490 = vpop.permute.xlu0 %489
    %v499 = vadd.f32 %v419, %v476
    %v500 = vadd.f32 %v420, %v478
    %v501 = vadd.f32 %v421, %v480
    %v502 = vadd.f32 %v422, %v482
    %v503 = vadd.f32 %v423, %v484
    %v504 = vadd.f32 %v424, %v486
    %v505 = vadd.f32 %v425, %v488
    %v506 = vadd.f32 %v426, %v490
    %v507 = vtanh.pop %v499
    %v508 = vtanh.pop %v500
    %v509 = vtanh.pop %v501
    %v510 = vtanh.pop %v502
    %v511 = vtanh.pop %v503
    %v512 = vtanh.pop %v504
    %v513 = vtanh.pop %v505
    %v514 = vtanh.pop %v506
    %523 = vrot.lane.b32.xlu0 %v507, 32
    %v524 = vpop.permute.xlu0 %523
    %525 = vrot.lane.b32.xlu0 %v508, 32
    %v526 = vpop.permute.xlu0 %525
    %527 = vrot.lane.b32.xlu0 %v509, 32
    %v528 = vpop.permute.xlu0 %527
    %529 = vrot.lane.b32.xlu0 %v510, 32
    %v530 = vpop.permute.xlu0 %529
    %531 = vrot.lane.b32.xlu0 %v511, 32
    %v532 = vpop.permute.xlu0 %531
    %533 = vrot.lane.b32.xlu0 %v512, 32
    %v534 = vpop.permute.xlu0 %533
    %535 = vrot.lane.b32.xlu0 %v513, 32
    %v536 = vpop.permute.xlu0 %535
    %537 = vrot.lane.b32.xlu0 %v514, 32
    %v538 = vpop.permute.xlu0 %537
    %v547 = vmul.f32 %v396, %v524
    %v548 = vmul.f32 %v398, %v526
    %v549 = vmul.f32 %v400, %v528
    %v550 = vmul.f32 %v402, %v530
    %v551 = vmul.f32 %v404, %v532
    %v552 = vmul.f32 %v406, %v534
    %v553 = vmul.f32 %v408, %v536
    %v554 = vmul.f32 %v410, %v538
    %v556 = vlaneseq
    %v557 = vshrl.u32 %v556, 7
    %v558 = vsub.s32 0, %v557
    %v559 = vrot.slane %v264, %v558
    %v569 = vrot.slane %v548, 7
    %vm570 = vcmask 1041409
    %v571 = vsel %vm570, %v569, %v547
    %v572 = vrot.slane %v549, 6
    %vm573 = vcmask 1042434
    %v574 = vsel %vm573, %v572, %v571
    %v575 = vrot.slane %v550, 5
    %vm576 = vcmask 1043459
    %v577 = vsel %vm576, %v575, %v574
    %v578 = vrot.slane %v551, 4
    %vm579 = vcmask 1044484
    %v580 = vsel %vm579, %v578, %v577
    %v581 = vrot.slane %v552, 3
    %vm582 = vcmask 1045509
    %v583 = vsel %vm582, %v581, %v580
    %v584 = vrot.slane %v553, 2
    %vm585 = vcmask 1046534
    %v586 = vsel %vm585, %v584, %v583
    %v587 = vrot.slane %v554, 1
    %vm588 = vcmask 1047559
    %v589 = vsel %vm588, %v587, %v586
    %590 = vrot.lane.b32.xlu0 %v589, 64
    %v591 = vpop.permute.xlu0 %590
    %v592 = vsel %vm265, %v591, 0
    %594 = vmatprep.subr.mxu0 0.0
    %595 = vmatpush1.msra.mxu0 0.0
    %596 = vmatprep.subr.mxu0 0.0
    %597 = vmatpush1.msra.mxu0 0.0
    %598 = vmatprep.subr.mxu0 0.0
    %599 = vmatpush1.msra.mxu0 0.0
    %600 = vmatprep.subr.mxu0 0.0
    %601 = vmatpush1.msra.mxu0 0.0
    %602 = vmatprep.subr.mxu0 0.0
    %603 = vmatpush1.msra.mxu0 0.0
    %604 = vmatprep.subr.mxu0 0.0
    %605 = vmatpush1.msra.mxu0 0.0
    %606 = vmatprep.subr.mxu0 0.0
    %607 = vmatpush1.msra.mxu0 0.0
    %608 = vmatprep.subr.mxu0 0.0
    %609 = vmatpush1.msra.mxu0 0.0
    %610 = vmatprep.subr.mxu0 0.0
    %611 = vmatpush1.msra.mxu0 0.0
    %612 = vmatprep.subr.mxu0 0.0
    %613 = vmatpush1.msra.mxu0 0.0
    %614 = vmatprep.subr.mxu0 0.0
    %615 = vmatpush1.msra.mxu0 0.0
    %616 = vmatprep.subr.mxu0 0.0
    %617 = vmatpush1.msra.mxu0 0.0
    %618 = vmatprep.subr.mxu0 0.0
    %619 = vmatpush1.msra.mxu0 %v263
    %620 = vmatprep.subr.mxu0 0.0
    %621 = vmatpush1.msra.mxu0 %v262
    %622 = vmatprep.subr.mxu0 0.0
    %623 = vmatpush1.msra.mxu0 %v261
    %624 = vmatprep.subr.mxu0 0.0
    %625 = vmatpush1.msra.mxu0 %v260
    %626 = vmatprep.subr.mxu0 0.0
    %627 = vmatpush2.msra.mxu0 0.0
    %628 = vmatprep.subr.mxu0 0.0
    %629 = vmatpush2.msra.mxu0 0.0
    %630 = vmatprep.subr.mxu0 0.0
    %631 = vmatpush2.msra.mxu0 0.0
    %632 = vmatprep.subr.mxu0 0.0
    %633 = vmatpush2.msra.mxu0 0.0
    %634 = vmatprep.subr.mxu0 0.0
    %635 = vmatpush2.msra.mxu0 0.0
    %636 = vmatprep.subr.mxu0 0.0
    %637 = vmatpush2.msra.mxu0 0.0
    %638 = vmatprep.subr.mxu0 0.0
    %639 = vmatpush2.msra.mxu0 0.0
    %640 = vmatprep.subr.mxu0 0.0
    %641 = vmatpush2.msra.mxu0 0.0
    %642 = vmatprep.subr.mxu0 0.0
    %643 = vmatpush2.msra.mxu0 0.0
    %644 = vmatprep.subr.mxu0 0.0
    %645 = vmatpush2.msra.mxu0 0.0
    %646 = vmatprep.subr.mxu0 0.0
    %647 = vmatpush2.msra.mxu0 0.0
    %648 = vmatprep.subr.mxu0 0.0
    %649 = vmatpush2.msra.mxu0 0.0
    %650 = vmatprep.subr.mxu0 0.0
    %651 = vmatpush2.msra.mxu0 0.0
    %652 = vmatprep.subr.mxu0 0.0
    %653 = vmatpush2.msra.mxu0 0.0
    %654 = vmatprep.subr.mxu0 0.0
    %655 = vmatpush2.msra.mxu0 0.0
    %656 = vmatprep.subr.mxu0 0.0
    %657 = vmatpush2.msra.mxu0 0.0
    %658 = vmatprep.mubr.f32.mxu0 0.0
    %659 = vmatmul.mubr.f32.gmra.mxu0 %v592
    %v660 = vpop.f32.mrf.mxu0
    %v661 = vadd.f32 %v559, %v660
    %v662 = vpop.f32.mrf.mxu0
    %663 = vdwg.mxu0
    %664 = vmatprep.subr.mxu0 0.0
    %665 = vmatpush1.msra.mxu0 0.0
    %666 = vmatprep.subr.mxu0 0.0
    %667 = vmatpush1.msra.mxu0 0.0
    %668 = vmatprep.subr.mxu0 0.0
    %669 = vmatpush1.msra.mxu0 0.0
    %670 = vmatprep.subr.mxu0 0.0
    %671 = vmatpush1.msra.mxu0 0.0
    %672 = vmatprep.subr.mxu0 0.0
    %673 = vmatpush1.msra.mxu0 0.0
    %674 = vmatprep.subr.mxu0 0.0
    %675 = vmatpush1.msra.mxu0 0.0
    %676 = vmatprep.subr.mxu0 0.0
    %677 = vmatpush1.msra.mxu0 0.0
    %678 = vmatprep.subr.mxu0 0.0
    %679 = vmatpush1.msra.mxu0 0.0
    %680 = vmatprep.subr.mxu0 0.0
    %681 = vmatpush1.msra.mxu0 0.0
    %682 = vmatprep.subr.mxu0 0.0
    %683 = vmatpush1.msra.mxu0 0.0
    %684 = vmatprep.subr.mxu0 0.0
    %685 = vmatpush1.msra.mxu0 0.0
    %686 = vmatprep.subr.mxu0 0.0
    %687 = vmatpush1.msra.mxu0 0.0
    %688 = vmatprep.subr.mxu0 0.0
    %689 = vmatpush1.msra.mxu0 %v259
    %690 = vmatprep.subr.mxu0 0.0
    %691 = vmatpush1.msra.mxu0 %v258
    %692 = vmatprep.subr.mxu0 0.0
    %693 = vmatpush1.msra.mxu0 %v257
    %694 = vmatprep.subr.mxu0 0.0
    %695 = vmatpush1.msra.mxu0 %v256
    %696 = vmatprep.subr.mxu0 0.0
    %697 = vmatpush2.msra.mxu0 0.0
    %698 = vmatprep.subr.mxu0 0.0
    %699 = vmatpush2.msra.mxu0 0.0
    %700 = vmatprep.subr.mxu0 0.0
    %701 = vmatpush2.msra.mxu0 0.0
    %702 = vmatprep.subr.mxu0 0.0
    %703 = vmatpush2.msra.mxu0 0.0
    %704 = vmatprep.subr.mxu0 0.0
    %705 = vmatpush2.msra.mxu0 0.0
    %706 = vmatprep.subr.mxu0 0.0
    %707 = vmatpush2.msra.mxu0 0.0
    %708 = vmatprep.subr.mxu0 0.0
    %709 = vmatpush2.msra.mxu0 0.0
    %710 = vmatprep.subr.mxu0 0.0
    %711 = vmatpush2.msra.mxu0 0.0
    %712 = vmatprep.subr.mxu0 0.0
    %713 = vmatpush2.msra.mxu0 0.0
    %714 = vmatprep.subr.mxu0 0.0
    %715 = vmatpush2.msra.mxu0 0.0
    %716 = vmatprep.subr.mxu0 0.0
    %717 = vmatpush2.msra.mxu0 0.0
    %718 = vmatprep.subr.mxu0 0.0
    %719 = vmatpush2.msra.mxu0 0.0
    %720 = vmatprep.subr.mxu0 0.0
    %721 = vmatpush2.msra.mxu0 0.0
    %722 = vmatprep.subr.mxu0 0.0
    %723 = vmatpush2.msra.mxu0 0.0
    %724 = vmatprep.subr.mxu0 0.0
    %725 = vmatpush2.msra.mxu0 0.0
    %726 = vmatprep.subr.mxu0 0.0
    %727 = vmatpush2.msra.mxu0 0.0
    %728 = vmatprep.mubr.f32.mxu0 0.0
    %729 = vmatmul.mubr.f32.gmra.mxu0 %v592
    %v730 = vpop.f32.mrf.mxu0
    %v731 = vadd.f32 0.0, %v730
    %v732 = vpop.f32.mrf.mxu0
    %733 = vdwg.mxu0
    %v735 = vrot.slane %v731, 7
    %v736 = vrot.slane %v731, 1
    %v737 = vrot.slane %v731, 2
    %v738 = vrot.slane %v731, 3
    %v739 = vrot.slane %v731, 4
    %v740 = vrot.slane %v731, 5
    %v741 = vrot.slane %v731, 6
    %v750 = vadd.f32 %v218, %v735
    %v751 = vadd.f32 %v223, %v731
    %v752 = vadd.f32 %v228, %v736
    %v753 = vadd.f32 %v233, %v737
    %v754 = vadd.f32 %v238, %v738
    %v755 = vadd.f32 %v243, %v739
    %v756 = vadd.f32 %v248, %v740
    %v757 = vadd.f32 %v253, %v741
    %v758 = vxor.u32 %v750, 2147483648
    %v759 = vxor.u32 %v751, 2147483648
    %v760 = vxor.u32 %v752, 2147483648
    %v761 = vxor.u32 %v753, 2147483648
    %v762 = vxor.u32 %v754, 2147483648
    %v763 = vxor.u32 %v755, 2147483648
    %v764 = vxor.u32 %v756, 2147483648
    %v765 = vxor.u32 %v757, 2147483648
    %v766 = vmul.f32 %v758, 1.442695
    %v767 = vpow.pop %v766
    %v768 = vmul.f32 %v759, 1.442695
    %v769 = vpow.pop %v768
    %v770 = vmul.f32 %v760, 1.442695
    %v771 = vpow.pop %v770
    %v772 = vmul.f32 %v761, 1.442695
    %v773 = vpow.pop %v772
    %v774 = vmul.f32 %v762, 1.442695
    %v775 = vpow.pop %v774
    %v776 = vmul.f32 %v763, 1.442695
    %v777 = vpow.pop %v776
    %v778 = vmul.f32 %v764, 1.442695
    %v779 = vpow.pop %v778
    %v780 = vmul.f32 %v765, 1.442695
    %v781 = vpow.pop %v780
    %v782 = vadd.f32 %v767, 1.0
    %v783 = vadd.f32 %v769, 1.0
    %v784 = vadd.f32 %v771, 1.0
    %v785 = vadd.f32 %v773, 1.0
    %v786 = vadd.f32 %v775, 1.0
    %v787 = vadd.f32 %v777, 1.0
    %v788 = vadd.f32 %v779, 1.0
    %v789 = vadd.f32 %v781, 1.0
    %v790 = vrcp.pop %v782
    %v791 = vmul.f32 1.0, %v790
    %v792 = vrcp.pop %v783
    %v793 = vmul.f32 1.0, %v792
    %v794 = vrcp.pop %v784
    %v795 = vmul.f32 1.0, %v794
    %v796 = vrcp.pop %v785
    %v797 = vmul.f32 1.0, %v796
    %v798 = vrcp.pop %v786
    %v799 = vmul.f32 1.0, %v798
    %v800 = vrcp.pop %v787
    %v801 = vmul.f32 1.0, %v800
    %v802 = vrcp.pop %v788
    %v803 = vmul.f32 1.0, %v802
    %v804 = vrcp.pop %v789
    %v805 = vmul.f32 1.0, %v804
    %v806 = vtanh.pop %v750
    %v807 = vtanh.pop %v751
    %v808 = vtanh.pop %v752
    %v809 = vtanh.pop %v753
    %v810 = vtanh.pop %v754
    %v811 = vtanh.pop %v755
    %v812 = vtanh.pop %v756
    %v813 = vtanh.pop %v757
    %v822 = vrot.slane %v499, 7
    %v823 = vrot.slane %v500, 7
    %v824 = vrot.slane %v501, 7
    %v825 = vrot.slane %v502, 7
    %v826 = vrot.slane %v503, 7
    %v827 = vrot.slane %v504, 7
    %v828 = vrot.slane %v505, 7
    %v829 = vrot.slane %v506, 7
    %v838 = vmul.f32 %v791, %v822
    %v839 = vmul.f32 %v793, %v823
    %v840 = vmul.f32 %v795, %v824
    %v841 = vmul.f32 %v797, %v825
    %v842 = vmul.f32 %v799, %v826
    %v843 = vmul.f32 %v801, %v827
    %v844 = vmul.f32 %v803, %v828
    %v845 = vmul.f32 %v805, %v829
    %854 = vrot.lane.b32.xlu0 %v806, 32
    %v855 = vpop.permute.xlu0 %854
    %856 = vrot.lane.b32.xlu0 %v807, 32
    %v857 = vpop.permute.xlu0 %856
    %858 = vrot.lane.b32.xlu0 %v808, 32
    %v859 = vpop.permute.xlu0 %858
    %860 = vrot.lane.b32.xlu0 %v809, 32
    %v861 = vpop.permute.xlu0 %860
    %862 = vrot.lane.b32.xlu0 %v810, 32
    %v863 = vpop.permute.xlu0 %862
    %864 = vrot.lane.b32.xlu0 %v811, 32
    %v865 = vpop.permute.xlu0 %864
    %866 = vrot.lane.b32.xlu0 %v812, 32
    %v867 = vpop.permute.xlu0 %866
    %868 = vrot.lane.b32.xlu0 %v813, 32
    %v869 = vpop.permute.xlu0 %868
    %v878 = vmul.f32 %v791, %v855
    %v879 = vmul.f32 %v793, %v857
    %v880 = vmul.f32 %v795, %v859
    %v881 = vmul.f32 %v797, %v861
    %v882 = vmul.f32 %v799, %v863
    %v883 = vmul.f32 %v801, %v865
    %v884 = vmul.f32 %v803, %v867
    %v885 = vmul.f32 %v805, %v869
    %894 = vrot.lane.b32.xlu0 %v878, 32
    %v895 = vpop.permute.xlu0 %894
    %896 = vrot.lane.b32.xlu0 %v879, 32
    %v897 = vpop.permute.xlu0 %896
    %898 = vrot.lane.b32.xlu0 %v880, 32
    %v899 = vpop.permute.xlu0 %898
    %900 = vrot.lane.b32.xlu0 %v881, 32
    %v901 = vpop.permute.xlu0 %900
    %902 = vrot.lane.b32.xlu0 %v882, 32
    %v903 = vpop.permute.xlu0 %902
    %904 = vrot.lane.b32.xlu0 %v883, 32
    %v905 = vpop.permute.xlu0 %904
    %906 = vrot.lane.b32.xlu0 %v884, 32
    %v907 = vpop.permute.xlu0 %906
    %908 = vrot.lane.b32.xlu0 %v885, 32
    %v909 = vpop.permute.xlu0 %908
    %v918 = vadd.f32 %v838, %v895
    %v919 = vadd.f32 %v839, %v897
    %v920 = vadd.f32 %v840, %v899
    %v921 = vadd.f32 %v841, %v901
    %v922 = vadd.f32 %v842, %v903
    %v923 = vadd.f32 %v843, %v905
    %v924 = vadd.f32 %v844, %v907
    %v925 = vadd.f32 %v845, %v909
    %v926 = vtanh.pop %v918
    %v927 = vtanh.pop %v919
    %v928 = vtanh.pop %v920
    %v929 = vtanh.pop %v921
    %v930 = vtanh.pop %v922
    %v931 = vtanh.pop %v923
    %v932 = vtanh.pop %v924
    %v933 = vtanh.pop %v925
    %942 = vrot.lane.b32.xlu0 %v926, 32
    %v943 = vpop.permute.xlu0 %942
    %944 = vrot.lane.b32.xlu0 %v927, 32
    %v945 = vpop.permute.xlu0 %944
    %946 = vrot.lane.b32.xlu0 %v928, 32
    %v947 = vpop.permute.xlu0 %946
    %948 = vrot.lane.b32.xlu0 %v929, 32
    %v949 = vpop.permute.xlu0 %948
    %950 = vrot.lane.b32.xlu0 %v930, 32
    %v951 = vpop.permute.xlu0 %950
    %952 = vrot.lane.b32.xlu0 %v931, 32
    %v953 = vpop.permute.xlu0 %952
    %954 = vrot.lane.b32.xlu0 %v932, 32
    %v955 = vpop.permute.xlu0 %954
    %956 = vrot.lane.b32.xlu0 %v933, 32
    %v957 = vpop.permute.xlu0 %956
    %v966 = vmul.f32 %v791, %v943
    %v967 = vmul.f32 %v793, %v945
    %v968 = vmul.f32 %v795, %v947
    %v969 = vmul.f32 %v797, %v949
    %v970 = vmul.f32 %v799, %v951
    %v971 = vmul.f32 %v801, %v953
    %v972 = vmul.f32 %v803, %v955
    %v973 = vmul.f32 %v805, %v957
    %v982 = vrot.slane %v966, 1
    %v983 = vsel %vm570, %v967, %v982
    %v984 = vrot.slane %v968, 7
    %v985 = vsel %vm573, %v984, %v983
    %v986 = vrot.slane %v969, 6
    %v987 = vsel %vm576, %v986, %v985
    %v988 = vrot.slane %v970, 5
    %v989 = vsel %vm579, %v988, %v987
    %v990 = vrot.slane %v971, 4
    %v991 = vsel %vm582, %v990, %v989
    %v992 = vrot.slane %v972, 3
    %v993 = vsel %vm585, %v992, %v991
    %v994 = vrot.slane %v973, 2
    %v995 = vsel %vm588, %v994, %v993
    %996 = vrot.lane.b32.xlu0 %v995, 64
    %v997 = vpop.permute.xlu0 %996
    %v998 = vsel %vm265, %v997, 0
    %1000 = vmatprep.subr.mxu0 0.0
    %1001 = vmatpush1.msra.mxu0 0.0
    %1002 = vmatprep.subr.mxu0 0.0
    %1003 = vmatpush1.msra.mxu0 0.0
    %1004 = vmatprep.subr.mxu0 0.0
    %1005 = vmatpush1.msra.mxu0 0.0
    %1006 = vmatprep.subr.mxu0 0.0
    %1007 = vmatpush1.msra.mxu0 0.0
    %1008 = vmatprep.subr.mxu0 0.0
    %1009 = vmatpush1.msra.mxu0 0.0
    %1010 = vmatprep.subr.mxu0 0.0
    %1011 = vmatpush1.msra.mxu0 0.0
    %1012 = vmatprep.subr.mxu0 0.0
    %1013 = vmatpush1.msra.mxu0 0.0
    %1014 = vmatprep.subr.mxu0 0.0
    %1015 = vmatpush1.msra.mxu0 0.0
    %1016 = vmatprep.subr.mxu0 0.0
    %1017 = vmatpush1.msra.mxu0 0.0
    %1018 = vmatprep.subr.mxu0 0.0
    %1019 = vmatpush1.msra.mxu0 0.0
    %1020 = vmatprep.subr.mxu0 0.0
    %1021 = vmatpush1.msra.mxu0 0.0
    %1022 = vmatprep.subr.mxu0 0.0
    %1023 = vmatpush1.msra.mxu0 0.0
    %1024 = vmatprep.subr.mxu0 0.0
    %1025 = vmatpush1.msra.mxu0 %v263
    %1026 = vmatprep.subr.mxu0 0.0
    %1027 = vmatpush1.msra.mxu0 %v262
    %1028 = vmatprep.subr.mxu0 0.0
    %1029 = vmatpush1.msra.mxu0 %v261
    %1030 = vmatprep.subr.mxu0 0.0
    %1031 = vmatpush1.msra.mxu0 %v260
    %1032 = vmatprep.subr.mxu0 0.0
    %1033 = vmatpush2.msra.mxu0 0.0
    %1034 = vmatprep.subr.mxu0 0.0
    %1035 = vmatpush2.msra.mxu0 0.0
    %1036 = vmatprep.subr.mxu0 0.0
    %1037 = vmatpush2.msra.mxu0 0.0
    %1038 = vmatprep.subr.mxu0 0.0
    %1039 = vmatpush2.msra.mxu0 0.0
    %1040 = vmatprep.subr.mxu0 0.0
    %1041 = vmatpush2.msra.mxu0 0.0
    %1042 = vmatprep.subr.mxu0 0.0
    %1043 = vmatpush2.msra.mxu0 0.0
    %1044 = vmatprep.subr.mxu0 0.0
    %1045 = vmatpush2.msra.mxu0 0.0
    %1046 = vmatprep.subr.mxu0 0.0
    %1047 = vmatpush2.msra.mxu0 0.0
    %1048 = vmatprep.subr.mxu0 0.0
    %1049 = vmatpush2.msra.mxu0 0.0
    %1050 = vmatprep.subr.mxu0 0.0
    %1051 = vmatpush2.msra.mxu0 0.0
    %1052 = vmatprep.subr.mxu0 0.0
    %1053 = vmatpush2.msra.mxu0 0.0
    %1054 = vmatprep.subr.mxu0 0.0
    %1055 = vmatpush2.msra.mxu0 0.0
    %1056 = vmatprep.subr.mxu0 0.0
    %1057 = vmatpush2.msra.mxu0 0.0
    %1058 = vmatprep.subr.mxu0 0.0
    %1059 = vmatpush2.msra.mxu0 0.0
    %1060 = vmatprep.subr.mxu0 0.0
    %1061 = vmatpush2.msra.mxu0 0.0
    %1062 = vmatprep.subr.mxu0 0.0
    %1063 = vmatpush2.msra.mxu0 0.0
    %1064 = vmatprep.mubr.f32.mxu0 0.0
    %1065 = vmatmul.mubr.f32.gmra.mxu0 %v998
    %v1066 = vpop.f32.mrf.mxu0
    %v1067 = vadd.f32 %v559, %v1066
    %v1068 = vpop.f32.mrf.mxu0
    %1069 = vdwg.mxu0
    %1070 = vmatprep.subr.mxu0 0.0
    %1071 = vmatpush1.msra.mxu0 0.0
    %1072 = vmatprep.subr.mxu0 0.0
    %1073 = vmatpush1.msra.mxu0 0.0
    %1074 = vmatprep.subr.mxu0 0.0
    %1075 = vmatpush1.msra.mxu0 0.0
    %1076 = vmatprep.subr.mxu0 0.0
    %1077 = vmatpush1.msra.mxu0 0.0
    %1078 = vmatprep.subr.mxu0 0.0
    %1079 = vmatpush1.msra.mxu0 0.0
    %1080 = vmatprep.subr.mxu0 0.0
    %1081 = vmatpush1.msra.mxu0 0.0
    %1082 = vmatprep.subr.mxu0 0.0
    %1083 = vmatpush1.msra.mxu0 0.0
    %1084 = vmatprep.subr.mxu0 0.0
    %1085 = vmatpush1.msra.mxu0 0.0
    %1086 = vmatprep.subr.mxu0 0.0
    %1087 = vmatpush1.msra.mxu0 0.0
    %1088 = vmatprep.subr.mxu0 0.0
    %1089 = vmatpush1.msra.mxu0 0.0
    %1090 = vmatprep.subr.mxu0 0.0
    %1091 = vmatpush1.msra.mxu0 0.0
    %1092 = vmatprep.subr.mxu0 0.0
    %1093 = vmatpush1.msra.mxu0 0.0
    %1094 = vmatprep.subr.mxu0 0.0
    %1095 = vmatpush1.msra.mxu0 %v259
    %1096 = vmatprep.subr.mxu0 0.0
    %1097 = vmatpush1.msra.mxu0 %v258
    %1098 = vmatprep.subr.mxu0 0.0
    %1099 = vmatpush1.msra.mxu0 %v257
    %1100 = vmatprep.subr.mxu0 0.0
    %1101 = vmatpush1.msra.mxu0 %v256
    %1102 = vmatprep.subr.mxu0 0.0
    %1103 = vmatpush2.msra.mxu0 0.0
    %1104 = vmatprep.subr.mxu0 0.0
    %1105 = vmatpush2.msra.mxu0 0.0
    %1106 = vmatprep.subr.mxu0 0.0
    %1107 = vmatpush2.msra.mxu0 0.0
    %1108 = vmatprep.subr.mxu0 0.0
    %1109 = vmatpush2.msra.mxu0 0.0
    %1110 = vmatprep.subr.mxu0 0.0
    %1111 = vmatpush2.msra.mxu0 0.0
    %1112 = vmatprep.subr.mxu0 0.0
    %1113 = vmatpush2.msra.mxu0 0.0
    %1114 = vmatprep.subr.mxu0 0.0
    %1115 = vmatpush2.msra.mxu0 0.0
    %1116 = vmatprep.subr.mxu0 0.0
    %1117 = vmatpush2.msra.mxu0 0.0
    %1118 = vmatprep.subr.mxu0 0.0
    %1119 = vmatpush2.msra.mxu0 0.0
    %1120 = vmatprep.subr.mxu0 0.0
    %1121 = vmatpush2.msra.mxu0 0.0
    %1122 = vmatprep.subr.mxu0 0.0
    %1123 = vmatpush2.msra.mxu0 0.0
    %1124 = vmatprep.subr.mxu0 0.0
    %1125 = vmatpush2.msra.mxu0 0.0
    %1126 = vmatprep.subr.mxu0 0.0
    %1127 = vmatpush2.msra.mxu0 0.0
    %1128 = vmatprep.subr.mxu0 0.0
    %1129 = vmatpush2.msra.mxu0 0.0
    %1130 = vmatprep.subr.mxu0 0.0
    %1131 = vmatpush2.msra.mxu0 0.0
    %1132 = vmatprep.subr.mxu0 0.0
    %1133 = vmatpush2.msra.mxu0 0.0
    %1134 = vmatprep.mubr.f32.mxu0 0.0
    %1135 = vmatmul.mubr.f32.gmra.mxu0 %v998
    %v1136 = vpop.f32.mrf.mxu0
    %v1137 = vadd.f32 0.0, %v1136
    %v1138 = vpop.f32.mrf.mxu0
    %1139 = vdwg.mxu0
    %v1141 = vrot.slane %v1137, 6
    %v1142 = vrot.slane %v1137, 7
    %v1143 = vrot.slane %v1137, 1
    %v1144 = vrot.slane %v1137, 2
    %v1145 = vrot.slane %v1137, 3
    %v1146 = vrot.slane %v1137, 4
    %v1147 = vrot.slane %v1137, 5
    %v1156 = vadd.f32 %v218, %v1141
    %v1157 = vadd.f32 %v223, %v1142
    %v1158 = vadd.f32 %v228, %v1137
    %v1159 = vadd.f32 %v233, %v1143
    %v1160 = vadd.f32 %v238, %v1144
    %v1161 = vadd.f32 %v243, %v1145
    %v1162 = vadd.f32 %v248, %v1146
    %v1163 = vadd.f32 %v253, %v1147
    %v1164 = vxor.u32 %v1156, 2147483648
    %v1165 = vxor.u32 %v1157, 2147483648
    %v1166 = vxor.u32 %v1158, 2147483648
    %v1167 = vxor.u32 %v1159, 2147483648
    %v1168 = vxor.u32 %v1160, 2147483648
    %v1169 = vxor.u32 %v1161, 2147483648
    %v1170 = vxor.u32 %v1162, 2147483648
    %v1171 = vxor.u32 %v1163, 2147483648
    %v1172 = vmul.f32 %v1164, 1.442695
    %v1173 = vpow.pop %v1172
    %v1174 = vmul.f32 %v1165, 1.442695
    %v1175 = vpow.pop %v1174
    %v1176 = vmul.f32 %v1166, 1.442695
    %v1177 = vpow.pop %v1176
    %v1178 = vmul.f32 %v1167, 1.442695
    %v1179 = vpow.pop %v1178
    %v1180 = vmul.f32 %v1168, 1.442695
    %v1181 = vpow.pop %v1180
    %v1182 = vmul.f32 %v1169, 1.442695
    %v1183 = vpow.pop %v1182
    %v1184 = vmul.f32 %v1170, 1.442695
    %v1185 = vpow.pop %v1184
    %v1186 = vmul.f32 %v1171, 1.442695
    %v1187 = vpow.pop %v1186
    %v1188 = vadd.f32 %v1173, 1.0
    %v1189 = vadd.f32 %v1175, 1.0
    %v1190 = vadd.f32 %v1177, 1.0
    %v1191 = vadd.f32 %v1179, 1.0
    %v1192 = vadd.f32 %v1181, 1.0
    %v1193 = vadd.f32 %v1183, 1.0
    %v1194 = vadd.f32 %v1185, 1.0
    %v1195 = vadd.f32 %v1187, 1.0
    %v1196 = vrcp.pop %v1188
    %v1197 = vmul.f32 1.0, %v1196
    %v1198 = vrcp.pop %v1189
    %v1199 = vmul.f32 1.0, %v1198
    %v1200 = vrcp.pop %v1190
    %v1201 = vmul.f32 1.0, %v1200
    %v1202 = vrcp.pop %v1191
    %v1203 = vmul.f32 1.0, %v1202
    %v1204 = vrcp.pop %v1192
    %v1205 = vmul.f32 1.0, %v1204
    %v1206 = vrcp.pop %v1193
    %v1207 = vmul.f32 1.0, %v1206
    %v1208 = vrcp.pop %v1194
    %v1209 = vmul.f32 1.0, %v1208
    %v1210 = vrcp.pop %v1195
    %v1211 = vmul.f32 1.0, %v1210
    %v1212 = vtanh.pop %v1156
    %v1213 = vtanh.pop %v1157
    %v1214 = vtanh.pop %v1158
    %v1215 = vtanh.pop %v1159
    %v1216 = vtanh.pop %v1160
    %v1217 = vtanh.pop %v1161
    %v1218 = vtanh.pop %v1162
    %v1219 = vtanh.pop %v1163
    %v1228 = vrot.slane %v918, 7
    %v1229 = vrot.slane %v919, 7
    %v1230 = vrot.slane %v920, 7
    %v1231 = vrot.slane %v921, 7
    %v1232 = vrot.slane %v922, 7
    %v1233 = vrot.slane %v923, 7
    %v1234 = vrot.slane %v924, 7
    %v1235 = vrot.slane %v925, 7
    %v1244 = vmul.f32 %v1197, %v1228
    %v1245 = vmul.f32 %v1199, %v1229
    %v1246 = vmul.f32 %v1201, %v1230
    %v1247 = vmul.f32 %v1203, %v1231
    %v1248 = vmul.f32 %v1205, %v1232
    %v1249 = vmul.f32 %v1207, %v1233
    %v1250 = vmul.f32 %v1209, %v1234
    %v1251 = vmul.f32 %v1211, %v1235
    %1260 = vrot.lane.b32.xlu0 %v1212, 32
    %v1261 = vpop.permute.xlu0 %1260
    %1262 = vrot.lane.b32.xlu0 %v1213, 32
    %v1263 = vpop.permute.xlu0 %1262
    %1264 = vrot.lane.b32.xlu0 %v1214, 32
    %v1265 = vpop.permute.xlu0 %1264
    %1266 = vrot.lane.b32.xlu0 %v1215, 32
    %v1267 = vpop.permute.xlu0 %1266
    %1268 = vrot.lane.b32.xlu0 %v1216, 32
    %v1269 = vpop.permute.xlu0 %1268
    %1270 = vrot.lane.b32.xlu0 %v1217, 32
    %v1271 = vpop.permute.xlu0 %1270
    %1272 = vrot.lane.b32.xlu0 %v1218, 32
    %v1273 = vpop.permute.xlu0 %1272
    %1274 = vrot.lane.b32.xlu0 %v1219, 32
    %v1275 = vpop.permute.xlu0 %1274
    %v1284 = vmul.f32 %v1197, %v1261
    %v1285 = vmul.f32 %v1199, %v1263
    %v1286 = vmul.f32 %v1201, %v1265
    %v1287 = vmul.f32 %v1203, %v1267
    %v1288 = vmul.f32 %v1205, %v1269
    %v1289 = vmul.f32 %v1207, %v1271
    %v1290 = vmul.f32 %v1209, %v1273
    %v1291 = vmul.f32 %v1211, %v1275
    %1300 = vrot.lane.b32.xlu0 %v1284, 32
    %v1301 = vpop.permute.xlu0 %1300
    %1302 = vrot.lane.b32.xlu0 %v1285, 32
    %v1303 = vpop.permute.xlu0 %1302
    %1304 = vrot.lane.b32.xlu0 %v1286, 32
    %v1305 = vpop.permute.xlu0 %1304
    %1306 = vrot.lane.b32.xlu0 %v1287, 32
    %v1307 = vpop.permute.xlu0 %1306
    %1308 = vrot.lane.b32.xlu0 %v1288, 32
    %v1309 = vpop.permute.xlu0 %1308
    %1310 = vrot.lane.b32.xlu0 %v1289, 32
    %v1311 = vpop.permute.xlu0 %1310
    %1312 = vrot.lane.b32.xlu0 %v1290, 32
    %v1313 = vpop.permute.xlu0 %1312
    %1314 = vrot.lane.b32.xlu0 %v1291, 32
    %v1315 = vpop.permute.xlu0 %1314
    %v1324 = vadd.f32 %v1244, %v1301
    %v1325 = vadd.f32 %v1245, %v1303
    %v1326 = vadd.f32 %v1246, %v1305
    %v1327 = vadd.f32 %v1247, %v1307
    %v1328 = vadd.f32 %v1248, %v1309
    %v1329 = vadd.f32 %v1249, %v1311
    %v1330 = vadd.f32 %v1250, %v1313
    %v1331 = vadd.f32 %v1251, %v1315
    %v1332 = vtanh.pop %v1324
    %v1333 = vtanh.pop %v1325
    %v1334 = vtanh.pop %v1326
    %v1335 = vtanh.pop %v1327
    %v1336 = vtanh.pop %v1328
    %v1337 = vtanh.pop %v1329
    %v1338 = vtanh.pop %v1330
    %v1339 = vtanh.pop %v1331
    %1348 = vrot.lane.b32.xlu0 %v1332, 32
    %v1349 = vpop.permute.xlu0 %1348
    %1350 = vrot.lane.b32.xlu0 %v1333, 32
    %v1351 = vpop.permute.xlu0 %1350
    %1352 = vrot.lane.b32.xlu0 %v1334, 32
    %v1353 = vpop.permute.xlu0 %1352
    %1354 = vrot.lane.b32.xlu0 %v1335, 32
    %v1355 = vpop.permute.xlu0 %1354
    %1356 = vrot.lane.b32.xlu0 %v1336, 32
    %v1357 = vpop.permute.xlu0 %1356
    %1358 = vrot.lane.b32.xlu0 %v1337, 32
    %v1359 = vpop.permute.xlu0 %1358
    %1360 = vrot.lane.b32.xlu0 %v1338, 32
    %v1361 = vpop.permute.xlu0 %1360
    %1362 = vrot.lane.b32.xlu0 %v1339, 32
    %v1363 = vpop.permute.xlu0 %1362
    %v1372 = vmul.f32 %v1197, %v1349
    %v1373 = vmul.f32 %v1199, %v1351
    %v1374 = vmul.f32 %v1201, %v1353
    %v1375 = vmul.f32 %v1203, %v1355
    %v1376 = vmul.f32 %v1205, %v1357
    %v1377 = vmul.f32 %v1207, %v1359
    %v1378 = vmul.f32 %v1209, %v1361
    %v1379 = vmul.f32 %v1211, %v1363
    %v1388 = vrot.slane %v1372, 2
    %v1389 = vrot.slane %v1373, 1
    %v1390 = vsel %vm570, %v1389, %v1388
    %v1391 = vsel %vm573, %v1374, %v1390
    %v1392 = vrot.slane %v1375, 7
    %v1393 = vsel %vm576, %v1392, %v1391
    %v1394 = vrot.slane %v1376, 6
    %v1395 = vsel %vm579, %v1394, %v1393
    %v1396 = vrot.slane %v1377, 5
    %v1397 = vsel %vm582, %v1396, %v1395
    %v1398 = vrot.slane %v1378, 4
    %v1399 = vsel %vm585, %v1398, %v1397
    %v1400 = vrot.slane %v1379, 3
    %v1401 = vsel %vm588, %v1400, %v1399
    %1402 = vrot.lane.b32.xlu0 %v1401, 64
    %v1403 = vpop.permute.xlu0 %1402
    %v1404 = vsel %vm265, %v1403, 0
    %1406 = vmatprep.subr.mxu0 0.0
    %1407 = vmatpush1.msra.mxu0 0.0
    %1408 = vmatprep.subr.mxu0 0.0
    %1409 = vmatpush1.msra.mxu0 0.0
    %1410 = vmatprep.subr.mxu0 0.0
    %1411 = vmatpush1.msra.mxu0 0.0
    %1412 = vmatprep.subr.mxu0 0.0
    %1413 = vmatpush1.msra.mxu0 0.0
    %1414 = vmatprep.subr.mxu0 0.0
    %1415 = vmatpush1.msra.mxu0 0.0
    %1416 = vmatprep.subr.mxu0 0.0
    %1417 = vmatpush1.msra.mxu0 0.0
    %1418 = vmatprep.subr.mxu0 0.0
    %1419 = vmatpush1.msra.mxu0 0.0
    %1420 = vmatprep.subr.mxu0 0.0
    %1421 = vmatpush1.msra.mxu0 0.0
    %1422 = vmatprep.subr.mxu0 0.0
    %1423 = vmatpush1.msra.mxu0 0.0
    %1424 = vmatprep.subr.mxu0 0.0
    %1425 = vmatpush1.msra.mxu0 0.0
    %1426 = vmatprep.subr.mxu0 0.0
    %1427 = vmatpush1.msra.mxu0 0.0
    %1428 = vmatprep.subr.mxu0 0.0
    %1429 = vmatpush1.msra.mxu0 0.0
    %1430 = vmatprep.subr.mxu0 0.0
    %1431 = vmatpush1.msra.mxu0 %v263
    %1432 = vmatprep.subr.mxu0 0.0
    %1433 = vmatpush1.msra.mxu0 %v262
    %1434 = vmatprep.subr.mxu0 0.0
    %1435 = vmatpush1.msra.mxu0 %v261
    %1436 = vmatprep.subr.mxu0 0.0
    %1437 = vmatpush1.msra.mxu0 %v260
    %1438 = vmatprep.subr.mxu0 0.0
    %1439 = vmatpush2.msra.mxu0 0.0
    %1440 = vmatprep.subr.mxu0 0.0
    %1441 = vmatpush2.msra.mxu0 0.0
    %1442 = vmatprep.subr.mxu0 0.0
    %1443 = vmatpush2.msra.mxu0 0.0
    %1444 = vmatprep.subr.mxu0 0.0
    %1445 = vmatpush2.msra.mxu0 0.0
    %1446 = vmatprep.subr.mxu0 0.0
    %1447 = vmatpush2.msra.mxu0 0.0
    %1448 = vmatprep.subr.mxu0 0.0
    %1449 = vmatpush2.msra.mxu0 0.0
    %1450 = vmatprep.subr.mxu0 0.0
    %1451 = vmatpush2.msra.mxu0 0.0
    %1452 = vmatprep.subr.mxu0 0.0
    %1453 = vmatpush2.msra.mxu0 0.0
    %1454 = vmatprep.subr.mxu0 0.0
    %1455 = vmatpush2.msra.mxu0 0.0
    %1456 = vmatprep.subr.mxu0 0.0
    %1457 = vmatpush2.msra.mxu0 0.0
    %1458 = vmatprep.subr.mxu0 0.0
    %1459 = vmatpush2.msra.mxu0 0.0
    %1460 = vmatprep.subr.mxu0 0.0
    %1461 = vmatpush2.msra.mxu0 0.0
    %1462 = vmatprep.subr.mxu0 0.0
    %1463 = vmatpush2.msra.mxu0 0.0
    %1464 = vmatprep.subr.mxu0 0.0
    %1465 = vmatpush2.msra.mxu0 0.0
    %1466 = vmatprep.subr.mxu0 0.0
    %1467 = vmatpush2.msra.mxu0 0.0
    %1468 = vmatprep.subr.mxu0 0.0
    %1469 = vmatpush2.msra.mxu0 0.0
    %1470 = vmatprep.mubr.f32.mxu0 0.0
    %1471 = vmatmul.mubr.f32.gmra.mxu0 %v1404
    %v1472 = vpop.f32.mrf.mxu0
    %v1473 = vadd.f32 %v559, %v1472
    %v1474 = vpop.f32.mrf.mxu0
    %1475 = vdwg.mxu0
    %1476 = vmatprep.subr.mxu0 0.0
    %1477 = vmatpush1.msra.mxu0 0.0
    %1478 = vmatprep.subr.mxu0 0.0
    %1479 = vmatpush1.msra.mxu0 0.0
    %1480 = vmatprep.subr.mxu0 0.0
    %1481 = vmatpush1.msra.mxu0 0.0
    %1482 = vmatprep.subr.mxu0 0.0
    %1483 = vmatpush1.msra.mxu0 0.0
    %1484 = vmatprep.subr.mxu0 0.0
    %1485 = vmatpush1.msra.mxu0 0.0
    %1486 = vmatprep.subr.mxu0 0.0
    %1487 = vmatpush1.msra.mxu0 0.0
    %1488 = vmatprep.subr.mxu0 0.0
    %1489 = vmatpush1.msra.mxu0 0.0
    %1490 = vmatprep.subr.mxu0 0.0
    %1491 = vmatpush1.msra.mxu0 0.0
    %1492 = vmatprep.subr.mxu0 0.0
    %1493 = vmatpush1.msra.mxu0 0.0
    %1494 = vmatprep.subr.mxu0 0.0
    %1495 = vmatpush1.msra.mxu0 0.0
    %1496 = vmatprep.subr.mxu0 0.0
    %1497 = vmatpush1.msra.mxu0 0.0
    %1498 = vmatprep.subr.mxu0 0.0
    %1499 = vmatpush1.msra.mxu0 0.0
    %1500 = vmatprep.subr.mxu0 0.0
    %1501 = vmatpush1.msra.mxu0 %v259
    %1502 = vmatprep.subr.mxu0 0.0
    %1503 = vmatpush1.msra.mxu0 %v258
    %1504 = vmatprep.subr.mxu0 0.0
    %1505 = vmatpush1.msra.mxu0 %v257
    %1506 = vmatprep.subr.mxu0 0.0
    %1507 = vmatpush1.msra.mxu0 %v256
    %1508 = vmatprep.subr.mxu0 0.0
    %1509 = vmatpush2.msra.mxu0 0.0
    %1510 = vmatprep.subr.mxu0 0.0
    %1511 = vmatpush2.msra.mxu0 0.0
    %1512 = vmatprep.subr.mxu0 0.0
    %1513 = vmatpush2.msra.mxu0 0.0
    %1514 = vmatprep.subr.mxu0 0.0
    %1515 = vmatpush2.msra.mxu0 0.0
    %1516 = vmatprep.subr.mxu0 0.0
    %1517 = vmatpush2.msra.mxu0 0.0
    %1518 = vmatprep.subr.mxu0 0.0
    %1519 = vmatpush2.msra.mxu0 0.0
    %1520 = vmatprep.subr.mxu0 0.0
    %1521 = vmatpush2.msra.mxu0 0.0
    %1522 = vmatprep.subr.mxu0 0.0
    %1523 = vmatpush2.msra.mxu0 0.0
    %1524 = vmatprep.subr.mxu0 0.0
    %1525 = vmatpush2.msra.mxu0 0.0
    %1526 = vmatprep.subr.mxu0 0.0
    %1527 = vmatpush2.msra.mxu0 0.0
    %1528 = vmatprep.subr.mxu0 0.0
    %1529 = vmatpush2.msra.mxu0 0.0
    %1530 = vmatprep.subr.mxu0 0.0
    %1531 = vmatpush2.msra.mxu0 0.0
    %1532 = vmatprep.subr.mxu0 0.0
    %1533 = vmatpush2.msra.mxu0 0.0
    %1534 = vmatprep.subr.mxu0 0.0
    %1535 = vmatpush2.msra.mxu0 0.0
    %1536 = vmatprep.subr.mxu0 0.0
    %1537 = vmatpush2.msra.mxu0 0.0
    %1538 = vmatprep.subr.mxu0 0.0
    %1539 = vmatpush2.msra.mxu0 0.0
    %1540 = vmatprep.mubr.f32.mxu0 0.0
    %1541 = vmatmul.mubr.f32.gmra.mxu0 %v1404
    %v1542 = vpop.f32.mrf.mxu0
    %v1543 = vadd.f32 0.0, %v1542
    %v1544 = vpop.f32.mrf.mxu0
    %1545 = vdwg.mxu0
    %v1547 = vrot.slane %v1543, 5
    %v1548 = vrot.slane %v1543, 6
    %v1549 = vrot.slane %v1543, 7
    %v1550 = vrot.slane %v1543, 1
    %v1551 = vrot.slane %v1543, 2
    %v1552 = vrot.slane %v1543, 3
    %v1553 = vrot.slane %v1543, 4
    %v1562 = vadd.f32 %v218, %v1547
    %v1563 = vadd.f32 %v223, %v1548
    %v1564 = vadd.f32 %v228, %v1549
    %v1565 = vadd.f32 %v233, %v1543
    %v1566 = vadd.f32 %v238, %v1550
    %v1567 = vadd.f32 %v243, %v1551
    %v1568 = vadd.f32 %v248, %v1552
    %v1569 = vadd.f32 %v253, %v1553
    %v1570 = vxor.u32 %v1562, 2147483648
    %v1571 = vxor.u32 %v1563, 2147483648
    %v1572 = vxor.u32 %v1564, 2147483648
    %v1573 = vxor.u32 %v1565, 2147483648
    %v1574 = vxor.u32 %v1566, 2147483648
    %v1575 = vxor.u32 %v1567, 2147483648
    %v1576 = vxor.u32 %v1568, 2147483648
    %v1577 = vxor.u32 %v1569, 2147483648
    %v1578 = vmul.f32 %v1570, 1.442695
    %v1579 = vpow.pop %v1578
    %v1580 = vmul.f32 %v1571, 1.442695
    %v1581 = vpow.pop %v1580
    %v1582 = vmul.f32 %v1572, 1.442695
    %v1583 = vpow.pop %v1582
    %v1584 = vmul.f32 %v1573, 1.442695
    %v1585 = vpow.pop %v1584
    %v1586 = vmul.f32 %v1574, 1.442695
    %v1587 = vpow.pop %v1586
    %v1588 = vmul.f32 %v1575, 1.442695
    %v1589 = vpow.pop %v1588
    %v1590 = vmul.f32 %v1576, 1.442695
    %v1591 = vpow.pop %v1590
    %v1592 = vmul.f32 %v1577, 1.442695
    %v1593 = vpow.pop %v1592
    %v1594 = vadd.f32 %v1579, 1.0
    %v1595 = vadd.f32 %v1581, 1.0
    %v1596 = vadd.f32 %v1583, 1.0
    %v1597 = vadd.f32 %v1585, 1.0
    %v1598 = vadd.f32 %v1587, 1.0
    %v1599 = vadd.f32 %v1589, 1.0
    %v1600 = vadd.f32 %v1591, 1.0
    %v1601 = vadd.f32 %v1593, 1.0
    %v1602 = vrcp.pop %v1594
    %v1603 = vmul.f32 1.0, %v1602
    %v1604 = vrcp.pop %v1595
    %v1605 = vmul.f32 1.0, %v1604
    %v1606 = vrcp.pop %v1596
    %v1607 = vmul.f32 1.0, %v1606
    %v1608 = vrcp.pop %v1597
    %v1609 = vmul.f32 1.0, %v1608
    %v1610 = vrcp.pop %v1598
    %v1611 = vmul.f32 1.0, %v1610
    %v1612 = vrcp.pop %v1599
    %v1613 = vmul.f32 1.0, %v1612
    %v1614 = vrcp.pop %v1600
    %v1615 = vmul.f32 1.0, %v1614
    %v1616 = vrcp.pop %v1601
    %v1617 = vmul.f32 1.0, %v1616
    %v1618 = vtanh.pop %v1562
    %v1619 = vtanh.pop %v1563
    %v1620 = vtanh.pop %v1564
    %v1621 = vtanh.pop %v1565
    %v1622 = vtanh.pop %v1566
    %v1623 = vtanh.pop %v1567
    %v1624 = vtanh.pop %v1568
    %v1625 = vtanh.pop %v1569
    %v1634 = vrot.slane %v1324, 7
    %v1635 = vrot.slane %v1325, 7
    %v1636 = vrot.slane %v1326, 7
    %v1637 = vrot.slane %v1327, 7
    %v1638 = vrot.slane %v1328, 7
    %v1639 = vrot.slane %v1329, 7
    %v1640 = vrot.slane %v1330, 7
    %v1641 = vrot.slane %v1331, 7
    %v1650 = vmul.f32 %v1603, %v1634
    %v1651 = vmul.f32 %v1605, %v1635
    %v1652 = vmul.f32 %v1607, %v1636
    %v1653 = vmul.f32 %v1609, %v1637
    %v1654 = vmul.f32 %v1611, %v1638
    %v1655 = vmul.f32 %v1613, %v1639
    %v1656 = vmul.f32 %v1615, %v1640
    %v1657 = vmul.f32 %v1617, %v1641
    %1666 = vrot.lane.b32.xlu0 %v1618, 32
    %v1667 = vpop.permute.xlu0 %1666
    %1668 = vrot.lane.b32.xlu0 %v1619, 32
    %v1669 = vpop.permute.xlu0 %1668
    %1670 = vrot.lane.b32.xlu0 %v1620, 32
    %v1671 = vpop.permute.xlu0 %1670
    %1672 = vrot.lane.b32.xlu0 %v1621, 32
    %v1673 = vpop.permute.xlu0 %1672
    %1674 = vrot.lane.b32.xlu0 %v1622, 32
    %v1675 = vpop.permute.xlu0 %1674
    %1676 = vrot.lane.b32.xlu0 %v1623, 32
    %v1677 = vpop.permute.xlu0 %1676
    %1678 = vrot.lane.b32.xlu0 %v1624, 32
    %v1679 = vpop.permute.xlu0 %1678
    %1680 = vrot.lane.b32.xlu0 %v1625, 32
    %v1681 = vpop.permute.xlu0 %1680
    %v1690 = vmul.f32 %v1603, %v1667
    %v1691 = vmul.f32 %v1605, %v1669
    %v1692 = vmul.f32 %v1607, %v1671
    %v1693 = vmul.f32 %v1609, %v1673
    %v1694 = vmul.f32 %v1611, %v1675
    %v1695 = vmul.f32 %v1613, %v1677
    %v1696 = vmul.f32 %v1615, %v1679
    %v1697 = vmul.f32 %v1617, %v1681
    %1706 = vrot.lane.b32.xlu0 %v1690, 32
    %v1707 = vpop.permute.xlu0 %1706
    %1708 = vrot.lane.b32.xlu0 %v1691, 32
    %v1709 = vpop.permute.xlu0 %1708
    %1710 = vrot.lane.b32.xlu0 %v1692, 32
    %v1711 = vpop.permute.xlu0 %1710
    %1712 = vrot.lane.b32.xlu0 %v1693, 32
    %v1713 = vpop.permute.xlu0 %1712
    %1714 = vrot.lane.b32.xlu0 %v1694, 32
    %v1715 = vpop.permute.xlu0 %1714
    %1716 = vrot.lane.b32.xlu0 %v1695, 32
    %v1717 = vpop.permute.xlu0 %1716
    %1718 = vrot.lane.b32.xlu0 %v1696, 32
    %v1719 = vpop.permute.xlu0 %1718
    %1720 = vrot.lane.b32.xlu0 %v1697, 32
    %v1721 = vpop.permute.xlu0 %1720
    %v1730 = vadd.f32 %v1650, %v1707
    %v1731 = vadd.f32 %v1651, %v1709
    %v1732 = vadd.f32 %v1652, %v1711
    %v1733 = vadd.f32 %v1653, %v1713
    %v1734 = vadd.f32 %v1654, %v1715
    %v1735 = vadd.f32 %v1655, %v1717
    %v1736 = vadd.f32 %v1656, %v1719
    %v1737 = vadd.f32 %v1657, %v1721
    %v1738 = vtanh.pop %v1730
    %v1739 = vtanh.pop %v1731
    %v1740 = vtanh.pop %v1732
    %v1741 = vtanh.pop %v1733
    %v1742 = vtanh.pop %v1734
    %v1743 = vtanh.pop %v1735
    %v1744 = vtanh.pop %v1736
    %v1745 = vtanh.pop %v1737
    %1754 = vrot.lane.b32.xlu0 %v1738, 32
    %v1755 = vpop.permute.xlu0 %1754
    %1756 = vrot.lane.b32.xlu0 %v1739, 32
    %v1757 = vpop.permute.xlu0 %1756
    %1758 = vrot.lane.b32.xlu0 %v1740, 32
    %v1759 = vpop.permute.xlu0 %1758
    %1760 = vrot.lane.b32.xlu0 %v1741, 32
    %v1761 = vpop.permute.xlu0 %1760
    %1762 = vrot.lane.b32.xlu0 %v1742, 32
    %v1763 = vpop.permute.xlu0 %1762
    %1764 = vrot.lane.b32.xlu0 %v1743, 32
    %v1765 = vpop.permute.xlu0 %1764
    %1766 = vrot.lane.b32.xlu0 %v1744, 32
    %v1767 = vpop.permute.xlu0 %1766
    %1768 = vrot.lane.b32.xlu0 %v1745, 32
    %v1769 = vpop.permute.xlu0 %1768
    %v1778 = vmul.f32 %v1603, %v1755
    %v1779 = vmul.f32 %v1605, %v1757
    %v1780 = vmul.f32 %v1607, %v1759
    %v1781 = vmul.f32 %v1609, %v1761
    %v1782 = vmul.f32 %v1611, %v1763
    %v1783 = vmul.f32 %v1613, %v1765
    %v1784 = vmul.f32 %v1615, %v1767
    %v1785 = vmul.f32 %v1617, %v1769
    %v1794 = vrot.slane %v1778, 3
    %v1795 = vrot.slane %v1779, 2
    %v1796 = vsel %vm570, %v1795, %v1794
    %v1797 = vrot.slane %v1780, 1
    %v1798 = vsel %vm573, %v1797, %v1796
    %v1799 = vsel %vm576, %v1781, %v1798
    %v1800 = vrot.slane %v1782, 7
    %v1801 = vsel %vm579, %v1800, %v1799
    %v1802 = vrot.slane %v1783, 6
    %v1803 = vsel %vm582, %v1802, %v1801
    %v1804 = vrot.slane %v1784, 5
    %v1805 = vsel %vm585, %v1804, %v1803
    %v1806 = vrot.slane %v1785, 4
    %v1807 = vsel %vm588, %v1806, %v1805
    %1808 = vrot.lane.b32.xlu0 %v1807, 64
    %v1809 = vpop.permute.xlu0 %1808
    %v1810 = vsel %vm265, %v1809, 0
    %1812 = vmatprep.subr.mxu0 0.0
    %1813 = vmatpush1.msra.mxu0 0.0
    %1814 = vmatprep.subr.mxu0 0.0
    %1815 = vmatpush1.msra.mxu0 0.0
    %1816 = vmatprep.subr.mxu0 0.0
    %1817 = vmatpush1.msra.mxu0 0.0
    %1818 = vmatprep.subr.mxu0 0.0
    %1819 = vmatpush1.msra.mxu0 0.0
    %1820 = vmatprep.subr.mxu0 0.0
    %1821 = vmatpush1.msra.mxu0 0.0
    %1822 = vmatprep.subr.mxu0 0.0
    %1823 = vmatpush1.msra.mxu0 0.0
    %1824 = vmatprep.subr.mxu0 0.0
    %1825 = vmatpush1.msra.mxu0 0.0
    %1826 = vmatprep.subr.mxu0 0.0
    %1827 = vmatpush1.msra.mxu0 0.0
    %1828 = vmatprep.subr.mxu0 0.0
    %1829 = vmatpush1.msra.mxu0 0.0
    %1830 = vmatprep.subr.mxu0 0.0
    %1831 = vmatpush1.msra.mxu0 0.0
    %1832 = vmatprep.subr.mxu0 0.0
    %1833 = vmatpush1.msra.mxu0 0.0
    %1834 = vmatprep.subr.mxu0 0.0
    %1835 = vmatpush1.msra.mxu0 0.0
    %1836 = vmatprep.subr.mxu0 0.0
    %1837 = vmatpush1.msra.mxu0 %v263
    %1838 = vmatprep.subr.mxu0 0.0
    %1839 = vmatpush1.msra.mxu0 %v262
    %1840 = vmatprep.subr.mxu0 0.0
    %1841 = vmatpush1.msra.mxu0 %v261
    %1842 = vmatprep.subr.mxu0 0.0
    %1843 = vmatpush1.msra.mxu0 %v260
    %1844 = vmatprep.subr.mxu0 0.0
    %1845 = vmatpush2.msra.mxu0 0.0
    %1846 = vmatprep.subr.mxu0 0.0
    %1847 = vmatpush2.msra.mxu0 0.0
    %1848 = vmatprep.subr.mxu0 0.0
    %1849 = vmatpush2.msra.mxu0 0.0
    %1850 = vmatprep.subr.mxu0 0.0
    %1851 = vmatpush2.msra.mxu0 0.0
    %1852 = vmatprep.subr.mxu0 0.0
    %1853 = vmatpush2.msra.mxu0 0.0
    %1854 = vmatprep.subr.mxu0 0.0
    %1855 = vmatpush2.msra.mxu0 0.0
    %1856 = vmatprep.subr.mxu0 0.0
    %1857 = vmatpush2.msra.mxu0 0.0
    %1858 = vmatprep.subr.mxu0 0.0
    %1859 = vmatpush2.msra.mxu0 0.0
    %1860 = vmatprep.subr.mxu0 0.0
    %1861 = vmatpush2.msra.mxu0 0.0
    %1862 = vmatprep.subr.mxu0 0.0
    %1863 = vmatpush2.msra.mxu0 0.0
    %1864 = vmatprep.subr.mxu0 0.0
    %1865 = vmatpush2.msra.mxu0 0.0
    %1866 = vmatprep.subr.mxu0 0.0
    %1867 = vmatpush2.msra.mxu0 0.0
    %1868 = vmatprep.subr.mxu0 0.0
    %1869 = vmatpush2.msra.mxu0 0.0
    %1870 = vmatprep.subr.mxu0 0.0
    %1871 = vmatpush2.msra.mxu0 0.0
    %1872 = vmatprep.subr.mxu0 0.0
    %1873 = vmatpush2.msra.mxu0 0.0
    %1874 = vmatprep.subr.mxu0 0.0
    %1875 = vmatpush2.msra.mxu0 0.0
    %1876 = vmatprep.mubr.f32.mxu0 0.0
    %1877 = vmatmul.mubr.f32.gmra.mxu0 %v1810
    %v1878 = vpop.f32.mrf.mxu0
    %v1879 = vadd.f32 %v559, %v1878
    %v1880 = vpop.f32.mrf.mxu0
    %1881 = vdwg.mxu0
    %1882 = vmatprep.subr.mxu0 0.0
    %1883 = vmatpush1.msra.mxu0 0.0
    %1884 = vmatprep.subr.mxu0 0.0
    %1885 = vmatpush1.msra.mxu0 0.0
    %1886 = vmatprep.subr.mxu0 0.0
    %1887 = vmatpush1.msra.mxu0 0.0
    %1888 = vmatprep.subr.mxu0 0.0
    %1889 = vmatpush1.msra.mxu0 0.0
    %1890 = vmatprep.subr.mxu0 0.0
    %1891 = vmatpush1.msra.mxu0 0.0
    %1892 = vmatprep.subr.mxu0 0.0
    %1893 = vmatpush1.msra.mxu0 0.0
    %1894 = vmatprep.subr.mxu0 0.0
    %1895 = vmatpush1.msra.mxu0 0.0
    %1896 = vmatprep.subr.mxu0 0.0
    %1897 = vmatpush1.msra.mxu0 0.0
    %1898 = vmatprep.subr.mxu0 0.0
    %1899 = vmatpush1.msra.mxu0 0.0
    %1900 = vmatprep.subr.mxu0 0.0
    %1901 = vmatpush1.msra.mxu0 0.0
    %1902 = vmatprep.subr.mxu0 0.0
    %1903 = vmatpush1.msra.mxu0 0.0
    %1904 = vmatprep.subr.mxu0 0.0
    %1905 = vmatpush1.msra.mxu0 0.0
    %1906 = vmatprep.subr.mxu0 0.0
    %1907 = vmatpush1.msra.mxu0 %v259
    %1908 = vmatprep.subr.mxu0 0.0
    %1909 = vmatpush1.msra.mxu0 %v258
    %1910 = vmatprep.subr.mxu0 0.0
    %1911 = vmatpush1.msra.mxu0 %v257
    %1912 = vmatprep.subr.mxu0 0.0
    %1913 = vmatpush1.msra.mxu0 %v256
    %1914 = vmatprep.subr.mxu0 0.0
    %1915 = vmatpush2.msra.mxu0 0.0
    %1916 = vmatprep.subr.mxu0 0.0
    %1917 = vmatpush2.msra.mxu0 0.0
    %1918 = vmatprep.subr.mxu0 0.0
    %1919 = vmatpush2.msra.mxu0 0.0
    %1920 = vmatprep.subr.mxu0 0.0
    %1921 = vmatpush2.msra.mxu0 0.0
    %1922 = vmatprep.subr.mxu0 0.0
    %1923 = vmatpush2.msra.mxu0 0.0
    %1924 = vmatprep.subr.mxu0 0.0
    %1925 = vmatpush2.msra.mxu0 0.0
    %1926 = vmatprep.subr.mxu0 0.0
    %1927 = vmatpush2.msra.mxu0 0.0
    %1928 = vmatprep.subr.mxu0 0.0
    %1929 = vmatpush2.msra.mxu0 0.0
    %1930 = vmatprep.subr.mxu0 0.0
    %1931 = vmatpush2.msra.mxu0 0.0
    %1932 = vmatprep.subr.mxu0 0.0
    %1933 = vmatpush2.msra.mxu0 0.0
    %1934 = vmatprep.subr.mxu0 0.0
    %1935 = vmatpush2.msra.mxu0 0.0
    %1936 = vmatprep.subr.mxu0 0.0
    %1937 = vmatpush2.msra.mxu0 0.0
    %1938 = vmatprep.subr.mxu0 0.0
    %1939 = vmatpush2.msra.mxu0 0.0
    %1940 = vmatprep.subr.mxu0 0.0
    %1941 = vmatpush2.msra.mxu0 0.0
    %1942 = vmatprep.subr.mxu0 0.0
    %1943 = vmatpush2.msra.mxu0 0.0
    %1944 = vmatprep.subr.mxu0 0.0
    %1945 = vmatpush2.msra.mxu0 0.0
    %1946 = vmatprep.mubr.f32.mxu0 0.0
    %1947 = vmatmul.mubr.f32.gmra.mxu0 %v1810
    %v1948 = vpop.f32.mrf.mxu0
    %v1949 = vadd.f32 0.0, %v1948
    %v1950 = vpop.f32.mrf.mxu0
    %1951 = vdwg.mxu0
    %v1953 = vrot.slane %v1949, 4
    %v1954 = vrot.slane %v1949, 5
    %v1955 = vrot.slane %v1949, 6
    %v1956 = vrot.slane %v1949, 7
    %v1957 = vrot.slane %v1949, 1
    %v1958 = vrot.slane %v1949, 2
    %v1959 = vrot.slane %v1949, 3
    %v1968 = vadd.f32 %v218, %v1953
    %v1969 = vadd.f32 %v223, %v1954
    %v1970 = vadd.f32 %v228, %v1955
    %v1971 = vadd.f32 %v233, %v1956
    %v1972 = vadd.f32 %v238, %v1949
    %v1973 = vadd.f32 %v243, %v1957
    %v1974 = vadd.f32 %v248, %v1958
    %v1975 = vadd.f32 %v253, %v1959
    %v1976 = vxor.u32 %v1968, 2147483648
    %v1977 = vxor.u32 %v1969, 2147483648
    %v1978 = vxor.u32 %v1970, 2147483648
    %v1979 = vxor.u32 %v1971, 2147483648
    %v1980 = vxor.u32 %v1972, 2147483648
    %v1981 = vxor.u32 %v1973, 2147483648
    %v1982 = vxor.u32 %v1974, 2147483648
    %v1983 = vxor.u32 %v1975, 2147483648
    %v1984 = vmul.f32 %v1976, 1.442695
    %v1985 = vpow.pop %v1984
    %v1986 = vmul.f32 %v1977, 1.442695
    %v1987 = vpow.pop %v1986
    %v1988 = vmul.f32 %v1978, 1.442695
    %v1989 = vpow.pop %v1988
    %v1990 = vmul.f32 %v1979, 1.442695
    %v1991 = vpow.pop %v1990
    %v1992 = vmul.f32 %v1980, 1.442695
    %v1993 = vpow.pop %v1992
    %v1994 = vmul.f32 %v1981, 1.442695
    %v1995 = vpow.pop %v1994
    %v1996 = vmul.f32 %v1982, 1.442695
    %v1997 = vpow.pop %v1996
    %v1998 = vmul.f32 %v1983, 1.442695
    %v1999 = vpow.pop %v1998
    %v2000 = vadd.f32 %v1985, 1.0
    %v2001 = vadd.f32 %v1987, 1.0
    %v2002 = vadd.f32 %v1989, 1.0
    %v2003 = vadd.f32 %v1991, 1.0
    %v2004 = vadd.f32 %v1993, 1.0
    %v2005 = vadd.f32 %v1995, 1.0
    %v2006 = vadd.f32 %v1997, 1.0
    %v2007 = vadd.f32 %v1999, 1.0
    %v2008 = vrcp.pop %v2000
    %v2009 = vmul.f32 1.0, %v2008
    %v2010 = vrcp.pop %v2001
    %v2011 = vmul.f32 1.0, %v2010
    %v2012 = vrcp.pop %v2002
    %v2013 = vmul.f32 1.0, %v2012
    %v2014 = vrcp.pop %v2003
    %v2015 = vmul.f32 1.0, %v2014
    %v2016 = vrcp.pop %v2004
    %v2017 = vmul.f32 1.0, %v2016
    %v2018 = vrcp.pop %v2005
    %v2019 = vmul.f32 1.0, %v2018
    %v2020 = vrcp.pop %v2006
    %v2021 = vmul.f32 1.0, %v2020
    %v2022 = vrcp.pop %v2007
    %v2023 = vmul.f32 1.0, %v2022
    %v2024 = vtanh.pop %v1968
    %v2025 = vtanh.pop %v1969
    %v2026 = vtanh.pop %v1970
    %v2027 = vtanh.pop %v1971
    %v2028 = vtanh.pop %v1972
    %v2029 = vtanh.pop %v1973
    %v2030 = vtanh.pop %v1974
    %v2031 = vtanh.pop %v1975
    %v2040 = vrot.slane %v1730, 7
    %v2041 = vrot.slane %v1731, 7
    %v2042 = vrot.slane %v1732, 7
    %v2043 = vrot.slane %v1733, 7
    %v2044 = vrot.slane %v1734, 7
    %v2045 = vrot.slane %v1735, 7
    %v2046 = vrot.slane %v1736, 7
    %v2047 = vrot.slane %v1737, 7
    %v2056 = vmul.f32 %v2009, %v2040
    %v2057 = vmul.f32 %v2011, %v2041
    %v2058 = vmul.f32 %v2013, %v2042
    %v2059 = vmul.f32 %v2015, %v2043
    %v2060 = vmul.f32 %v2017, %v2044
    %v2061 = vmul.f32 %v2019, %v2045
    %v2062 = vmul.f32 %v2021, %v2046
    %v2063 = vmul.f32 %v2023, %v2047
    %2072 = vrot.lane.b32.xlu0 %v2024, 32
    %v2073 = vpop.permute.xlu0 %2072
    %2074 = vrot.lane.b32.xlu0 %v2025, 32
    %v2075 = vpop.permute.xlu0 %2074
    %2076 = vrot.lane.b32.xlu0 %v2026, 32
    %v2077 = vpop.permute.xlu0 %2076
    %2078 = vrot.lane.b32.xlu0 %v2027, 32
    %v2079 = vpop.permute.xlu0 %2078
    %2080 = vrot.lane.b32.xlu0 %v2028, 32
    %v2081 = vpop.permute.xlu0 %2080
    %2082 = vrot.lane.b32.xlu0 %v2029, 32
    %v2083 = vpop.permute.xlu0 %2082
    %2084 = vrot.lane.b32.xlu0 %v2030, 32
    %v2085 = vpop.permute.xlu0 %2084
    %2086 = vrot.lane.b32.xlu0 %v2031, 32
    %v2087 = vpop.permute.xlu0 %2086
    %v2096 = vmul.f32 %v2009, %v2073
    %v2097 = vmul.f32 %v2011, %v2075
    %v2098 = vmul.f32 %v2013, %v2077
    %v2099 = vmul.f32 %v2015, %v2079
    %v2100 = vmul.f32 %v2017, %v2081
    %v2101 = vmul.f32 %v2019, %v2083
    %v2102 = vmul.f32 %v2021, %v2085
    %v2103 = vmul.f32 %v2023, %v2087
    %2112 = vrot.lane.b32.xlu0 %v2096, 32
    %v2113 = vpop.permute.xlu0 %2112
    %2114 = vrot.lane.b32.xlu0 %v2097, 32
    %v2115 = vpop.permute.xlu0 %2114
    %2116 = vrot.lane.b32.xlu0 %v2098, 32
    %v2117 = vpop.permute.xlu0 %2116
    %2118 = vrot.lane.b32.xlu0 %v2099, 32
    %v2119 = vpop.permute.xlu0 %2118
    %2120 = vrot.lane.b32.xlu0 %v2100, 32
    %v2121 = vpop.permute.xlu0 %2120
    %2122 = vrot.lane.b32.xlu0 %v2101, 32
    %v2123 = vpop.permute.xlu0 %2122
    %2124 = vrot.lane.b32.xlu0 %v2102, 32
    %v2125 = vpop.permute.xlu0 %2124
    %2126 = vrot.lane.b32.xlu0 %v2103, 32
    %v2127 = vpop.permute.xlu0 %2126
    %v2136 = vadd.f32 %v2056, %v2113
    %v2137 = vadd.f32 %v2057, %v2115
    %v2138 = vadd.f32 %v2058, %v2117
    %v2139 = vadd.f32 %v2059, %v2119
    %v2140 = vadd.f32 %v2060, %v2121
    %v2141 = vadd.f32 %v2061, %v2123
    %v2142 = vadd.f32 %v2062, %v2125
    %v2143 = vadd.f32 %v2063, %v2127
    %v2144 = vtanh.pop %v2136
    %v2145 = vtanh.pop %v2137
    %v2146 = vtanh.pop %v2138
    %v2147 = vtanh.pop %v2139
    %v2148 = vtanh.pop %v2140
    %v2149 = vtanh.pop %v2141
    %v2150 = vtanh.pop %v2142
    %v2151 = vtanh.pop %v2143
    %2160 = vrot.lane.b32.xlu0 %v2144, 32
    %v2161 = vpop.permute.xlu0 %2160
    %2162 = vrot.lane.b32.xlu0 %v2145, 32
    %v2163 = vpop.permute.xlu0 %2162
    %2164 = vrot.lane.b32.xlu0 %v2146, 32
    %v2165 = vpop.permute.xlu0 %2164
    %2166 = vrot.lane.b32.xlu0 %v2147, 32
    %v2167 = vpop.permute.xlu0 %2166
    %2168 = vrot.lane.b32.xlu0 %v2148, 32
    %v2169 = vpop.permute.xlu0 %2168
    %2170 = vrot.lane.b32.xlu0 %v2149, 32
    %v2171 = vpop.permute.xlu0 %2170
    %2172 = vrot.lane.b32.xlu0 %v2150, 32
    %v2173 = vpop.permute.xlu0 %2172
    %2174 = vrot.lane.b32.xlu0 %v2151, 32
    %v2175 = vpop.permute.xlu0 %2174
    %v2184 = vmul.f32 %v2009, %v2161
    %v2185 = vmul.f32 %v2011, %v2163
    %v2186 = vmul.f32 %v2013, %v2165
    %v2187 = vmul.f32 %v2015, %v2167
    %v2188 = vmul.f32 %v2017, %v2169
    %v2189 = vmul.f32 %v2019, %v2171
    %v2190 = vmul.f32 %v2021, %v2173
    %v2191 = vmul.f32 %v2023, %v2175
    %v2200 = vrot.slane %v2184, 4
    %v2201 = vrot.slane %v2185, 3
    %v2202 = vsel %vm570, %v2201, %v2200
    %v2203 = vrot.slane %v2186, 2
    %v2204 = vsel %vm573, %v2203, %v2202
    %v2205 = vrot.slane %v2187, 1
    %v2206 = vsel %vm576, %v2205, %v2204
    %v2207 = vsel %vm579, %v2188, %v2206
    %v2208 = vrot.slane %v2189, 7
    %v2209 = vsel %vm582, %v2208, %v2207
    %v2210 = vrot.slane %v2190, 6
    %v2211 = vsel %vm585, %v2210, %v2209
    %v2212 = vrot.slane %v2191, 5
    %v2213 = vsel %vm588, %v2212, %v2211
    %2214 = vrot.lane.b32.xlu0 %v2213, 64
    %v2215 = vpop.permute.xlu0 %2214
    %v2216 = vsel %vm265, %v2215, 0
    %2218 = vmatprep.subr.mxu0 0.0
    %2219 = vmatpush1.msra.mxu0 0.0
    %2220 = vmatprep.subr.mxu0 0.0
    %2221 = vmatpush1.msra.mxu0 0.0
    %2222 = vmatprep.subr.mxu0 0.0
    %2223 = vmatpush1.msra.mxu0 0.0
    %2224 = vmatprep.subr.mxu0 0.0
    %2225 = vmatpush1.msra.mxu0 0.0
    %2226 = vmatprep.subr.mxu0 0.0
    %2227 = vmatpush1.msra.mxu0 0.0
    %2228 = vmatprep.subr.mxu0 0.0
    %2229 = vmatpush1.msra.mxu0 0.0
    %2230 = vmatprep.subr.mxu0 0.0
    %2231 = vmatpush1.msra.mxu0 0.0
    %2232 = vmatprep.subr.mxu0 0.0
    %2233 = vmatpush1.msra.mxu0 0.0
    %2234 = vmatprep.subr.mxu0 0.0
    %2235 = vmatpush1.msra.mxu0 0.0
    %2236 = vmatprep.subr.mxu0 0.0
    %2237 = vmatpush1.msra.mxu0 0.0
    %2238 = vmatprep.subr.mxu0 0.0
    %2239 = vmatpush1.msra.mxu0 0.0
    %2240 = vmatprep.subr.mxu0 0.0
    %2241 = vmatpush1.msra.mxu0 0.0
    %2242 = vmatprep.subr.mxu0 0.0
    %2243 = vmatpush1.msra.mxu0 %v263
    %2244 = vmatprep.subr.mxu0 0.0
    %2245 = vmatpush1.msra.mxu0 %v262
    %2246 = vmatprep.subr.mxu0 0.0
    %2247 = vmatpush1.msra.mxu0 %v261
    %2248 = vmatprep.subr.mxu0 0.0
    %2249 = vmatpush1.msra.mxu0 %v260
    %2250 = vmatprep.subr.mxu0 0.0
    %2251 = vmatpush2.msra.mxu0 0.0
    %2252 = vmatprep.subr.mxu0 0.0
    %2253 = vmatpush2.msra.mxu0 0.0
    %2254 = vmatprep.subr.mxu0 0.0
    %2255 = vmatpush2.msra.mxu0 0.0
    %2256 = vmatprep.subr.mxu0 0.0
    %2257 = vmatpush2.msra.mxu0 0.0
    %2258 = vmatprep.subr.mxu0 0.0
    %2259 = vmatpush2.msra.mxu0 0.0
    %2260 = vmatprep.subr.mxu0 0.0
    %2261 = vmatpush2.msra.mxu0 0.0
    %2262 = vmatprep.subr.mxu0 0.0
    %2263 = vmatpush2.msra.mxu0 0.0
    %2264 = vmatprep.subr.mxu0 0.0
    %2265 = vmatpush2.msra.mxu0 0.0
    %2266 = vmatprep.subr.mxu0 0.0
    %2267 = vmatpush2.msra.mxu0 0.0
    %2268 = vmatprep.subr.mxu0 0.0
    %2269 = vmatpush2.msra.mxu0 0.0
    %2270 = vmatprep.subr.mxu0 0.0
    %2271 = vmatpush2.msra.mxu0 0.0
    %2272 = vmatprep.subr.mxu0 0.0
    %2273 = vmatpush2.msra.mxu0 0.0
    %2274 = vmatprep.subr.mxu0 0.0
    %2275 = vmatpush2.msra.mxu0 0.0
    %2276 = vmatprep.subr.mxu0 0.0
    %2277 = vmatpush2.msra.mxu0 0.0
    %2278 = vmatprep.subr.mxu0 0.0
    %2279 = vmatpush2.msra.mxu0 0.0
    %2280 = vmatprep.subr.mxu0 0.0
    %2281 = vmatpush2.msra.mxu0 0.0
    %2282 = vmatprep.mubr.f32.mxu0 0.0
    %2283 = vmatmul.mubr.f32.gmra.mxu0 %v2216
    %v2284 = vpop.f32.mrf.mxu0
    %v2285 = vadd.f32 %v559, %v2284
    %v2286 = vpop.f32.mrf.mxu0
    %2287 = vdwg.mxu0
    %2288 = vmatprep.subr.mxu0 0.0
    %2289 = vmatpush1.msra.mxu0 0.0
    %2290 = vmatprep.subr.mxu0 0.0
    %2291 = vmatpush1.msra.mxu0 0.0
    %2292 = vmatprep.subr.mxu0 0.0
    %2293 = vmatpush1.msra.mxu0 0.0
    %2294 = vmatprep.subr.mxu0 0.0
    %2295 = vmatpush1.msra.mxu0 0.0
    %2296 = vmatprep.subr.mxu0 0.0
    %2297 = vmatpush1.msra.mxu0 0.0
    %2298 = vmatprep.subr.mxu0 0.0
    %2299 = vmatpush1.msra.mxu0 0.0
    %2300 = vmatprep.subr.mxu0 0.0
    %2301 = vmatpush1.msra.mxu0 0.0
    %2302 = vmatprep.subr.mxu0 0.0
    %2303 = vmatpush1.msra.mxu0 0.0
    %2304 = vmatprep.subr.mxu0 0.0
    %2305 = vmatpush1.msra.mxu0 0.0
    %2306 = vmatprep.subr.mxu0 0.0
    %2307 = vmatpush1.msra.mxu0 0.0
    %2308 = vmatprep.subr.mxu0 0.0
    %2309 = vmatpush1.msra.mxu0 0.0
    %2310 = vmatprep.subr.mxu0 0.0
    %2311 = vmatpush1.msra.mxu0 0.0
    %2312 = vmatprep.subr.mxu0 0.0
    %2313 = vmatpush1.msra.mxu0 %v259
    %2314 = vmatprep.subr.mxu0 0.0
    %2315 = vmatpush1.msra.mxu0 %v258
    %2316 = vmatprep.subr.mxu0 0.0
    %2317 = vmatpush1.msra.mxu0 %v257
    %2318 = vmatprep.subr.mxu0 0.0
    %2319 = vmatpush1.msra.mxu0 %v256
    %2320 = vmatprep.subr.mxu0 0.0
    %2321 = vmatpush2.msra.mxu0 0.0
    %2322 = vmatprep.subr.mxu0 0.0
    %2323 = vmatpush2.msra.mxu0 0.0
    %2324 = vmatprep.subr.mxu0 0.0
    %2325 = vmatpush2.msra.mxu0 0.0
    %2326 = vmatprep.subr.mxu0 0.0
    %2327 = vmatpush2.msra.mxu0 0.0
    %2328 = vmatprep.subr.mxu0 0.0
    %2329 = vmatpush2.msra.mxu0 0.0
    %2330 = vmatprep.subr.mxu0 0.0
    %2331 = vmatpush2.msra.mxu0 0.0
    %2332 = vmatprep.subr.mxu0 0.0
    %2333 = vmatpush2.msra.mxu0 0.0
    %2334 = vmatprep.subr.mxu0 0.0
    %2335 = vmatpush2.msra.mxu0 0.0
    %2336 = vmatprep.subr.mxu0 0.0
    %2337 = vmatpush2.msra.mxu0 0.0
    %2338 = vmatprep.subr.mxu0 0.0
    %2339 = vmatpush2.msra.mxu0 0.0
    %2340 = vmatprep.subr.mxu0 0.0
    %2341 = vmatpush2.msra.mxu0 0.0
    %2342 = vmatprep.subr.mxu0 0.0
    %2343 = vmatpush2.msra.mxu0 0.0
    %2344 = vmatprep.subr.mxu0 0.0
    %2345 = vmatpush2.msra.mxu0 0.0
    %2346 = vmatprep.subr.mxu0 0.0
    %2347 = vmatpush2.msra.mxu0 0.0
    %2348 = vmatprep.subr.mxu0 0.0
    %2349 = vmatpush2.msra.mxu0 0.0
    %2350 = vmatprep.subr.mxu0 0.0
    %2351 = vmatpush2.msra.mxu0 0.0
    %2352 = vmatprep.mubr.f32.mxu0 0.0
    %2353 = vmatmul.mubr.f32.gmra.mxu0 %v2216
    %v2354 = vpop.f32.mrf.mxu0
    %v2355 = vadd.f32 0.0, %v2354
    %v2356 = vpop.f32.mrf.mxu0
    %2357 = vdwg.mxu0
    %v2359 = vrot.slane %v2355, 3
    %v2360 = vrot.slane %v2355, 4
    %v2361 = vrot.slane %v2355, 5
    %v2362 = vrot.slane %v2355, 6
    %v2363 = vrot.slane %v2355, 7
    %v2364 = vrot.slane %v2355, 1
    %v2365 = vrot.slane %v2355, 2
    %v2374 = vadd.f32 %v218, %v2359
    %v2375 = vadd.f32 %v223, %v2360
    %v2376 = vadd.f32 %v228, %v2361
    %v2377 = vadd.f32 %v233, %v2362
    %v2378 = vadd.f32 %v238, %v2363
    %v2379 = vadd.f32 %v243, %v2355
    %v2380 = vadd.f32 %v248, %v2364
    %v2381 = vadd.f32 %v253, %v2365
    %v2382 = vxor.u32 %v2374, 2147483648
    %v2383 = vxor.u32 %v2375, 2147483648
    %v2384 = vxor.u32 %v2376, 2147483648
    %v2385 = vxor.u32 %v2377, 2147483648
    %v2386 = vxor.u32 %v2378, 2147483648
    %v2387 = vxor.u32 %v2379, 2147483648
    %v2388 = vxor.u32 %v2380, 2147483648
    %v2389 = vxor.u32 %v2381, 2147483648
    %v2390 = vmul.f32 %v2382, 1.442695
    %v2391 = vpow.pop %v2390
    %v2392 = vmul.f32 %v2383, 1.442695
    %v2393 = vpow.pop %v2392
    %v2394 = vmul.f32 %v2384, 1.442695
    %v2395 = vpow.pop %v2394
    %v2396 = vmul.f32 %v2385, 1.442695
    %v2397 = vpow.pop %v2396
    %v2398 = vmul.f32 %v2386, 1.442695
    %v2399 = vpow.pop %v2398
    %v2400 = vmul.f32 %v2387, 1.442695
    %v2401 = vpow.pop %v2400
    %v2402 = vmul.f32 %v2388, 1.442695
    %v2403 = vpow.pop %v2402
    %v2404 = vmul.f32 %v2389, 1.442695
    %v2405 = vpow.pop %v2404
    %v2406 = vadd.f32 %v2391, 1.0
    %v2407 = vadd.f32 %v2393, 1.0
    %v2408 = vadd.f32 %v2395, 1.0
    %v2409 = vadd.f32 %v2397, 1.0
    %v2410 = vadd.f32 %v2399, 1.0
    %v2411 = vadd.f32 %v2401, 1.0
    %v2412 = vadd.f32 %v2403, 1.0
    %v2413 = vadd.f32 %v2405, 1.0
    %v2414 = vrcp.pop %v2406
    %v2415 = vmul.f32 1.0, %v2414
    %v2416 = vrcp.pop %v2407
    %v2417 = vmul.f32 1.0, %v2416
    %v2418 = vrcp.pop %v2408
    %v2419 = vmul.f32 1.0, %v2418
    %v2420 = vrcp.pop %v2409
    %v2421 = vmul.f32 1.0, %v2420
    %v2422 = vrcp.pop %v2410
    %v2423 = vmul.f32 1.0, %v2422
    %v2424 = vrcp.pop %v2411
    %v2425 = vmul.f32 1.0, %v2424
    %v2426 = vrcp.pop %v2412
    %v2427 = vmul.f32 1.0, %v2426
    %v2428 = vrcp.pop %v2413
    %v2429 = vmul.f32 1.0, %v2428
    %v2430 = vtanh.pop %v2374
    %v2431 = vtanh.pop %v2375
    %v2432 = vtanh.pop %v2376
    %v2433 = vtanh.pop %v2377
    %v2434 = vtanh.pop %v2378
    %v2435 = vtanh.pop %v2379
    %v2436 = vtanh.pop %v2380
    %v2437 = vtanh.pop %v2381
    %v2446 = vrot.slane %v2136, 7
    %v2447 = vrot.slane %v2137, 7
    %v2448 = vrot.slane %v2138, 7
    %v2449 = vrot.slane %v2139, 7
    %v2450 = vrot.slane %v2140, 7
    %v2451 = vrot.slane %v2141, 7
    %v2452 = vrot.slane %v2142, 7
    %v2453 = vrot.slane %v2143, 7
    %v2462 = vmul.f32 %v2415, %v2446
    %v2463 = vmul.f32 %v2417, %v2447
    %v2464 = vmul.f32 %v2419, %v2448
    %v2465 = vmul.f32 %v2421, %v2449
    %v2466 = vmul.f32 %v2423, %v2450
    %v2467 = vmul.f32 %v2425, %v2451
    %v2468 = vmul.f32 %v2427, %v2452
    %v2469 = vmul.f32 %v2429, %v2453
    %2478 = vrot.lane.b32.xlu0 %v2430, 32
    %v2479 = vpop.permute.xlu0 %2478
    %2480 = vrot.lane.b32.xlu0 %v2431, 32
    %v2481 = vpop.permute.xlu0 %2480
    %2482 = vrot.lane.b32.xlu0 %v2432, 32
    %v2483 = vpop.permute.xlu0 %2482
    %2484 = vrot.lane.b32.xlu0 %v2433, 32
    %v2485 = vpop.permute.xlu0 %2484
    %2486 = vrot.lane.b32.xlu0 %v2434, 32
    %v2487 = vpop.permute.xlu0 %2486
    %2488 = vrot.lane.b32.xlu0 %v2435, 32
    %v2489 = vpop.permute.xlu0 %2488
    %2490 = vrot.lane.b32.xlu0 %v2436, 32
    %v2491 = vpop.permute.xlu0 %2490
    %2492 = vrot.lane.b32.xlu0 %v2437, 32
    %v2493 = vpop.permute.xlu0 %2492
    %v2502 = vmul.f32 %v2415, %v2479
    %v2503 = vmul.f32 %v2417, %v2481
    %v2504 = vmul.f32 %v2419, %v2483
    %v2505 = vmul.f32 %v2421, %v2485
    %v2506 = vmul.f32 %v2423, %v2487
    %v2507 = vmul.f32 %v2425, %v2489
    %v2508 = vmul.f32 %v2427, %v2491
    %v2509 = vmul.f32 %v2429, %v2493
    %2518 = vrot.lane.b32.xlu0 %v2502, 32
    %v2519 = vpop.permute.xlu0 %2518
    %2520 = vrot.lane.b32.xlu0 %v2503, 32
    %v2521 = vpop.permute.xlu0 %2520
    %2522 = vrot.lane.b32.xlu0 %v2504, 32
    %v2523 = vpop.permute.xlu0 %2522
    %2524 = vrot.lane.b32.xlu0 %v2505, 32
    %v2525 = vpop.permute.xlu0 %2524
    %2526 = vrot.lane.b32.xlu0 %v2506, 32
    %v2527 = vpop.permute.xlu0 %2526
    %2528 = vrot.lane.b32.xlu0 %v2507, 32
    %v2529 = vpop.permute.xlu0 %2528
    %2530 = vrot.lane.b32.xlu0 %v2508, 32
    %v2531 = vpop.permute.xlu0 %2530
    %2532 = vrot.lane.b32.xlu0 %v2509, 32
    %v2533 = vpop.permute.xlu0 %2532
    %v2542 = vadd.f32 %v2462, %v2519
    %v2543 = vadd.f32 %v2463, %v2521
    %v2544 = vadd.f32 %v2464, %v2523
    %v2545 = vadd.f32 %v2465, %v2525
    %v2546 = vadd.f32 %v2466, %v2527
    %v2547 = vadd.f32 %v2467, %v2529
    %v2548 = vadd.f32 %v2468, %v2531
    %v2549 = vadd.f32 %v2469, %v2533
    %v2550 = vtanh.pop %v2542
    %v2551 = vtanh.pop %v2543
    %v2552 = vtanh.pop %v2544
    %v2553 = vtanh.pop %v2545
    %v2554 = vtanh.pop %v2546
    %v2555 = vtanh.pop %v2547
    %v2556 = vtanh.pop %v2548
    %v2557 = vtanh.pop %v2549
    %2566 = vrot.lane.b32.xlu0 %v2550, 32
    %v2567 = vpop.permute.xlu0 %2566
    %2568 = vrot.lane.b32.xlu0 %v2551, 32
    %v2569 = vpop.permute.xlu0 %2568
    %2570 = vrot.lane.b32.xlu0 %v2552, 32
    %v2571 = vpop.permute.xlu0 %2570
    %2572 = vrot.lane.b32.xlu0 %v2553, 32
    %v2573 = vpop.permute.xlu0 %2572
    %2574 = vrot.lane.b32.xlu0 %v2554, 32
    %v2575 = vpop.permute.xlu0 %2574
    %2576 = vrot.lane.b32.xlu0 %v2555, 32
    %v2577 = vpop.permute.xlu0 %2576
    %2578 = vrot.lane.b32.xlu0 %v2556, 32
    %v2579 = vpop.permute.xlu0 %2578
    %2580 = vrot.lane.b32.xlu0 %v2557, 32
    %v2581 = vpop.permute.xlu0 %2580
    %v2590 = vmul.f32 %v2415, %v2567
    %v2591 = vmul.f32 %v2417, %v2569
    %v2592 = vmul.f32 %v2419, %v2571
    %v2593 = vmul.f32 %v2421, %v2573
    %v2594 = vmul.f32 %v2423, %v2575
    %v2595 = vmul.f32 %v2425, %v2577
    %v2596 = vmul.f32 %v2427, %v2579
    %v2597 = vmul.f32 %v2429, %v2581
    %v2606 = vrot.slane %v2590, 5
    %v2607 = vrot.slane %v2591, 4
    %v2608 = vsel %vm570, %v2607, %v2606
    %v2609 = vrot.slane %v2592, 3
    %v2610 = vsel %vm573, %v2609, %v2608
    %v2611 = vrot.slane %v2593, 2
    %v2612 = vsel %vm576, %v2611, %v2610
    %v2613 = vrot.slane %v2594, 1
    %v2614 = vsel %vm579, %v2613, %v2612
    %v2615 = vsel %vm582, %v2595, %v2614
    %v2616 = vrot.slane %v2596, 7
    %v2617 = vsel %vm585, %v2616, %v2615
    %v2618 = vrot.slane %v2597, 6
    %v2619 = vsel %vm588, %v2618, %v2617
    %2620 = vrot.lane.b32.xlu0 %v2619, 64
    %v2621 = vpop.permute.xlu0 %2620
    %v2622 = vsel %vm265, %v2621, 0
    %2624 = vmatprep.subr.mxu0 0.0
    %2625 = vmatpush1.msra.mxu0 0.0
    %2626 = vmatprep.subr.mxu0 0.0
    %2627 = vmatpush1.msra.mxu0 0.0
    %2628 = vmatprep.subr.mxu0 0.0
    %2629 = vmatpush1.msra.mxu0 0.0
    %2630 = vmatprep.subr.mxu0 0.0
    %2631 = vmatpush1.msra.mxu0 0.0
    %2632 = vmatprep.subr.mxu0 0.0
    %2633 = vmatpush1.msra.mxu0 0.0
    %2634 = vmatprep.subr.mxu0 0.0
    %2635 = vmatpush1.msra.mxu0 0.0
    %2636 = vmatprep.subr.mxu0 0.0
    %2637 = vmatpush1.msra.mxu0 0.0
    %2638 = vmatprep.subr.mxu0 0.0
    %2639 = vmatpush1.msra.mxu0 0.0
    %2640 = vmatprep.subr.mxu0 0.0
    %2641 = vmatpush1.msra.mxu0 0.0
    %2642 = vmatprep.subr.mxu0 0.0
    %2643 = vmatpush1.msra.mxu0 0.0
    %2644 = vmatprep.subr.mxu0 0.0
    %2645 = vmatpush1.msra.mxu0 0.0
    %2646 = vmatprep.subr.mxu0 0.0
    %2647 = vmatpush1.msra.mxu0 0.0
    %2648 = vmatprep.subr.mxu0 0.0
    %2649 = vmatpush1.msra.mxu0 %v263
    %2650 = vmatprep.subr.mxu0 0.0
    %2651 = vmatpush1.msra.mxu0 %v262
    %2652 = vmatprep.subr.mxu0 0.0
    %2653 = vmatpush1.msra.mxu0 %v261
    %2654 = vmatprep.subr.mxu0 0.0
    %2655 = vmatpush1.msra.mxu0 %v260
    %2656 = vmatprep.subr.mxu0 0.0
    %2657 = vmatpush2.msra.mxu0 0.0
    %2658 = vmatprep.subr.mxu0 0.0
    %2659 = vmatpush2.msra.mxu0 0.0
    %2660 = vmatprep.subr.mxu0 0.0
    %2661 = vmatpush2.msra.mxu0 0.0
    %2662 = vmatprep.subr.mxu0 0.0
    %2663 = vmatpush2.msra.mxu0 0.0
    %2664 = vmatprep.subr.mxu0 0.0
    %2665 = vmatpush2.msra.mxu0 0.0
    %2666 = vmatprep.subr.mxu0 0.0
    %2667 = vmatpush2.msra.mxu0 0.0
    %2668 = vmatprep.subr.mxu0 0.0
    %2669 = vmatpush2.msra.mxu0 0.0
    %2670 = vmatprep.subr.mxu0 0.0
    %2671 = vmatpush2.msra.mxu0 0.0
    %2672 = vmatprep.subr.mxu0 0.0
    %2673 = vmatpush2.msra.mxu0 0.0
    %2674 = vmatprep.subr.mxu0 0.0
    %2675 = vmatpush2.msra.mxu0 0.0
    %2676 = vmatprep.subr.mxu0 0.0
    %2677 = vmatpush2.msra.mxu0 0.0
    %2678 = vmatprep.subr.mxu0 0.0
    %2679 = vmatpush2.msra.mxu0 0.0
    %2680 = vmatprep.subr.mxu0 0.0
    %2681 = vmatpush2.msra.mxu0 0.0
    %2682 = vmatprep.subr.mxu0 0.0
    %2683 = vmatpush2.msra.mxu0 0.0
    %2684 = vmatprep.subr.mxu0 0.0
    %2685 = vmatpush2.msra.mxu0 0.0
    %2686 = vmatprep.subr.mxu0 0.0
    %2687 = vmatpush2.msra.mxu0 0.0
    %2688 = vmatprep.mubr.f32.mxu0 0.0
    %2689 = vmatmul.mubr.f32.gmra.mxu0 %v2622
    %v2690 = vpop.f32.mrf.mxu0
    %v2691 = vadd.f32 %v559, %v2690
    %v2692 = vpop.f32.mrf.mxu0
    %2693 = vdwg.mxu0
    %2694 = vmatprep.subr.mxu0 0.0
    %2695 = vmatpush1.msra.mxu0 0.0
    %2696 = vmatprep.subr.mxu0 0.0
    %2697 = vmatpush1.msra.mxu0 0.0
    %2698 = vmatprep.subr.mxu0 0.0
    %2699 = vmatpush1.msra.mxu0 0.0
    %2700 = vmatprep.subr.mxu0 0.0
    %2701 = vmatpush1.msra.mxu0 0.0
    %2702 = vmatprep.subr.mxu0 0.0
    %2703 = vmatpush1.msra.mxu0 0.0
    %2704 = vmatprep.subr.mxu0 0.0
    %2705 = vmatpush1.msra.mxu0 0.0
    %2706 = vmatprep.subr.mxu0 0.0
    %2707 = vmatpush1.msra.mxu0 0.0
    %2708 = vmatprep.subr.mxu0 0.0
    %2709 = vmatpush1.msra.mxu0 0.0
    %2710 = vmatprep.subr.mxu0 0.0
    %2711 = vmatpush1.msra.mxu0 0.0
    %2712 = vmatprep.subr.mxu0 0.0
    %2713 = vmatpush1.msra.mxu0 0.0
    %2714 = vmatprep.subr.mxu0 0.0
    %2715 = vmatpush1.msra.mxu0 0.0
    %2716 = vmatprep.subr.mxu0 0.0
    %2717 = vmatpush1.msra.mxu0 0.0
    %2718 = vmatprep.subr.mxu0 0.0
    %2719 = vmatpush1.msra.mxu0 %v259
    %2720 = vmatprep.subr.mxu0 0.0
    %2721 = vmatpush1.msra.mxu0 %v258
    %2722 = vmatprep.subr.mxu0 0.0
    %2723 = vmatpush1.msra.mxu0 %v257
    %2724 = vmatprep.subr.mxu0 0.0
    %2725 = vmatpush1.msra.mxu0 %v256
    %2726 = vmatprep.subr.mxu0 0.0
    %2727 = vmatpush2.msra.mxu0 0.0
    %2728 = vmatprep.subr.mxu0 0.0
    %2729 = vmatpush2.msra.mxu0 0.0
    %2730 = vmatprep.subr.mxu0 0.0
    %2731 = vmatpush2.msra.mxu0 0.0
    %2732 = vmatprep.subr.mxu0 0.0
    %2733 = vmatpush2.msra.mxu0 0.0
    %2734 = vmatprep.subr.mxu0 0.0
    %2735 = vmatpush2.msra.mxu0 0.0
    %2736 = vmatprep.subr.mxu0 0.0
    %2737 = vmatpush2.msra.mxu0 0.0
    %2738 = vmatprep.subr.mxu0 0.0
    %2739 = vmatpush2.msra.mxu0 0.0
    %2740 = vmatprep.subr.mxu0 0.0
    %2741 = vmatpush2.msra.mxu0 0.0
    %2742 = vmatprep.subr.mxu0 0.0
    %2743 = vmatpush2.msra.mxu0 0.0
    %2744 = vmatprep.subr.mxu0 0.0
    %2745 = vmatpush2.msra.mxu0 0.0
    %2746 = vmatprep.subr.mxu0 0.0
    %2747 = vmatpush2.msra.mxu0 0.0
    %2748 = vmatprep.subr.mxu0 0.0
    %2749 = vmatpush2.msra.mxu0 0.0
    %2750 = vmatprep.subr.mxu0 0.0
    %2751 = vmatpush2.msra.mxu0 0.0
    %2752 = vmatprep.subr.mxu0 0.0
    %2753 = vmatpush2.msra.mxu0 0.0
    %2754 = vmatprep.subr.mxu0 0.0
    %2755 = vmatpush2.msra.mxu0 0.0
    %2756 = vmatprep.subr.mxu0 0.0
    %2757 = vmatpush2.msra.mxu0 0.0
    %2758 = vmatprep.mubr.f32.mxu0 0.0
    %2759 = vmatmul.mubr.f32.gmra.mxu0 %v2622
    %v2760 = vpop.f32.mrf.mxu0
    %v2761 = vadd.f32 0.0, %v2760
    %v2762 = vpop.f32.mrf.mxu0
    %2763 = vdwg.mxu0
    %v2765 = vrot.slane %v2761, 2
    %v2766 = vrot.slane %v2761, 3
    %v2767 = vrot.slane %v2761, 4
    %v2768 = vrot.slane %v2761, 5
    %v2769 = vrot.slane %v2761, 6
    %v2770 = vrot.slane %v2761, 7
    %v2771 = vrot.slane %v2761, 1
    %v2780 = vadd.f32 %v218, %v2765
    %v2781 = vadd.f32 %v223, %v2766
    %v2782 = vadd.f32 %v228, %v2767
    %v2783 = vadd.f32 %v233, %v2768
    %v2784 = vadd.f32 %v238, %v2769
    %v2785 = vadd.f32 %v243, %v2770
    %v2786 = vadd.f32 %v248, %v2761
    %v2787 = vadd.f32 %v253, %v2771
    %v2788 = vxor.u32 %v2780, 2147483648
    %v2789 = vxor.u32 %v2781, 2147483648
    %v2790 = vxor.u32 %v2782, 2147483648
    %v2791 = vxor.u32 %v2783, 2147483648
    %v2792 = vxor.u32 %v2784, 2147483648
    %v2793 = vxor.u32 %v2785, 2147483648
    %v2794 = vxor.u32 %v2786, 2147483648
    %v2795 = vxor.u32 %v2787, 2147483648
    %v2796 = vmul.f32 %v2788, 1.442695
    %v2797 = vpow.pop %v2796
    %v2798 = vmul.f32 %v2789, 1.442695
    %v2799 = vpow.pop %v2798
    %v2800 = vmul.f32 %v2790, 1.442695
    %v2801 = vpow.pop %v2800
    %v2802 = vmul.f32 %v2791, 1.442695
    %v2803 = vpow.pop %v2802
    %v2804 = vmul.f32 %v2792, 1.442695
    %v2805 = vpow.pop %v2804
    %v2806 = vmul.f32 %v2793, 1.442695
    %v2807 = vpow.pop %v2806
    %v2808 = vmul.f32 %v2794, 1.442695
    %v2809 = vpow.pop %v2808
    %v2810 = vmul.f32 %v2795, 1.442695
    %v2811 = vpow.pop %v2810
    %v2812 = vadd.f32 %v2797, 1.0
    %v2813 = vadd.f32 %v2799, 1.0
    %v2814 = vadd.f32 %v2801, 1.0
    %v2815 = vadd.f32 %v2803, 1.0
    %v2816 = vadd.f32 %v2805, 1.0
    %v2817 = vadd.f32 %v2807, 1.0
    %v2818 = vadd.f32 %v2809, 1.0
    %v2819 = vadd.f32 %v2811, 1.0
    %v2820 = vrcp.pop %v2812
    %v2821 = vmul.f32 1.0, %v2820
    %v2822 = vrcp.pop %v2813
    %v2823 = vmul.f32 1.0, %v2822
    %v2824 = vrcp.pop %v2814
    %v2825 = vmul.f32 1.0, %v2824
    %v2826 = vrcp.pop %v2815
    %v2827 = vmul.f32 1.0, %v2826
    %v2828 = vrcp.pop %v2816
    %v2829 = vmul.f32 1.0, %v2828
    %v2830 = vrcp.pop %v2817
    %v2831 = vmul.f32 1.0, %v2830
    %v2832 = vrcp.pop %v2818
    %v2833 = vmul.f32 1.0, %v2832
    %v2834 = vrcp.pop %v2819
    %v2835 = vmul.f32 1.0, %v2834
    %v2836 = vtanh.pop %v2780
    %v2837 = vtanh.pop %v2781
    %v2838 = vtanh.pop %v2782
    %v2839 = vtanh.pop %v2783
    %v2840 = vtanh.pop %v2784
    %v2841 = vtanh.pop %v2785
    %v2842 = vtanh.pop %v2786
    %v2843 = vtanh.pop %v2787
    %v2852 = vrot.slane %v2542, 7
    %v2853 = vrot.slane %v2543, 7
    %v2854 = vrot.slane %v2544, 7
    %v2855 = vrot.slane %v2545, 7
    %v2856 = vrot.slane %v2546, 7
    %v2857 = vrot.slane %v2547, 7
    %v2858 = vrot.slane %v2548, 7
    %v2859 = vrot.slane %v2549, 7
    %v2868 = vmul.f32 %v2821, %v2852
    %v2869 = vmul.f32 %v2823, %v2853
    %v2870 = vmul.f32 %v2825, %v2854
    %v2871 = vmul.f32 %v2827, %v2855
    %v2872 = vmul.f32 %v2829, %v2856
    %v2873 = vmul.f32 %v2831, %v2857
    %v2874 = vmul.f32 %v2833, %v2858
    %v2875 = vmul.f32 %v2835, %v2859
    %2884 = vrot.lane.b32.xlu0 %v2836, 32
    %v2885 = vpop.permute.xlu0 %2884
    %2886 = vrot.lane.b32.xlu0 %v2837, 32
    %v2887 = vpop.permute.xlu0 %2886
    %2888 = vrot.lane.b32.xlu0 %v2838, 32
    %v2889 = vpop.permute.xlu0 %2888
    %2890 = vrot.lane.b32.xlu0 %v2839, 32
    %v2891 = vpop.permute.xlu0 %2890
    %2892 = vrot.lane.b32.xlu0 %v2840, 32
    %v2893 = vpop.permute.xlu0 %2892
    %2894 = vrot.lane.b32.xlu0 %v2841, 32
    %v2895 = vpop.permute.xlu0 %2894
    %2896 = vrot.lane.b32.xlu0 %v2842, 32
    %v2897 = vpop.permute.xlu0 %2896
    %2898 = vrot.lane.b32.xlu0 %v2843, 32
    %v2899 = vpop.permute.xlu0 %2898
    %v2908 = vmul.f32 %v2821, %v2885
    %v2909 = vmul.f32 %v2823, %v2887
    %v2910 = vmul.f32 %v2825, %v2889
    %v2911 = vmul.f32 %v2827, %v2891
    %v2912 = vmul.f32 %v2829, %v2893
    %v2913 = vmul.f32 %v2831, %v2895
    %v2914 = vmul.f32 %v2833, %v2897
    %v2915 = vmul.f32 %v2835, %v2899
    %2924 = vrot.lane.b32.xlu0 %v2908, 32
    %v2925 = vpop.permute.xlu0 %2924
    %2926 = vrot.lane.b32.xlu0 %v2909, 32
    %v2927 = vpop.permute.xlu0 %2926
    %2928 = vrot.lane.b32.xlu0 %v2910, 32
    %v2929 = vpop.permute.xlu0 %2928
    %2930 = vrot.lane.b32.xlu0 %v2911, 32
    %v2931 = vpop.permute.xlu0 %2930
    %2932 = vrot.lane.b32.xlu0 %v2912, 32
    %v2933 = vpop.permute.xlu0 %2932
    %2934 = vrot.lane.b32.xlu0 %v2913, 32
    %v2935 = vpop.permute.xlu0 %2934
    %2936 = vrot.lane.b32.xlu0 %v2914, 32
    %v2937 = vpop.permute.xlu0 %2936
    %2938 = vrot.lane.b32.xlu0 %v2915, 32
    %v2939 = vpop.permute.xlu0 %2938
    %v2948 = vadd.f32 %v2868, %v2925
    %v2949 = vadd.f32 %v2869, %v2927
    %v2950 = vadd.f32 %v2870, %v2929
    %v2951 = vadd.f32 %v2871, %v2931
    %v2952 = vadd.f32 %v2872, %v2933
    %v2953 = vadd.f32 %v2873, %v2935
    %v2954 = vadd.f32 %v2874, %v2937
    %v2955 = vadd.f32 %v2875, %v2939
    %v2956 = vtanh.pop %v2948
    %v2957 = vtanh.pop %v2949
    %v2958 = vtanh.pop %v2950
    %v2959 = vtanh.pop %v2951
    %v2960 = vtanh.pop %v2952
    %v2961 = vtanh.pop %v2953
    %v2962 = vtanh.pop %v2954
    %v2963 = vtanh.pop %v2955
    %2972 = vrot.lane.b32.xlu0 %v2956, 32
    %v2973 = vpop.permute.xlu0 %2972
    %2974 = vrot.lane.b32.xlu0 %v2957, 32
    %v2975 = vpop.permute.xlu0 %2974
    %2976 = vrot.lane.b32.xlu0 %v2958, 32
    %v2977 = vpop.permute.xlu0 %2976
    %2978 = vrot.lane.b32.xlu0 %v2959, 32
    %v2979 = vpop.permute.xlu0 %2978
    %2980 = vrot.lane.b32.xlu0 %v2960, 32
    %v2981 = vpop.permute.xlu0 %2980
    %2982 = vrot.lane.b32.xlu0 %v2961, 32
    %v2983 = vpop.permute.xlu0 %2982
    %2984 = vrot.lane.b32.xlu0 %v2962, 32
    %v2985 = vpop.permute.xlu0 %2984
    %2986 = vrot.lane.b32.xlu0 %v2963, 32
    %v2987 = vpop.permute.xlu0 %2986
    %v2996 = vmul.f32 %v2821, %v2973
    %v2997 = vmul.f32 %v2823, %v2975
    %v2998 = vmul.f32 %v2825, %v2977
    %v2999 = vmul.f32 %v2827, %v2979
    %v3000 = vmul.f32 %v2829, %v2981
    %v3001 = vmul.f32 %v2831, %v2983
    %v3002 = vmul.f32 %v2833, %v2985
    %v3003 = vmul.f32 %v2835, %v2987
    %v3012 = vrot.slane %v2996, 6
    %v3013 = vrot.slane %v2997, 5
    %v3014 = vsel %vm570, %v3013, %v3012
    %v3015 = vrot.slane %v2998, 4
    %v3016 = vsel %vm573, %v3015, %v3014
    %v3017 = vrot.slane %v2999, 3
    %v3018 = vsel %vm576, %v3017, %v3016
    %v3019 = vrot.slane %v3000, 2
    %v3020 = vsel %vm579, %v3019, %v3018
    %v3021 = vrot.slane %v3001, 1
    %v3022 = vsel %vm582, %v3021, %v3020
    %v3023 = vsel %vm585, %v3002, %v3022
    %v3024 = vrot.slane %v3003, 7
    %v3025 = vsel %vm588, %v3024, %v3023
    %3026 = vrot.lane.b32.xlu0 %v3025, 64
    %v3027 = vpop.permute.xlu0 %3026
    %v3028 = vsel %vm265, %v3027, 0
    %3030 = vmatprep.subr.mxu0 0.0
    %3031 = vmatpush1.msra.mxu0 0.0
    %3032 = vmatprep.subr.mxu0 0.0
    %3033 = vmatpush1.msra.mxu0 0.0
    %3034 = vmatprep.subr.mxu0 0.0
    %3035 = vmatpush1.msra.mxu0 0.0
    %3036 = vmatprep.subr.mxu0 0.0
    %3037 = vmatpush1.msra.mxu0 0.0
    %3038 = vmatprep.subr.mxu0 0.0
    %3039 = vmatpush1.msra.mxu0 0.0
    %3040 = vmatprep.subr.mxu0 0.0
    %3041 = vmatpush1.msra.mxu0 0.0
    %3042 = vmatprep.subr.mxu0 0.0
    %3043 = vmatpush1.msra.mxu0 0.0
    %3044 = vmatprep.subr.mxu0 0.0
    %3045 = vmatpush1.msra.mxu0 0.0
    %3046 = vmatprep.subr.mxu0 0.0
    %3047 = vmatpush1.msra.mxu0 0.0
    %3048 = vmatprep.subr.mxu0 0.0
    %3049 = vmatpush1.msra.mxu0 0.0
    %3050 = vmatprep.subr.mxu0 0.0
    %3051 = vmatpush1.msra.mxu0 0.0
    %3052 = vmatprep.subr.mxu0 0.0
    %3053 = vmatpush1.msra.mxu0 0.0
    %3054 = vmatprep.subr.mxu0 0.0
    %3055 = vmatpush1.msra.mxu0 %v263
    %3056 = vmatprep.subr.mxu0 0.0
    %3057 = vmatpush1.msra.mxu0 %v262
    %3058 = vmatprep.subr.mxu0 0.0
    %3059 = vmatpush1.msra.mxu0 %v261
    %3060 = vmatprep.subr.mxu0 0.0
    %3061 = vmatpush1.msra.mxu0 %v260
    %3062 = vmatprep.subr.mxu0 0.0
    %3063 = vmatpush2.msra.mxu0 0.0
    %3064 = vmatprep.subr.mxu0 0.0
    %3065 = vmatpush2.msra.mxu0 0.0
    %3066 = vmatprep.subr.mxu0 0.0
    %3067 = vmatpush2.msra.mxu0 0.0
    %3068 = vmatprep.subr.mxu0 0.0
    %3069 = vmatpush2.msra.mxu0 0.0
    %3070 = vmatprep.subr.mxu0 0.0
    %3071 = vmatpush2.msra.mxu0 0.0
    %3072 = vmatprep.subr.mxu0 0.0
    %3073 = vmatpush2.msra.mxu0 0.0
    %3074 = vmatprep.subr.mxu0 0.0
    %3075 = vmatpush2.msra.mxu0 0.0
    %3076 = vmatprep.subr.mxu0 0.0
    %3077 = vmatpush2.msra.mxu0 0.0
    %3078 = vmatprep.subr.mxu0 0.0
    %3079 = vmatpush2.msra.mxu0 0.0
    %3080 = vmatprep.subr.mxu0 0.0
    %3081 = vmatpush2.msra.mxu0 0.0
    %3082 = vmatprep.subr.mxu0 0.0
    %3083 = vmatpush2.msra.mxu0 0.0
    %3084 = vmatprep.subr.mxu0 0.0
    %3085 = vmatpush2.msra.mxu0 0.0
    %3086 = vmatprep.subr.mxu0 0.0
    %3087 = vmatpush2.msra.mxu0 0.0
    %3088 = vmatprep.subr.mxu0 0.0
    %3089 = vmatpush2.msra.mxu0 0.0
    %3090 = vmatprep.subr.mxu0 0.0
    %3091 = vmatpush2.msra.mxu0 0.0
    %3092 = vmatprep.subr.mxu0 0.0
    %3093 = vmatpush2.msra.mxu0 0.0
    %3094 = vmatprep.mubr.f32.mxu0 0.0
    %3095 = vmatmul.mubr.f32.gmra.mxu0 %v3028
    %v3096 = vpop.f32.mrf.mxu0
    %v3097 = vadd.f32 %v559, %v3096
    %v3098 = vpop.f32.mrf.mxu0
    %3099 = vdwg.mxu0
    %3100 = vmatprep.subr.mxu0 0.0
    %3101 = vmatpush1.msra.mxu0 0.0
    %3102 = vmatprep.subr.mxu0 0.0
    %3103 = vmatpush1.msra.mxu0 0.0
    %3104 = vmatprep.subr.mxu0 0.0
    %3105 = vmatpush1.msra.mxu0 0.0
    %3106 = vmatprep.subr.mxu0 0.0
    %3107 = vmatpush1.msra.mxu0 0.0
    %3108 = vmatprep.subr.mxu0 0.0
    %3109 = vmatpush1.msra.mxu0 0.0
    %3110 = vmatprep.subr.mxu0 0.0
    %3111 = vmatpush1.msra.mxu0 0.0
    %3112 = vmatprep.subr.mxu0 0.0
    %3113 = vmatpush1.msra.mxu0 0.0
    %3114 = vmatprep.subr.mxu0 0.0
    %3115 = vmatpush1.msra.mxu0 0.0
    %3116 = vmatprep.subr.mxu0 0.0
    %3117 = vmatpush1.msra.mxu0 0.0
    %3118 = vmatprep.subr.mxu0 0.0
    %3119 = vmatpush1.msra.mxu0 0.0
    %3120 = vmatprep.subr.mxu0 0.0
    %3121 = vmatpush1.msra.mxu0 0.0
    %3122 = vmatprep.subr.mxu0 0.0
    %3123 = vmatpush1.msra.mxu0 0.0
    %3124 = vmatprep.subr.mxu0 0.0
    %3125 = vmatpush1.msra.mxu0 %v259
    %3126 = vmatprep.subr.mxu0 0.0
    %3127 = vmatpush1.msra.mxu0 %v258
    %3128 = vmatprep.subr.mxu0 0.0
    %3129 = vmatpush1.msra.mxu0 %v257
    %3130 = vmatprep.subr.mxu0 0.0
    %3131 = vmatpush1.msra.mxu0 %v256
    %3132 = vmatprep.subr.mxu0 0.0
    %3133 = vmatpush2.msra.mxu0 0.0
    %3134 = vmatprep.subr.mxu0 0.0
    %3135 = vmatpush2.msra.mxu0 0.0
    %3136 = vmatprep.subr.mxu0 0.0
    %3137 = vmatpush2.msra.mxu0 0.0
    %3138 = vmatprep.subr.mxu0 0.0
    %3139 = vmatpush2.msra.mxu0 0.0
    %3140 = vmatprep.subr.mxu0 0.0
    %3141 = vmatpush2.msra.mxu0 0.0
    %3142 = vmatprep.subr.mxu0 0.0
    %3143 = vmatpush2.msra.mxu0 0.0
    %3144 = vmatprep.subr.mxu0 0.0
    %3145 = vmatpush2.msra.mxu0 0.0
    %3146 = vmatprep.subr.mxu0 0.0
    %3147 = vmatpush2.msra.mxu0 0.0
    %3148 = vmatprep.subr.mxu0 0.0
    %3149 = vmatpush2.msra.mxu0 0.0
    %3150 = vmatprep.subr.mxu0 0.0
    %3151 = vmatpush2.msra.mxu0 0.0
    %3152 = vmatprep.subr.mxu0 0.0
    %3153 = vmatpush2.msra.mxu0 0.0
    %3154 = vmatprep.subr.mxu0 0.0
    %3155 = vmatpush2.msra.mxu0 0.0
    %3156 = vmatprep.subr.mxu0 0.0
    %3157 = vmatpush2.msra.mxu0 0.0
    %3158 = vmatprep.subr.mxu0 0.0
    %3159 = vmatpush2.msra.mxu0 0.0
    %3160 = vmatprep.subr.mxu0 0.0
    %3161 = vmatpush2.msra.mxu0 0.0
    %3162 = vmatprep.subr.mxu0 0.0
    %3163 = vmatpush2.msra.mxu0 0.0
    %3164 = vmatprep.mubr.f32.mxu0 0.0
    %3165 = vmatmul.mubr.f32.gmra.mxu0 %v3028
    %v3166 = vpop.f32.mrf.mxu0
    %v3167 = vadd.f32 0.0, %v3166
    %v3168 = vpop.f32.mrf.mxu0
    %3169 = vdwg.mxu0
    %v3171 = vrot.slane %v3167, 1
    %v3172 = vrot.slane %v3167, 2
    %v3173 = vrot.slane %v3167, 3
    %v3174 = vrot.slane %v3167, 4
    %v3175 = vrot.slane %v3167, 5
    %v3176 = vrot.slane %v3167, 6
    %v3177 = vrot.slane %v3167, 7
    %v3186 = vadd.f32 %v218, %v3171
    %v3187 = vadd.f32 %v223, %v3172
    %v3188 = vadd.f32 %v228, %v3173
    %v3189 = vadd.f32 %v233, %v3174
    %v3190 = vadd.f32 %v238, %v3175
    %v3191 = vadd.f32 %v243, %v3176
    %v3192 = vadd.f32 %v248, %v3177
    %v3193 = vadd.f32 %v253, %v3167
    %v3194 = vxor.u32 %v3186, 2147483648
    %v3195 = vxor.u32 %v3187, 2147483648
    %v3196 = vxor.u32 %v3188, 2147483648
    %v3197 = vxor.u32 %v3189, 2147483648
    %v3198 = vxor.u32 %v3190, 2147483648
    %v3199 = vxor.u32 %v3191, 2147483648
    %v3200 = vxor.u32 %v3192, 2147483648
    %v3201 = vxor.u32 %v3193, 2147483648
    %v3202 = vmul.f32 %v3194, 1.442695
    %v3203 = vpow.pop %v3202
    %v3204 = vmul.f32 %v3195, 1.442695
    %v3205 = vpow.pop %v3204
    %v3206 = vmul.f32 %v3196, 1.442695
    %v3207 = vpow.pop %v3206
    %v3208 = vmul.f32 %v3197, 1.442695
    %v3209 = vpow.pop %v3208
    %v3210 = vmul.f32 %v3198, 1.442695
    %v3211 = vpow.pop %v3210
    %v3212 = vmul.f32 %v3199, 1.442695
    %v3213 = vpow.pop %v3212
    %v3214 = vmul.f32 %v3200, 1.442695
    %v3215 = vpow.pop %v3214
    %v3216 = vmul.f32 %v3201, 1.442695
    %v3217 = vpow.pop %v3216
    %v3218 = vadd.f32 %v3203, 1.0
    %v3219 = vadd.f32 %v3205, 1.0
    %v3220 = vadd.f32 %v3207, 1.0
    %v3221 = vadd.f32 %v3209, 1.0
    %v3222 = vadd.f32 %v3211, 1.0
    %v3223 = vadd.f32 %v3213, 1.0
    %v3224 = vadd.f32 %v3215, 1.0
    %v3225 = vadd.f32 %v3217, 1.0
    %v3226 = vrcp.pop %v3218
    %v3227 = vmul.f32 1.0, %v3226
    %v3228 = vrcp.pop %v3219
    %v3229 = vmul.f32 1.0, %v3228
    %v3230 = vrcp.pop %v3220
    %v3231 = vmul.f32 1.0, %v3230
    %v3232 = vrcp.pop %v3221
    %v3233 = vmul.f32 1.0, %v3232
    %v3234 = vrcp.pop %v3222
    %v3235 = vmul.f32 1.0, %v3234
    %v3236 = vrcp.pop %v3223
    %v3237 = vmul.f32 1.0, %v3236
    %v3238 = vrcp.pop %v3224
    %v3239 = vmul.f32 1.0, %v3238
    %v3240 = vrcp.pop %v3225
    %v3241 = vmul.f32 1.0, %v3240
    %v3242 = vtanh.pop %v3186
    %v3243 = vtanh.pop %v3187
    %v3244 = vtanh.pop %v3188
    %v3245 = vtanh.pop %v3189
    %v3246 = vtanh.pop %v3190
    %v3247 = vtanh.pop %v3191
    %v3248 = vtanh.pop %v3192
    %v3249 = vtanh.pop %v3193
    %v3258 = vrot.slane %v2948, 7
    %v3259 = vrot.slane %v2949, 7
    %v3260 = vrot.slane %v2950, 7
    %v3261 = vrot.slane %v2951, 7
    %v3262 = vrot.slane %v2952, 7
    %v3263 = vrot.slane %v2953, 7
    %v3264 = vrot.slane %v2954, 7
    %v3265 = vrot.slane %v2955, 7
    %v3274 = vmul.f32 %v3227, %v3258
    %v3275 = vmul.f32 %v3229, %v3259
    %v3276 = vmul.f32 %v3231, %v3260
    %v3277 = vmul.f32 %v3233, %v3261
    %v3278 = vmul.f32 %v3235, %v3262
    %v3279 = vmul.f32 %v3237, %v3263
    %v3280 = vmul.f32 %v3239, %v3264
    %v3281 = vmul.f32 %v3241, %v3265
    %3290 = vrot.lane.b32.xlu0 %v3242, 32
    %v3291 = vpop.permute.xlu0 %3290
    %3292 = vrot.lane.b32.xlu0 %v3243, 32
    %v3293 = vpop.permute.xlu0 %3292
    %3294 = vrot.lane.b32.xlu0 %v3244, 32
    %v3295 = vpop.permute.xlu0 %3294
    %3296 = vrot.lane.b32.xlu0 %v3245, 32
    %v3297 = vpop.permute.xlu0 %3296
    %3298 = vrot.lane.b32.xlu0 %v3246, 32
    %v3299 = vpop.permute.xlu0 %3298
    %3300 = vrot.lane.b32.xlu0 %v3247, 32
    %v3301 = vpop.permute.xlu0 %3300
    %3302 = vrot.lane.b32.xlu0 %v3248, 32
    %v3303 = vpop.permute.xlu0 %3302
    %3304 = vrot.lane.b32.xlu0 %v3249, 32
    %v3305 = vpop.permute.xlu0 %3304
    %v3314 = vmul.f32 %v3227, %v3291
    %v3315 = vmul.f32 %v3229, %v3293
    %v3316 = vmul.f32 %v3231, %v3295
    %v3317 = vmul.f32 %v3233, %v3297
    %v3318 = vmul.f32 %v3235, %v3299
    %v3319 = vmul.f32 %v3237, %v3301
    %v3320 = vmul.f32 %v3239, %v3303
    %v3321 = vmul.f32 %v3241, %v3305
    %3330 = vrot.lane.b32.xlu0 %v3314, 32
    %v3331 = vpop.permute.xlu0 %3330
    %3332 = vrot.lane.b32.xlu0 %v3315, 32
    %v3333 = vpop.permute.xlu0 %3332
    %3334 = vrot.lane.b32.xlu0 %v3316, 32
    %v3335 = vpop.permute.xlu0 %3334
    %3336 = vrot.lane.b32.xlu0 %v3317, 32
    %v3337 = vpop.permute.xlu0 %3336
    %3338 = vrot.lane.b32.xlu0 %v3318, 32
    %v3339 = vpop.permute.xlu0 %3338
    %3340 = vrot.lane.b32.xlu0 %v3319, 32
    %v3341 = vpop.permute.xlu0 %3340
    %3342 = vrot.lane.b32.xlu0 %v3320, 32
    %v3343 = vpop.permute.xlu0 %3342
    %3344 = vrot.lane.b32.xlu0 %v3321, 32
    %v3345 = vpop.permute.xlu0 %3344
    %v3354 = vadd.f32 %v3274, %v3331
    %v3355 = vadd.f32 %v3275, %v3333
    %v3356 = vadd.f32 %v3276, %v3335
    %v3357 = vadd.f32 %v3277, %v3337
    %v3358 = vadd.f32 %v3278, %v3339
    %v3359 = vadd.f32 %v3279, %v3341
    %v3360 = vadd.f32 %v3280, %v3343
    %v3361 = vadd.f32 %v3281, %v3345
    %v3362 = vtanh.pop %v3354
    %v3363 = vtanh.pop %v3355
    %v3364 = vtanh.pop %v3356
    %v3365 = vtanh.pop %v3357
    %v3366 = vtanh.pop %v3358
    %v3367 = vtanh.pop %v3359
    %v3368 = vtanh.pop %v3360
    %v3369 = vtanh.pop %v3361
    %3378 = vrot.lane.b32.xlu0 %v3362, 32
    %v3379 = vpop.permute.xlu0 %3378
    %3380 = vrot.lane.b32.xlu0 %v3363, 32
    %v3381 = vpop.permute.xlu0 %3380
    %3382 = vrot.lane.b32.xlu0 %v3364, 32
    %v3383 = vpop.permute.xlu0 %3382
    %3384 = vrot.lane.b32.xlu0 %v3365, 32
    %v3385 = vpop.permute.xlu0 %3384
    %3386 = vrot.lane.b32.xlu0 %v3366, 32
    %v3387 = vpop.permute.xlu0 %3386
    %3388 = vrot.lane.b32.xlu0 %v3367, 32
    %v3389 = vpop.permute.xlu0 %3388
    %3390 = vrot.lane.b32.xlu0 %v3368, 32
    %v3391 = vpop.permute.xlu0 %3390
    %3392 = vrot.lane.b32.xlu0 %v3369, 32
    %v3393 = vpop.permute.xlu0 %3392
    %v3402 = vmul.f32 %v3227, %v3379
    %v3403 = vmul.f32 %v3229, %v3381
    %v3404 = vmul.f32 %v3231, %v3383
    %v3405 = vmul.f32 %v3233, %v3385
    %v3406 = vmul.f32 %v3235, %v3387
    %v3407 = vmul.f32 %v3237, %v3389
    %v3408 = vmul.f32 %v3239, %v3391
    %v3409 = vmul.f32 %v3241, %v3393
    %v3418 = vrot.slane %v3402, 7
    %v3419 = vrot.slane %v3403, 6
    %v3420 = vsel %vm570, %v3419, %v3418
    %v3421 = vrot.slane %v3404, 5
    %v3422 = vsel %vm573, %v3421, %v3420
    %v3423 = vrot.slane %v3405, 4
    %v3424 = vsel %vm576, %v3423, %v3422
    %v3425 = vrot.slane %v3406, 3
    %v3426 = vsel %vm579, %v3425, %v3424
    %v3427 = vrot.slane %v3407, 2
    %v3428 = vsel %vm582, %v3427, %v3426
    %v3429 = vrot.slane %v3408, 1
    %v3430 = vsel %vm585, %v3429, %v3428
    %v3431 = vsel %vm588, %v3409, %v3430
    %3432 = vrot.lane.b32.xlu0 %v3431, 64
    %v3433 = vpop.permute.xlu0 %3432
    %v3434 = vsel %vm265, %v3433, 0
    %3436 = vmatprep.subr.mxu0 0.0
    %3437 = vmatpush1.msra.mxu0 0.0
    %3438 = vmatprep.subr.mxu0 0.0
    %3439 = vmatpush1.msra.mxu0 0.0
    %3440 = vmatprep.subr.mxu0 0.0
    %3441 = vmatpush1.msra.mxu0 0.0
    %3442 = vmatprep.subr.mxu0 0.0
    %3443 = vmatpush1.msra.mxu0 0.0
    %3444 = vmatprep.subr.mxu0 0.0
    %3445 = vmatpush1.msra.mxu0 0.0
    %3446 = vmatprep.subr.mxu0 0.0
    %3447 = vmatpush1.msra.mxu0 0.0
    %3448 = vmatprep.subr.mxu0 0.0
    %3449 = vmatpush1.msra.mxu0 0.0
    %3450 = vmatprep.subr.mxu0 0.0
    %3451 = vmatpush1.msra.mxu0 0.0
    %3452 = vmatprep.subr.mxu0 0.0
    %3453 = vmatpush1.msra.mxu0 0.0
    %3454 = vmatprep.subr.mxu0 0.0
    %3455 = vmatpush1.msra.mxu0 0.0
    %3456 = vmatprep.subr.mxu0 0.0
    %3457 = vmatpush1.msra.mxu0 0.0
    %3458 = vmatprep.subr.mxu0 0.0
    %3459 = vmatpush1.msra.mxu0 0.0
    %3460 = vmatprep.subr.mxu0 0.0
    %3461 = vmatpush1.msra.mxu0 %v263
    %3462 = vmatprep.subr.mxu0 0.0
    %3463 = vmatpush1.msra.mxu0 %v262
    %3464 = vmatprep.subr.mxu0 0.0
    %3465 = vmatpush1.msra.mxu0 %v261
    %3466 = vmatprep.subr.mxu0 0.0
    %3467 = vmatpush1.msra.mxu0 %v260
    %3468 = vmatprep.subr.mxu0 0.0
    %3469 = vmatpush2.msra.mxu0 0.0
    %3470 = vmatprep.subr.mxu0 0.0
    %3471 = vmatpush2.msra.mxu0 0.0
    %3472 = vmatprep.subr.mxu0 0.0
    %3473 = vmatpush2.msra.mxu0 0.0
    %3474 = vmatprep.subr.mxu0 0.0
    %3475 = vmatpush2.msra.mxu0 0.0
    %3476 = vmatprep.subr.mxu0 0.0
    %3477 = vmatpush2.msra.mxu0 0.0
    %3478 = vmatprep.subr.mxu0 0.0
    %3479 = vmatpush2.msra.mxu0 0.0
    %3480 = vmatprep.subr.mxu0 0.0
    %3481 = vmatpush2.msra.mxu0 0.0
    %3482 = vmatprep.subr.mxu0 0.0
    %3483 = vmatpush2.msra.mxu0 0.0
    %3484 = vmatprep.subr.mxu0 0.0
    %3485 = vmatpush2.msra.mxu0 0.0
    %3486 = vmatprep.subr.mxu0 0.0
    %3487 = vmatpush2.msra.mxu0 0.0
    %3488 = vmatprep.subr.mxu0 0.0
    %3489 = vmatpush2.msra.mxu0 0.0
    %3490 = vmatprep.subr.mxu0 0.0
    %3491 = vmatpush2.msra.mxu0 0.0
    %3492 = vmatprep.subr.mxu0 0.0
    %3493 = vmatpush2.msra.mxu0 0.0
    %3494 = vmatprep.subr.mxu0 0.0
    %3495 = vmatpush2.msra.mxu0 0.0
    %3496 = vmatprep.subr.mxu0 0.0
    %3497 = vmatpush2.msra.mxu0 0.0
    %3498 = vmatprep.subr.mxu0 0.0
    %3499 = vmatpush2.msra.mxu0 0.0
    %3500 = vmatprep.mubr.f32.mxu0 0.0
    %3501 = vmatmul.mubr.f32.gmra.mxu0 %v3434
    %v3502 = vpop.f32.mrf.mxu0
    %v3503 = vadd.f32 %v559, %v3502
    %v3504 = vpop.f32.mrf.mxu0
    %3505 = vdwg.mxu0
    %v3506 = vld [vmem:[#allocation7] sm:$0xff]
    %v3507 = vld [vmem:[#allocation7 + $0x8] sm:$0xff]
    %v3508 = vld [vmem:[#allocation7 + $0x10] sm:$0xff]
    %v3509 = vld [vmem:[#allocation7 + $0x18] sm:$0xff]
    %3510 = vmatprep.subr.mxu0 0.0
    %3511 = vmatpush1.msra.mxu0 0.0
    %3512 = vmatprep.subr.mxu0 0.0
    %3513 = vmatpush1.msra.mxu0 0.0
    %3514 = vmatprep.subr.mxu0 0.0
    %3515 = vmatpush1.msra.mxu0 0.0
    %3516 = vmatprep.subr.mxu0 0.0
    %3517 = vmatpush1.msra.mxu0 0.0
    %3518 = vmatprep.subr.mxu0 0.0
    %3519 = vmatpush1.msra.mxu0 0.0
    %3520 = vmatprep.subr.mxu0 0.0
    %3521 = vmatpush1.msra.mxu0 0.0
    %3522 = vmatprep.subr.mxu0 0.0
    %3523 = vmatpush1.msra.mxu0 0.0
    %3524 = vmatprep.subr.mxu0 0.0
    %3525 = vmatpush1.msra.mxu0 0.0
    %3526 = vmatprep.subr.mxu0 0.0
    %3527 = vmatpush1.msra.mxu0 0.0
    %3528 = vmatprep.subr.mxu0 0.0
    %3529 = vmatpush1.msra.mxu0 0.0
    %3530 = vmatprep.subr.mxu0 0.0
    %3531 = vmatpush1.msra.mxu0 0.0
    %3532 = vmatprep.subr.mxu0 0.0
    %3533 = vmatpush1.msra.mxu0 0.0
    %3534 = vmatprep.subr.mxu0 0.0
    %3535 = vmatpush1.msra.mxu0 %v3509
    %3536 = vmatprep.subr.mxu0 0.0
    %3537 = vmatpush1.msra.mxu0 %v3508
    %3538 = vmatprep.subr.mxu0 0.0
    %3539 = vmatpush1.msra.mxu0 %v3507
    %3540 = vmatprep.subr.mxu0 0.0
    %3541 = vmatpush1.msra.mxu0 %v3506
    %3542 = vmatprep.subr.mxu0 0.0
    %3543 = vmatpush2.msra.mxu0 0.0
    %3544 = vmatprep.subr.mxu0 0.0
    %3545 = vmatpush2.msra.mxu0 0.0
    %3546 = vmatprep.subr.mxu0 0.0
    %3547 = vmatpush2.msra.mxu0 0.0
    %3548 = vmatprep.subr.mxu0 0.0
    %3549 = vmatpush2.msra.mxu0 0.0
    %3550 = vmatprep.subr.mxu0 0.0
    %3551 = vmatpush2.msra.mxu0 0.0
    %3552 = vmatprep.subr.mxu0 0.0
    %3553 = vmatpush2.msra.mxu0 0.0
    %3554 = vmatprep.subr.mxu0 0.0
    %3555 = vmatpush2.msra.mxu0 0.0
    %3556 = vmatprep.subr.mxu0 0.0
    %3557 = vmatpush2.msra.mxu0 0.0
    %3558 = vmatprep.subr.mxu0 0.0
    %3559 = vmatpush2.msra.mxu0 0.0
    %3560 = vmatprep.subr.mxu0 0.0
    %3561 = vmatpush2.msra.mxu0 0.0
    %3562 = vmatprep.subr.mxu0 0.0
    %3563 = vmatpush2.msra.mxu0 0.0
    %3564 = vmatprep.subr.mxu0 0.0
    %3565 = vmatpush2.msra.mxu0 0.0
    %3566 = vmatprep.subr.mxu0 0.0
    %3567 = vmatpush2.msra.mxu0 0.0
    %3568 = vmatprep.subr.mxu0 0.0
    %3569 = vmatpush2.msra.mxu0 0.0
    %3570 = vmatprep.subr.mxu0 0.0
    %3571 = vmatpush2.msra.mxu0 0.0
    %3572 = vmatprep.subr.mxu0 0.0
    %3573 = vmatpush2.msra.mxu0 0.0
    %3574 = vmatprep.mubr.f32.mxu0 0.0
    %3575 = vmatmul.mubr.f32.gmra.mxu0 %v267
    %v3576 = vpop.f32.mrf.mxu0
    %v3577 = vadd.f32 0.0, %v3576
    %v3578 = vpop.f32.mrf.mxu0
    %3579 = vdwg.mxu0
    %v3580 = vadd.f32 %v661, %v3577
    %v3581 = vxor.u32 %v3580, 2147483648
    %v3582 = vmul.f32 %v3581, 1.442695
    %v3583 = vpow.pop %v3582
    %v3584 = vadd.f32 %v3583, 1.0
    %v3585 = vrcp.pop %v3584
    %v3586 = vmul.f32 1.0, %v3585
    %v3587 = vtanh.pop %v3580
    %v3588 = vmul.f32 %v3586, 0.0
    %3590 = vrot.lane.b32.xlu0 %v3587, 32
    %v3591 = vpop.permute.xlu0 %3590
    %v3593 = vmul.f32 %v3586, %v3591
    %3595 = vrot.lane.b32.xlu0 %v3593, 32
    %v3596 = vpop.permute.xlu0 %3595
    %v3598 = vadd.f32 %v3588, %v3596
    %v3599 = vtanh.pop %v3598
    %3601 = vrot.lane.b32.xlu0 %v3599, 32
    %v3602 = vpop.permute.xlu0 %3601
    %v3604 = vmul.f32 %v3586, %v3602
    %3606 = vrot.lane.b32.xlu0 %v3604, 64
    %v3607 = vpop.permute.xlu0 %3606
    %v3608 = vsel %vm265, %v3607, 0
    %3610 = vmatprep.subr.mxu0 0.0
    %3611 = vmatpush1.msra.mxu0 0.0
    %3612 = vmatprep.subr.mxu0 0.0
    %3613 = vmatpush1.msra.mxu0 0.0
    %3614 = vmatprep.subr.mxu0 0.0
    %3615 = vmatpush1.msra.mxu0 0.0
    %3616 = vmatprep.subr.mxu0 0.0
    %3617 = vmatpush1.msra.mxu0 0.0
    %3618 = vmatprep.subr.mxu0 0.0
    %3619 = vmatpush1.msra.mxu0 0.0
    %3620 = vmatprep.subr.mxu0 0.0
    %3621 = vmatpush1.msra.mxu0 0.0
    %3622 = vmatprep.subr.mxu0 0.0
    %3623 = vmatpush1.msra.mxu0 0.0
    %3624 = vmatprep.subr.mxu0 0.0
    %3625 = vmatpush1.msra.mxu0 0.0
    %3626 = vmatprep.subr.mxu0 0.0
    %3627 = vmatpush1.msra.mxu0 0.0
    %3628 = vmatprep.subr.mxu0 0.0
    %3629 = vmatpush1.msra.mxu0 0.0
    %3630 = vmatprep.subr.mxu0 0.0
    %3631 = vmatpush1.msra.mxu0 0.0
    %3632 = vmatprep.subr.mxu0 0.0
    %3633 = vmatpush1.msra.mxu0 0.0
    %3634 = vmatprep.subr.mxu0 0.0
    %3635 = vmatpush1.msra.mxu0 %v3509
    %3636 = vmatprep.subr.mxu0 0.0
    %3637 = vmatpush1.msra.mxu0 %v3508
    %3638 = vmatprep.subr.mxu0 0.0
    %3639 = vmatpush1.msra.mxu0 %v3507
    %3640 = vmatprep.subr.mxu0 0.0
    %3641 = vmatpush1.msra.mxu0 %v3506
    %3642 = vmatprep.subr.mxu0 0.0
    %3643 = vmatpush2.msra.mxu0 0.0
    %3644 = vmatprep.subr.mxu0 0.0
    %3645 = vmatpush2.msra.mxu0 0.0
    %3646 = vmatprep.subr.mxu0 0.0
    %3647 = vmatpush2.msra.mxu0 0.0
    %3648 = vmatprep.subr.mxu0 0.0
    %3649 = vmatpush2.msra.mxu0 0.0
    %3650 = vmatprep.subr.mxu0 0.0
    %3651 = vmatpush2.msra.mxu0 0.0
    %3652 = vmatprep.subr.mxu0 0.0
    %3653 = vmatpush2.msra.mxu0 0.0
    %3654 = vmatprep.subr.mxu0 0.0
    %3655 = vmatpush2.msra.mxu0 0.0
    %3656 = vmatprep.subr.mxu0 0.0
    %3657 = vmatpush2.msra.mxu0 0.0
    %3658 = vmatprep.subr.mxu0 0.0
    %3659 = vmatpush2.msra.mxu0 0.0
    %3660 = vmatprep.subr.mxu0 0.0
    %3661 = vmatpush2.msra.mxu0 0.0
    %3662 = vmatprep.subr.mxu0 0.0
    %3663 = vmatpush2.msra.mxu0 0.0
    %3664 = vmatprep.subr.mxu0 0.0
    %3665 = vmatpush2.msra.mxu0 0.0
    %3666 = vmatprep.subr.mxu0 0.0
    %3667 = vmatpush2.msra.mxu0 0.0
    %3668 = vmatprep.subr.mxu0 0.0
    %3669 = vmatpush2.msra.mxu0 0.0
    %3670 = vmatprep.subr.mxu0 0.0
    %3671 = vmatpush2.msra.mxu0 0.0
    %3672 = vmatprep.subr.mxu0 0.0
    %3673 = vmatpush2.msra.mxu0 0.0
    %3674 = vmatprep.mubr.f32.mxu0 0.0
    %3675 = vmatmul.mubr.f32.gmra.mxu0 %v3608
    %v3676 = vpop.f32.mrf.mxu0
    %v3677 = vadd.f32 0.0, %v3676
    %v3678 = vpop.f32.mrf.mxu0
    %3679 = vdwg.mxu0
    %v3680 = vadd.f32 %v1067, %v3677
    %v3681 = vxor.u32 %v3680, 2147483648
    %v3682 = vmul.f32 %v3681, 1.442695
    %v3683 = vpow.pop %v3682
    %v3684 = vadd.f32 %v3683, 1.0
    %v3685 = vrcp.pop %v3684
    %v3686 = vmul.f32 1.0, %v3685
    %v3687 = vtanh.pop %v3680
    %v3688 = vmul.f32 %v3686, %v3598
    %3690 = vrot.lane.b32.xlu0 %v3687, 32
    %v3691 = vpop.permute.xlu0 %3690
    %v3693 = vmul.f32 %v3686, %v3691
    %3695 = vrot.lane.b32.xlu0 %v3693, 32
    %v3696 = vpop.permute.xlu0 %3695
    %v3698 = vadd.f32 %v3688, %v3696
    %v3699 = vtanh.pop %v3698
    %3701 = vrot.lane.b32.xlu0 %v3699, 32
    %v3702 = vpop.permute.xlu0 %3701
    %v3704 = vmul.f32 %v3686, %v3702
    %3706 = vrot.lane.b32.xlu0 %v3704, 64
    %v3707 = vpop.permute.xlu0 %3706
    %v3708 = vsel %vm265, %v3707, 0
    %3710 = vmatprep.subr.mxu0 0.0
    %3711 = vmatpush1.msra.mxu0 0.0
    %3712 = vmatprep.subr.mxu0 0.0
    %3713 = vmatpush1.msra.mxu0 0.0
    %3714 = vmatprep.subr.mxu0 0.0
    %3715 = vmatpush1.msra.mxu0 0.0
    %3716 = vmatprep.subr.mxu0 0.0
    %3717 = vmatpush1.msra.mxu0 0.0
    %3718 = vmatprep.subr.mxu0 0.0
    %3719 = vmatpush1.msra.mxu0 0.0
    %3720 = vmatprep.subr.mxu0 0.0
    %3721 = vmatpush1.msra.mxu0 0.0
    %3722 = vmatprep.subr.mxu0 0.0
    %3723 = vmatpush1.msra.mxu0 0.0
    %3724 = vmatprep.subr.mxu0 0.0
    %3725 = vmatpush1.msra.mxu0 0.0
    %3726 = vmatprep.subr.mxu0 0.0
    %3727 = vmatpush1.msra.mxu0 0.0
    %3728 = vmatprep.subr.mxu0 0.0
    %3729 = vmatpush1.msra.mxu0 0.0
    %3730 = vmatprep.subr.mxu0 0.0
    %3731 = vmatpush1.msra.mxu0 0.0
    %3732 = vmatprep.subr.mxu0 0.0
    %3733 = vmatpush1.msra.mxu0 0.0
    %3734 = vmatprep.subr.mxu0 0.0
    %3735 = vmatpush1.msra.mxu0 %v3509
    %3736 = vmatprep.subr.mxu0 0.0
    %3737 = vmatpush1.msra.mxu0 %v3508
    %3738 = vmatprep.subr.mxu0 0.0
    %3739 = vmatpush1.msra.mxu0 %v3507
    %3740 = vmatprep.subr.mxu0 0.0
    %3741 = vmatpush1.msra.mxu0 %v3506
    %3742 = vmatprep.subr.mxu0 0.0
    %3743 = vmatpush2.msra.mxu0 0.0
    %3744 = vmatprep.subr.mxu0 0.0
    %3745 = vmatpush2.msra.mxu0 0.0
    %3746 = vmatprep.subr.mxu0 0.0
    %3747 = vmatpush2.msra.mxu0 0.0
    %3748 = vmatprep.subr.mxu0 0.0
    %3749 = vmatpush2.msra.mxu0 0.0
    %3750 = vmatprep.subr.mxu0 0.0
    %3751 = vmatpush2.msra.mxu0 0.0
    %3752 = vmatprep.subr.mxu0 0.0
    %3753 = vmatpush2.msra.mxu0 0.0
    %3754 = vmatprep.subr.mxu0 0.0
    %3755 = vmatpush2.msra.mxu0 0.0
    %3756 = vmatprep.subr.mxu0 0.0
    %3757 = vmatpush2.msra.mxu0 0.0
    %3758 = vmatprep.subr.mxu0 0.0
    %3759 = vmatpush2.msra.mxu0 0.0
    %3760 = vmatprep.subr.mxu0 0.0
    %3761 = vmatpush2.msra.mxu0 0.0
    %3762 = vmatprep.subr.mxu0 0.0
    %3763 = vmatpush2.msra.mxu0 0.0
    %3764 = vmatprep.subr.mxu0 0.0
    %3765 = vmatpush2.msra.mxu0 0.0
    %3766 = vmatprep.subr.mxu0 0.0
    %3767 = vmatpush2.msra.mxu0 0.0
    %3768 = vmatprep.subr.mxu0 0.0
    %3769 = vmatpush2.msra.mxu0 0.0
    %3770 = vmatprep.subr.mxu0 0.0
    %3771 = vmatpush2.msra.mxu0 0.0
    %3772 = vmatprep.subr.mxu0 0.0
    %3773 = vmatpush2.msra.mxu0 0.0
    %3774 = vmatprep.mubr.f32.mxu0 0.0
    %3775 = vmatmul.mubr.f32.gmra.mxu0 %v3708
    %v3776 = vpop.f32.mrf.mxu0
    %v3777 = vadd.f32 0.0, %v3776
    %v3778 = vpop.f32.mrf.mxu0
    %3779 = vdwg.mxu0
    %v3780 = vadd.f32 %v1473, %v3777
    %v3781 = vxor.u32 %v3780, 2147483648
    %v3782 = vmul.f32 %v3781, 1.442695
    %v3783 = vpow.pop %v3782
    %v3784 = vadd.f32 %v3783, 1.0
    %v3785 = vrcp.pop %v3784
    %v3786 = vmul.f32 1.0, %v3785
    %v3787 = vtanh.pop %v3780
    %v3788 = vmul.f32 %v3786, %v3698
    %3790 = vrot.lane.b32.xlu0 %v3787, 32
    %v3791 = vpop.permute.xlu0 %3790
    %v3793 = vmul.f32 %v3786, %v3791
    %3795 = vrot.lane.b32.xlu0 %v3793, 32
    %v3796 = vpop.permute.xlu0 %3795
    %v3798 = vadd.f32 %v3788, %v3796
    %v3799 = vtanh.pop %v3798
    %3801 = vrot.lane.b32.xlu0 %v3799, 32
    %v3802 = vpop.permute.xlu0 %3801
    %v3804 = vmul.f32 %v3786, %v3802
    %3806 = vrot.lane.b32.xlu0 %v3804, 64
    %v3807 = vpop.permute.xlu0 %3806
    %v3808 = vsel %vm265, %v3807, 0
    %3810 = vmatprep.subr.mxu0 0.0
    %3811 = vmatpush1.msra.mxu0 0.0
    %3812 = vmatprep.subr.mxu0 0.0
    %3813 = vmatpush1.msra.mxu0 0.0
    %3814 = vmatprep.subr.mxu0 0.0
    %3815 = vmatpush1.msra.mxu0 0.0
    %3816 = vmatprep.subr.mxu0 0.0
    %3817 = vmatpush1.msra.mxu0 0.0
    %3818 = vmatprep.subr.mxu0 0.0
    %3819 = vmatpush1.msra.mxu0 0.0
    %3820 = vmatprep.subr.mxu0 0.0
    %3821 = vmatpush1.msra.mxu0 0.0
    %3822 = vmatprep.subr.mxu0 0.0
    %3823 = vmatpush1.msra.mxu0 0.0
    %3824 = vmatprep.subr.mxu0 0.0
    %3825 = vmatpush1.msra.mxu0 0.0
    %3826 = vmatprep.subr.mxu0 0.0
    %3827 = vmatpush1.msra.mxu0 0.0
    %3828 = vmatprep.subr.mxu0 0.0
    %3829 = vmatpush1.msra.mxu0 0.0
    %3830 = vmatprep.subr.mxu0 0.0
    %3831 = vmatpush1.msra.mxu0 0.0
    %3832 = vmatprep.subr.mxu0 0.0
    %3833 = vmatpush1.msra.mxu0 0.0
    %3834 = vmatprep.subr.mxu0 0.0
    %3835 = vmatpush1.msra.mxu0 %v3509
    %3836 = vmatprep.subr.mxu0 0.0
    %3837 = vmatpush1.msra.mxu0 %v3508
    %3838 = vmatprep.subr.mxu0 0.0
    %3839 = vmatpush1.msra.mxu0 %v3507
    %3840 = vmatprep.subr.mxu0 0.0
    %3841 = vmatpush1.msra.mxu0 %v3506
    %3842 = vmatprep.subr.mxu0 0.0
    %3843 = vmatpush2.msra.mxu0 0.0
    %3844 = vmatprep.subr.mxu0 0.0
    %3845 = vmatpush2.msra.mxu0 0.0
    %3846 = vmatprep.subr.mxu0 0.0
    %3847 = vmatpush2.msra.mxu0 0.0
    %3848 = vmatprep.subr.mxu0 0.0
    %3849 = vmatpush2.msra.mxu0 0.0
    %3850 = vmatprep.subr.mxu0 0.0
    %3851 = vmatpush2.msra.mxu0 0.0
    %3852 = vmatprep.subr.mxu0 0.0
    %3853 = vmatpush2.msra.mxu0 0.0
    %3854 = vmatprep.subr.mxu0 0.0
    %3855 = vmatpush2.msra.mxu0 0.0
    %3856 = vmatprep.subr.mxu0 0.0
    %3857 = vmatpush2.msra.mxu0 0.0
    %3858 = vmatprep.subr.mxu0 0.0
    %3859 = vmatpush2.msra.mxu0 0.0
    %3860 = vmatprep.subr.mxu0 0.0
    %3861 = vmatpush2.msra.mxu0 0.0
    %3862 = vmatprep.subr.mxu0 0.0
    %3863 = vmatpush2.msra.mxu0 0.0
    %3864 = vmatprep.subr.mxu0 0.0
    %3865 = vmatpush2.msra.mxu0 0.0
    %3866 = vmatprep.subr.mxu0 0.0
    %3867 = vmatpush2.msra.mxu0 0.0
    %3868 = vmatprep.subr.mxu0 0.0
    %3869 = vmatpush2.msra.mxu0 0.0
    %3870 = vmatprep.subr.mxu0 0.0
    %3871 = vmatpush2.msra.mxu0 0.0
    %3872 = vmatprep.subr.mxu0 0.0
    %3873 = vmatpush2.msra.mxu0 0.0
    %3874 = vmatprep.mubr.f32.mxu0 0.0
    %3875 = vmatmul.mubr.f32.gmra.mxu0 %v3808
    %v3876 = vpop.f32.mrf.mxu0
    %v3877 = vadd.f32 0.0, %v3876
    %v3878 = vpop.f32.mrf.mxu0
    %3879 = vdwg.mxu0
    %v3880 = vadd.f32 %v1879, %v3877
    %v3881 = vxor.u32 %v3880, 2147483648
    %v3882 = vmul.f32 %v3881, 1.442695
    %v3883 = vpow.pop %v3882
    %v3884 = vadd.f32 %v3883, 1.0
    %v3885 = vrcp.pop %v3884
    %v3886 = vmul.f32 1.0, %v3885
    %v3887 = vtanh.pop %v3880
    %v3888 = vmul.f32 %v3886, %v3798
    %3890 = vrot.lane.b32.xlu0 %v3887, 32
    %v3891 = vpop.permute.xlu0 %3890
    %v3893 = vmul.f32 %v3886, %v3891
    %3895 = vrot.lane.b32.xlu0 %v3893, 32
    %v3896 = vpop.permute.xlu0 %3895
    %v3898 = vadd.f32 %v3888, %v3896
    %v3899 = vtanh.pop %v3898
    %3901 = vrot.lane.b32.xlu0 %v3899, 32
    %v3902 = vpop.permute.xlu0 %3901
    %v3904 = vmul.f32 %v3886, %v3902
    %3906 = vrot.lane.b32.xlu0 %v3904, 64
    %v3907 = vpop.permute.xlu0 %3906
    %v3908 = vsel %vm265, %v3907, 0
    %3910 = vmatprep.subr.mxu0 0.0
    %3911 = vmatpush1.msra.mxu0 0.0
    %3912 = vmatprep.subr.mxu0 0.0
    %3913 = vmatpush1.msra.mxu0 0.0
    %3914 = vmatprep.subr.mxu0 0.0
    %3915 = vmatpush1.msra.mxu0 0.0
    %3916 = vmatprep.subr.mxu0 0.0
    %3917 = vmatpush1.msra.mxu0 0.0
    %3918 = vmatprep.subr.mxu0 0.0
    %3919 = vmatpush1.msra.mxu0 0.0
    %3920 = vmatprep.subr.mxu0 0.0
    %3921 = vmatpush1.msra.mxu0 0.0
    %3922 = vmatprep.subr.mxu0 0.0
    %3923 = vmatpush1.msra.mxu0 0.0
    %3924 = vmatprep.subr.mxu0 0.0
    %3925 = vmatpush1.msra.mxu0 0.0
    %3926 = vmatprep.subr.mxu0 0.0
    %3927 = vmatpush1.msra.mxu0 0.0
    %3928 = vmatprep.subr.mxu0 0.0
    %3929 = vmatpush1.msra.mxu0 0.0
    %3930 = vmatprep.subr.mxu0 0.0
    %3931 = vmatpush1.msra.mxu0 0.0
    %3932 = vmatprep.subr.mxu0 0.0
    %3933 = vmatpush1.msra.mxu0 0.0
    %3934 = vmatprep.subr.mxu0 0.0
    %3935 = vmatpush1.msra.mxu0 %v3509
    %3936 = vmatprep.subr.mxu0 0.0
    %3937 = vmatpush1.msra.mxu0 %v3508
    %3938 = vmatprep.subr.mxu0 0.0
    %3939 = vmatpush1.msra.mxu0 %v3507
    %3940 = vmatprep.subr.mxu0 0.0
    %3941 = vmatpush1.msra.mxu0 %v3506
    %3942 = vmatprep.subr.mxu0 0.0
    %3943 = vmatpush2.msra.mxu0 0.0
    %3944 = vmatprep.subr.mxu0 0.0
    %3945 = vmatpush2.msra.mxu0 0.0
    %3946 = vmatprep.subr.mxu0 0.0
    %3947 = vmatpush2.msra.mxu0 0.0
    %3948 = vmatprep.subr.mxu0 0.0
    %3949 = vmatpush2.msra.mxu0 0.0
    %3950 = vmatprep.subr.mxu0 0.0
    %3951 = vmatpush2.msra.mxu0 0.0
    %3952 = vmatprep.subr.mxu0 0.0
    %3953 = vmatpush2.msra.mxu0 0.0
    %3954 = vmatprep.subr.mxu0 0.0
    %3955 = vmatpush2.msra.mxu0 0.0
    %3956 = vmatprep.subr.mxu0 0.0
    %3957 = vmatpush2.msra.mxu0 0.0
    %3958 = vmatprep.subr.mxu0 0.0
    %3959 = vmatpush2.msra.mxu0 0.0
    %3960 = vmatprep.subr.mxu0 0.0
    %3961 = vmatpush2.msra.mxu0 0.0
    %3962 = vmatprep.subr.mxu0 0.0
    %3963 = vmatpush2.msra.mxu0 0.0
    %3964 = vmatprep.subr.mxu0 0.0
    %3965 = vmatpush2.msra.mxu0 0.0
    %3966 = vmatprep.subr.mxu0 0.0
    %3967 = vmatpush2.msra.mxu0 0.0
    %3968 = vmatprep.subr.mxu0 0.0
    %3969 = vmatpush2.msra.mxu0 0.0
    %3970 = vmatprep.subr.mxu0 0.0
    %3971 = vmatpush2.msra.mxu0 0.0
    %3972 = vmatprep.subr.mxu0 0.0
    %3973 = vmatpush2.msra.mxu0 0.0
    %3974 = vmatprep.mubr.f32.mxu0 0.0
    %3975 = vmatmul.mubr.f32.gmra.mxu0 %v3908
    %v3976 = vpop.f32.mrf.mxu0
    %v3977 = vadd.f32 0.0, %v3976
    %v3978 = vpop.f32.mrf.mxu0
    %3979 = vdwg.mxu0
    %v3980 = vadd.f32 %v2285, %v3977
    %v3981 = vxor.u32 %v3980, 2147483648
    %v3982 = vmul.f32 %v3981, 1.442695
    %v3983 = vpow.pop %v3982
    %v3984 = vadd.f32 %v3983, 1.0
    %v3985 = vrcp.pop %v3984
    %v3986 = vmul.f32 1.0, %v3985
    %v3987 = vtanh.pop %v3980
    %v3988 = vmul.f32 %v3986, %v3898
    %3990 = vrot.lane.b32.xlu0 %v3987, 32
    %v3991 = vpop.permute.xlu0 %3990
    %v3993 = vmul.f32 %v3986, %v3991
    %3995 = vrot.lane.b32.xlu0 %v3993, 32
    %v3996 = vpop.permute.xlu0 %3995
    %v3998 = vadd.f32 %v3988, %v3996
    %v3999 = vtanh.pop %v3998
    %4001 = vrot.lane.b32.xlu0 %v3999, 32
    %v4002 = vpop.permute.xlu0 %4001
    %v4004 = vmul.f32 %v3986, %v4002
    %4006 = vrot.lane.b32.xlu0 %v4004, 64
    %v4007 = vpop.permute.xlu0 %4006
    %v4008 = vsel %vm265, %v4007, 0
    %4010 = vmatprep.subr.mxu0 0.0
    %4011 = vmatpush1.msra.mxu0 0.0
    %4012 = vmatprep.subr.mxu0 0.0
    %4013 = vmatpush1.msra.mxu0 0.0
    %4014 = vmatprep.subr.mxu0 0.0
    %4015 = vmatpush1.msra.mxu0 0.0
    %4016 = vmatprep.subr.mxu0 0.0
    %4017 = vmatpush1.msra.mxu0 0.0
    %4018 = vmatprep.subr.mxu0 0.0
    %4019 = vmatpush1.msra.mxu0 0.0
    %4020 = vmatprep.subr.mxu0 0.0
    %4021 = vmatpush1.msra.mxu0 0.0
    %4022 = vmatprep.subr.mxu0 0.0
    %4023 = vmatpush1.msra.mxu0 0.0
    %4024 = vmatprep.subr.mxu0 0.0
    %4025 = vmatpush1.msra.mxu0 0.0
    %4026 = vmatprep.subr.mxu0 0.0
    %4027 = vmatpush1.msra.mxu0 0.0
    %4028 = vmatprep.subr.mxu0 0.0
    %4029 = vmatpush1.msra.mxu0 0.0
    %4030 = vmatprep.subr.mxu0 0.0
    %4031 = vmatpush1.msra.mxu0 0.0
    %4032 = vmatprep.subr.mxu0 0.0
    %4033 = vmatpush1.msra.mxu0 0.0
    %4034 = vmatprep.subr.mxu0 0.0
    %4035 = vmatpush1.msra.mxu0 %v3509
    %4036 = vmatprep.subr.mxu0 0.0
    %4037 = vmatpush1.msra.mxu0 %v3508
    %4038 = vmatprep.subr.mxu0 0.0
    %4039 = vmatpush1.msra.mxu0 %v3507
    %4040 = vmatprep.subr.mxu0 0.0
    %4041 = vmatpush1.msra.mxu0 %v3506
    %4042 = vmatprep.subr.mxu0 0.0
    %4043 = vmatpush2.msra.mxu0 0.0
    %4044 = vmatprep.subr.mxu0 0.0
    %4045 = vmatpush2.msra.mxu0 0.0
    %4046 = vmatprep.subr.mxu0 0.0
    %4047 = vmatpush2.msra.mxu0 0.0
    %4048 = vmatprep.subr.mxu0 0.0
    %4049 = vmatpush2.msra.mxu0 0.0
    %4050 = vmatprep.subr.mxu0 0.0
    %4051 = vmatpush2.msra.mxu0 0.0
    %4052 = vmatprep.subr.mxu0 0.0
    %4053 = vmatpush2.msra.mxu0 0.0
    %4054 = vmatprep.subr.mxu0 0.0
    %4055 = vmatpush2.msra.mxu0 0.0
    %4056 = vmatprep.subr.mxu0 0.0
    %4057 = vmatpush2.msra.mxu0 0.0
    %4058 = vmatprep.subr.mxu0 0.0
    %4059 = vmatpush2.msra.mxu0 0.0
    %4060 = vmatprep.subr.mxu0 0.0
    %4061 = vmatpush2.msra.mxu0 0.0
    %4062 = vmatprep.subr.mxu0 0.0
    %4063 = vmatpush2.msra.mxu0 0.0
    %4064 = vmatprep.subr.mxu0 0.0
    %4065 = vmatpush2.msra.mxu0 0.0
    %4066 = vmatprep.subr.mxu0 0.0
    %4067 = vmatpush2.msra.mxu0 0.0
    %4068 = vmatprep.subr.mxu0 0.0
    %4069 = vmatpush2.msra.mxu0 0.0
    %4070 = vmatprep.subr.mxu0 0.0
    %4071 = vmatpush2.msra.mxu0 0.0
    %4072 = vmatprep.subr.mxu0 0.0
    %4073 = vmatpush2.msra.mxu0 0.0
    %4074 = vmatprep.mubr.f32.mxu0 0.0
    %4075 = vmatmul.mubr.f32.gmra.mxu0 %v4008
    %v4076 = vpop.f32.mrf.mxu0
    %v4077 = vadd.f32 0.0, %v4076
    %v4078 = vpop.f32.mrf.mxu0
    %4079 = vdwg.mxu0
    %v4080 = vadd.f32 %v2691, %v4077
    %v4081 = vxor.u32 %v4080, 2147483648
    %v4082 = vmul.f32 %v4081, 1.442695
    %v4083 = vpow.pop %v4082
    %v4084 = vadd.f32 %v4083, 1.0
    %v4085 = vrcp.pop %v4084
    %v4086 = vmul.f32 1.0, %v4085
    %v4087 = vtanh.pop %v4080
    %v4088 = vmul.f32 %v4086, %v3998
    %4090 = vrot.lane.b32.xlu0 %v4087, 32
    %v4091 = vpop.permute.xlu0 %4090
    %v4093 = vmul.f32 %v4086, %v4091
    %4095 = vrot.lane.b32.xlu0 %v4093, 32
    %v4096 = vpop.permute.xlu0 %4095
    %v4098 = vadd.f32 %v4088, %v4096
    %v4099 = vtanh.pop %v4098
    %4101 = vrot.lane.b32.xlu0 %v4099, 32
    %v4102 = vpop.permute.xlu0 %4101
    %v4104 = vmul.f32 %v4086, %v4102
    %4106 = vrot.lane.b32.xlu0 %v4104, 64
    %v4107 = vpop.permute.xlu0 %4106
    %v4108 = vsel %vm265, %v4107, 0
    %4110 = vmatprep.subr.mxu0 0.0
    %4111 = vmatpush1.msra.mxu0 0.0
    %4112 = vmatprep.subr.mxu0 0.0
    %4113 = vmatpush1.msra.mxu0 0.0
    %4114 = vmatprep.subr.mxu0 0.0
    %4115 = vmatpush1.msra.mxu0 0.0
    %4116 = vmatprep.subr.mxu0 0.0
    %4117 = vmatpush1.msra.mxu0 0.0
    %4118 = vmatprep.subr.mxu0 0.0
    %4119 = vmatpush1.msra.mxu0 0.0
    %4120 = vmatprep.subr.mxu0 0.0
    %4121 = vmatpush1.msra.mxu0 0.0
    %4122 = vmatprep.subr.mxu0 0.0
    %4123 = vmatpush1.msra.mxu0 0.0
    %4124 = vmatprep.subr.mxu0 0.0
    %4125 = vmatpush1.msra.mxu0 0.0
    %4126 = vmatprep.subr.mxu0 0.0
    %4127 = vmatpush1.msra.mxu0 0.0
    %4128 = vmatprep.subr.mxu0 0.0
    %4129 = vmatpush1.msra.mxu0 0.0
    %4130 = vmatprep.subr.mxu0 0.0
    %4131 = vmatpush1.msra.mxu0 0.0
    %4132 = vmatprep.subr.mxu0 0.0
    %4133 = vmatpush1.msra.mxu0 0.0
    %4134 = vmatprep.subr.mxu0 0.0
    %4135 = vmatpush1.msra.mxu0 %v3509
    %4136 = vmatprep.subr.mxu0 0.0
    %4137 = vmatpush1.msra.mxu0 %v3508
    %4138 = vmatprep.subr.mxu0 0.0
    %4139 = vmatpush1.msra.mxu0 %v3507
    %4140 = vmatprep.subr.mxu0 0.0
    %4141 = vmatpush1.msra.mxu0 %v3506
    %4142 = vmatprep.subr.mxu0 0.0
    %4143 = vmatpush2.msra.mxu0 0.0
    %4144 = vmatprep.subr.mxu0 0.0
    %4145 = vmatpush2.msra.mxu0 0.0
    %4146 = vmatprep.subr.mxu0 0.0
    %4147 = vmatpush2.msra.mxu0 0.0
    %4148 = vmatprep.subr.mxu0 0.0
    %4149 = vmatpush2.msra.mxu0 0.0
    %4150 = vmatprep.subr.mxu0 0.0
    %4151 = vmatpush2.msra.mxu0 0.0
    %4152 = vmatprep.subr.mxu0 0.0
    %4153 = vmatpush2.msra.mxu0 0.0
    %4154 = vmatprep.subr.mxu0 0.0
    %4155 = vmatpush2.msra.mxu0 0.0
    %4156 = vmatprep.subr.mxu0 0.0
    %4157 = vmatpush2.msra.mxu0 0.0
    %4158 = vmatprep.subr.mxu0 0.0
    %4159 = vmatpush2.msra.mxu0 0.0
    %4160 = vmatprep.subr.mxu0 0.0
    %4161 = vmatpush2.msra.mxu0 0.0
    %4162 = vmatprep.subr.mxu0 0.0
    %4163 = vmatpush2.msra.mxu0 0.0
    %4164 = vmatprep.subr.mxu0 0.0
    %4165 = vmatpush2.msra.mxu0 0.0
    %4166 = vmatprep.subr.mxu0 0.0
    %4167 = vmatpush2.msra.mxu0 0.0
    %4168 = vmatprep.subr.mxu0 0.0
    %4169 = vmatpush2.msra.mxu0 0.0
    %4170 = vmatprep.subr.mxu0 0.0
    %4171 = vmatpush2.msra.mxu0 0.0
    %4172 = vmatprep.subr.mxu0 0.0
    %4173 = vmatpush2.msra.mxu0 0.0
    %4174 = vmatprep.mubr.f32.mxu0 0.0
    %4175 = vmatmul.mubr.f32.gmra.mxu0 %v4108
    %v4176 = vpop.f32.mrf.mxu0
    %v4177 = vadd.f32 0.0, %v4176
    %v4178 = vpop.f32.mrf.mxu0
    %4179 = vdwg.mxu0
    %v4180 = vadd.f32 %v3097, %v4177
    %v4181 = vxor.u32 %v4180, 2147483648
    %v4182 = vmul.f32 %v4181, 1.442695
    %v4183 = vpow.pop %v4182
    %v4184 = vadd.f32 %v4183, 1.0
    %v4185 = vrcp.pop %v4184
    %v4186 = vmul.f32 1.0, %v4185
    %v4187 = vtanh.pop %v4180
    %v4188 = vmul.f32 %v4186, %v4098
    %4190 = vrot.lane.b32.xlu0 %v4187, 32
    %v4191 = vpop.permute.xlu0 %4190
    %v4193 = vmul.f32 %v4186, %v4191
    %4195 = vrot.lane.b32.xlu0 %v4193, 32
    %v4196 = vpop.permute.xlu0 %4195
    %v4198 = vadd.f32 %v4188, %v4196
    %v4199 = vtanh.pop %v4198
    %4201 = vrot.lane.b32.xlu0 %v4199, 32
    %v4202 = vpop.permute.xlu0 %4201
    %v4204 = vmul.f32 %v4186, %v4202
    %4206 = vrot.lane.b32.xlu0 %v4204, 64
    %v4207 = vpop.permute.xlu0 %4206
    %v4208 = vsel %vm265, %v4207, 0
    %4210 = vmatprep.subr.mxu0 0.0
    %4211 = vmatpush1.msra.mxu0 0.0
    %4212 = vmatprep.subr.mxu0 0.0
    %4213 = vmatpush1.msra.mxu0 0.0
    %4214 = vmatprep.subr.mxu0 0.0
    %4215 = vmatpush1.msra.mxu0 0.0
    %4216 = vmatprep.subr.mxu0 0.0
    %4217 = vmatpush1.msra.mxu0 0.0
    %4218 = vmatprep.subr.mxu0 0.0
    %4219 = vmatpush1.msra.mxu0 0.0
    %4220 = vmatprep.subr.mxu0 0.0
    %4221 = vmatpush1.msra.mxu0 0.0
    %4222 = vmatprep.subr.mxu0 0.0
    %4223 = vmatpush1.msra.mxu0 0.0
    %4224 = vmatprep.subr.mxu0 0.0
    %4225 = vmatpush1.msra.mxu0 0.0
    %4226 = vmatprep.subr.mxu0 0.0
    %4227 = vmatpush1.msra.mxu0 0.0
    %4228 = vmatprep.subr.mxu0 0.0
    %4229 = vmatpush1.msra.mxu0 0.0
    %4230 = vmatprep.subr.mxu0 0.0
    %4231 = vmatpush1.msra.mxu0 0.0
    %4232 = vmatprep.subr.mxu0 0.0
    %4233 = vmatpush1.msra.mxu0 0.0
    %4234 = vmatprep.subr.mxu0 0.0
    %4235 = vmatpush1.msra.mxu0 %v3509
    %4236 = vmatprep.subr.mxu0 0.0
    %4237 = vmatpush1.msra.mxu0 %v3508
    %4238 = vmatprep.subr.mxu0 0.0
    %4239 = vmatpush1.msra.mxu0 %v3507
    %4240 = vmatprep.subr.mxu0 0.0
    %4241 = vmatpush1.msra.mxu0 %v3506
    %4242 = vmatprep.subr.mxu0 0.0
    %4243 = vmatpush2.msra.mxu0 0.0
    %4244 = vmatprep.subr.mxu0 0.0
    %4245 = vmatpush2.msra.mxu0 0.0
    %4246 = vmatprep.subr.mxu0 0.0
    %4247 = vmatpush2.msra.mxu0 0.0
    %4248 = vmatprep.subr.mxu0 0.0
    %4249 = vmatpush2.msra.mxu0 0.0
    %4250 = vmatprep.subr.mxu0 0.0
    %4251 = vmatpush2.msra.mxu0 0.0
    %4252 = vmatprep.subr.mxu0 0.0
    %4253 = vmatpush2.msra.mxu0 0.0
    %4254 = vmatprep.subr.mxu0 0.0
    %4255 = vmatpush2.msra.mxu0 0.0
    %4256 = vmatprep.subr.mxu0 0.0
    %4257 = vmatpush2.msra.mxu0 0.0
    %4258 = vmatprep.subr.mxu0 0.0
    %4259 = vmatpush2.msra.mxu0 0.0
    %4260 = vmatprep.subr.mxu0 0.0
    %4261 = vmatpush2.msra.mxu0 0.0
    %4262 = vmatprep.subr.mxu0 0.0
    %4263 = vmatpush2.msra.mxu0 0.0
    %4264 = vmatprep.subr.mxu0 0.0
    %4265 = vmatpush2.msra.mxu0 0.0
    %4266 = vmatprep.subr.mxu0 0.0
    %4267 = vmatpush2.msra.mxu0 0.0
    %4268 = vmatprep.subr.mxu0 0.0
    %4269 = vmatpush2.msra.mxu0 0.0
    %4270 = vmatprep.subr.mxu0 0.0
    %4271 = vmatpush2.msra.mxu0 0.0
    %4272 = vmatprep.subr.mxu0 0.0
    %4273 = vmatpush2.msra.mxu0 0.0
    %4274 = vmatprep.mubr.f32.mxu0 0.0
    %4275 = vmatmul.mubr.f32.gmra.mxu0 %v4208
    %v4276 = vpop.f32.mrf.mxu0
    %v4277 = vadd.f32 0.0, %v4276
    %v4278 = vpop.f32.mrf.mxu0
    %4279 = vdwg.mxu0
    %v4280 = vadd.f32 %v3503, %v4277
    %v4281 = vxor.u32 %v4280, 2147483648
    %v4282 = vmul.f32 %v4281, 1.442695
    %v4283 = vpow.pop %v4282
    %v4284 = vadd.f32 %v4283, 1.0
    %v4285 = vrcp.pop %v4284
    %v4286 = vmul.f32 1.0, %v4285
    %v4287 = vtanh.pop %v4280
    %v4288 = vmul.f32 %v4286, %v4198
    %4290 = vrot.lane.b32.xlu0 %v4287, 32
    %v4291 = vpop.permute.xlu0 %4290
    %v4293 = vmul.f32 %v4286, %v4291
    %4295 = vrot.lane.b32.xlu0 %v4293, 32
    %v4296 = vpop.permute.xlu0 %4295
    %v4298 = vadd.f32 %v4288, %v4296
    %v4299 = vtanh.pop %v4298
    %4301 = vrot.lane.b32.xlu0 %v4299, 32
    %v4302 = vpop.permute.xlu0 %4301
    %v4304 = vmul.f32 %v4286, %v4302
    %v4305 = vld [vmem:[#allocation8] sm:$0xff]
    %v4306 = vld [vmem:[#allocation8 + $0x8] sm:$0xff]
    %v4307 = vld [vmem:[#allocation8 + $0x10] sm:$0xff]
    %v4308 = vld [vmem:[#allocation8 + $0x18] sm:$0xff]
    %v4309 = vld [vmem:[#allocation3] sm:$0xff]
    %v4310 = vld [vmem:[%s9] sm:$0xff]
    %vm4311 = vcmask 64512
    %v4313 = vsel %vm4311, %v4309, 0
    %4315 = vmatprep.subr.mxu0 0.0
    %4316 = vmatpush1.msra.mxu0 0.0
    %4317 = vmatprep.subr.mxu0 0.0
    %4318 = vmatpush1.msra.mxu0 0.0
    %4319 = vmatprep.subr.mxu0 0.0
    %4320 = vmatpush1.msra.mxu0 0.0
    %4321 = vmatprep.subr.mxu0 0.0
    %4322 = vmatpush1.msra.mxu0 0.0
    %4323 = vmatprep.subr.mxu0 0.0
    %4324 = vmatpush1.msra.mxu0 0.0
    %4325 = vmatprep.subr.mxu0 0.0
    %4326 = vmatpush1.msra.mxu0 0.0
    %4327 = vmatprep.subr.mxu0 0.0
    %4328 = vmatpush1.msra.mxu0 0.0
    %4329 = vmatprep.subr.mxu0 0.0
    %4330 = vmatpush1.msra.mxu0 0.0
    %4331 = vmatprep.subr.mxu0 0.0
    %4332 = vmatpush1.msra.mxu0 0.0
    %4333 = vmatprep.subr.mxu0 0.0
    %4334 = vmatpush1.msra.mxu0 0.0
    %4335 = vmatprep.subr.mxu0 0.0
    %4336 = vmatpush1.msra.mxu0 0.0
    %4337 = vmatprep.subr.mxu0 0.0
    %4338 = vmatpush1.msra.mxu0 0.0
    %4339 = vmatprep.subr.mxu0 0.0
    %4340 = vmatpush1.msra.mxu0 0.0
    %4341 = vmatprep.subr.mxu0 0.0
    %4342 = vmatpush1.msra.mxu0 0.0
    %4343 = vmatprep.subr.mxu0 0.0
    %4344 = vmatpush1.msra.mxu0 0.0
    %4345 = vmatprep.subr.mxu0 0.0
    %4346 = vmatpush1.msra.mxu0 %v4310
    %4347 = vmatprep.subr.mxu0 0.0
    %4348 = vmatpush2.msra.mxu0 0.0
    %4349 = vmatprep.subr.mxu0 0.0
    %4350 = vmatpush2.msra.mxu0 0.0
    %4351 = vmatprep.subr.mxu0 0.0
    %4352 = vmatpush2.msra.mxu0 0.0
    %4353 = vmatprep.subr.mxu0 0.0
    %4354 = vmatpush2.msra.mxu0 0.0
    %4355 = vmatprep.subr.mxu0 0.0
    %4356 = vmatpush2.msra.mxu0 0.0
    %4357 = vmatprep.subr.mxu0 0.0
    %4358 = vmatpush2.msra.mxu0 0.0
    %4359 = vmatprep.subr.mxu0 0.0
    %4360 = vmatpush2.msra.mxu0 0.0
    %4361 = vmatprep.subr.mxu0 0.0
    %4362 = vmatpush2.msra.mxu0 0.0
    %4363 = vmatprep.subr.mxu0 0.0
    %4364 = vmatpush2.msra.mxu0 0.0
    %4365 = vmatprep.subr.mxu0 0.0
    %4366 = vmatpush2.msra.mxu0 0.0
    %4367 = vmatprep.subr.mxu0 0.0
    %4368 = vmatpush2.msra.mxu0 0.0
    %4369 = vmatprep.subr.mxu0 0.0
    %4370 = vmatpush2.msra.mxu0 0.0
    %4371 = vmatprep.subr.mxu0 0.0
    %4372 = vmatpush2.msra.mxu0 0.0
    %4373 = vmatprep.subr.mxu0 0.0
    %4374 = vmatpush2.msra.mxu0 0.0
    %4375 = vmatprep.subr.mxu0 0.0
    %4376 = vmatpush2.msra.mxu0 0.0
    %4377 = vmatprep.subr.mxu0 0.0
    %4378 = vmatpush2.msra.mxu0 0.0
    %4379 = vmatprep.mubr.f32.mxu0 0.0
    %4380 = vmatmul.mubr.f32.gmra.mxu0 %v4313
    %v4381 = vpop.f32.mrf.mxu0
    %v4382 = vadd.f32 0.0, %v4381
    %v4383 = vpop.f32.mrf.mxu0
    %4384 = vdwg.mxu0
    %4386 = vrot.lane.b32.xlu0 %v4304, 64
    %v4387 = vpop.permute.xlu0 %4386
    %v4388 = vsel %vm265, %v4387, 0
    %4390 = vmatprep.subr.mxu0 0.0
    %4391 = vmatpush1.msra.mxu0 0.0
    %4392 = vmatprep.subr.mxu0 0.0
    %4393 = vmatpush1.msra.mxu0 0.0
    %4394 = vmatprep.subr.mxu0 0.0
    %4395 = vmatpush1.msra.mxu0 0.0
    %4396 = vmatprep.subr.mxu0 0.0
    %4397 = vmatpush1.msra.mxu0 0.0
    %4398 = vmatprep.subr.mxu0 0.0
    %4399 = vmatpush1.msra.mxu0 0.0
    %4400 = vmatprep.subr.mxu0 0.0
    %4401 = vmatpush1.msra.mxu0 0.0
    %4402 = vmatprep.subr.mxu0 0.0
    %4403 = vmatpush1.msra.mxu0 0.0
    %4404 = vmatprep.subr.mxu0 0.0
    %4405 = vmatpush1.msra.mxu0 0.0
    %4406 = vmatprep.subr.mxu0 0.0
    %4407 = vmatpush1.msra.mxu0 0.0
    %4408 = vmatprep.subr.mxu0 0.0
    %4409 = vmatpush1.msra.mxu0 0.0
    %4410 = vmatprep.subr.mxu0 0.0
    %4411 = vmatpush1.msra.mxu0 0.0
    %4412 = vmatprep.subr.mxu0 0.0
    %4413 = vmatpush1.msra.mxu0 0.0
    %4414 = vmatprep.subr.mxu0 0.0
    %4415 = vmatpush1.msra.mxu0 %v4308
    %4416 = vmatprep.subr.mxu0 0.0
    %4417 = vmatpush1.msra.mxu0 %v4307
    %4418 = vmatprep.subr.mxu0 0.0
    %4419 = vmatpush1.msra.mxu0 %v4306
    %4420 = vmatprep.subr.mxu0 0.0
    %4421 = vmatpush1.msra.mxu0 %v4305
    %4422 = vmatprep.subr.mxu0 0.0
    %4423 = vmatpush2.msra.mxu0 0.0
    %4424 = vmatprep.subr.mxu0 0.0
    %4425 = vmatpush2.msra.mxu0 0.0
    %4426 = vmatprep.subr.mxu0 0.0
    %4427 = vmatpush2.msra.mxu0 0.0
    %4428 = vmatprep.subr.mxu0 0.0
    %4429 = vmatpush2.msra.mxu0 0.0
    %4430 = vmatprep.subr.mxu0 0.0
    %4431 = vmatpush2.msra.mxu0 0.0
    %4432 = vmatprep.subr.mxu0 0.0
    %4433 = vmatpush2.msra.mxu0 0.0
    %4434 = vmatprep.subr.mxu0 0.0
    %4435 = vmatpush2.msra.mxu0 0.0
    %4436 = vmatprep.subr.mxu0 0.0
    %4437 = vmatpush2.msra.mxu0 0.0
    %4438 = vmatprep.subr.mxu0 0.0
    %4439 = vmatpush2.msra.mxu0 0.0
    %4440 = vmatprep.subr.mxu0 0.0
    %4441 = vmatpush2.msra.mxu0 0.0
    %4442 = vmatprep.subr.mxu0 0.0
    %4443 = vmatpush2.msra.mxu0 0.0
    %4444 = vmatprep.subr.mxu0 0.0
    %4445 = vmatpush2.msra.mxu0 0.0
    %4446 = vmatprep.subr.mxu0 0.0
    %4447 = vmatpush2.msra.mxu0 0.0
    %4448 = vmatprep.subr.mxu0 0.0
    %4449 = vmatpush2.msra.mxu0 0.0
    %4450 = vmatprep.subr.mxu0 0.0
    %4451 = vmatpush2.msra.mxu0 0.0
    %4452 = vmatprep.subr.mxu0 0.0
    %4453 = vmatpush2.msra.mxu0 0.0
    %4454 = vmatprep.mubr.f32.mxu0 0.0
    %4455 = vmatmul.mubr.f32.gmra.mxu0 %v4388
    %v4456 = vpop.f32.mrf.mxu0
    %v4457 = vadd.f32 %v4382, %v4456
    %v4458 = vpop.f32.mrf.mxu0
    %4459 = vdwg.mxu0
    %v4460 = vld [vmem:[#allocation10] sm:$0x1]
    %v4462 = vlaneseq
    %v4463 = vshrl.u32 %v4462, 7
    %v4464 = vsub.s32 0, %v4463
    %v4465 = vrot.slane %v4460, %v4464
    %v4467 = vadd.f32 %v4457, %v4465
    %v4468 = vmax.f32 %v4467, 0.0
    %v4469 = vld [vmem:[%s11] sm:$0xff]
    %v4470 = vld [vmem:[%s11 + $0x8] sm:$0xff]
    %v4471 = vld [vmem:[%s11 + $0x10] sm:$0xff]
    %v4472 = vld [vmem:[%s11 + $0x18] sm:$0xff]
    %v4473 = vld [vmem:[%s11 + $0x20] sm:$0xff]
    %v4474 = vld [vmem:[%s11 + $0x28] sm:$0xff]
    %v4475 = vld [vmem:[%s11 + $0x30] sm:$0xff]
    %v4476 = vld [vmem:[%s11 + $0x38] sm:$0xff]
    %v4477 = vld [vmem:[%s11 + $0x40] sm:$0xff]
    %v4478 = vld [vmem:[%s11 + $0x48] sm:$0xff]
    %v4479 = vld [vmem:[%s11 + $0x50] sm:$0xff]
    %v4480 = vld [vmem:[%s11 + $0x58] sm:$0xff]
    %v4481 = vld [vmem:[%s11 + $0x60] sm:$0xff]
    %v4482 = vld [vmem:[%s11 + $0x68] sm:$0xff]
    %v4483 = vld [vmem:[%s11 + $0x70] sm:$0xff]
    %v4484 = vld [vmem:[%s11 + $0x78] sm:$0xff]
    %s4485 = sld [smem:[#allocation2]]
    %v4486 = vstv %s4485
    %4487 = vmatprep.subr.mxu0 0.0
    %4488 = vmatpush1.msra.mxu0 %v4484
    %4489 = vmatprep.subr.mxu0 0.0
    %4490 = vmatpush1.msra.mxu0 %v4483
    %4491 = vmatprep.subr.mxu0 0.0
    %4492 = vmatpush1.msra.mxu0 %v4482
    %4493 = vmatprep.subr.mxu0 0.0
    %4494 = vmatpush1.msra.mxu0 %v4481
    %4495 = vmatprep.subr.mxu0 0.0
    %4496 = vmatpush1.msra.mxu0 %v4480
    %4497 = vmatprep.subr.mxu0 0.0
    %4498 = vmatpush1.msra.mxu0 %v4479
    %4499 = vmatprep.subr.mxu0 0.0
    %4500 = vmatpush1.msra.mxu0 %v4478
    %4501 = vmatprep.subr.mxu0 0.0
    %4502 = vmatpush1.msra.mxu0 %v4477
    %4503 = vmatprep.subr.mxu0 0.0
    %4504 = vmatpush1.msra.mxu0 %v4476
    %4505 = vmatprep.subr.mxu0 0.0
    %4506 = vmatpush1.msra.mxu0 %v4475
    %4507 = vmatprep.subr.mxu0 0.0
    %4508 = vmatpush1.msra.mxu0 %v4474
    %4509 = vmatprep.subr.mxu0 0.0
    %4510 = vmatpush1.msra.mxu0 %v4473
    %4511 = vmatprep.subr.mxu0 0.0
    %4512 = vmatpush1.msra.mxu0 %v4472
    %4513 = vmatprep.subr.mxu0 0.0
    %4514 = vmatpush1.msra.mxu0 %v4471
    %4515 = vmatprep.subr.mxu0 0.0
    %4516 = vmatpush1.msra.mxu0 %v4470
    %4517 = vmatprep.subr.mxu0 0.0
    %4518 = vmatpush1.msra.mxu0 %v4469
    %4519 = vmatprep.subr.mxu0 0.0
    %4520 = vmatpush2.msra.mxu0 0.0
    %4521 = vmatprep.subr.mxu0 0.0
    %4522 = vmatpush2.msra.mxu0 0.0
    %4523 = vmatprep.subr.mxu0 0.0
    %4524 = vmatpush2.msra.mxu0 0.0
    %4525 = vmatprep.subr.mxu0 0.0
    %4526 = vmatpush2.msra.mxu0 0.0
    %4527 = vmatprep.subr.mxu0 0.0
    %4528 = vmatpush2.msra.mxu0 0.0
    %4529 = vmatprep.subr.mxu0 0.0
    %4530 = vmatpush2.msra.mxu0 0.0
    %4531 = vmatprep.subr.mxu0 0.0
    %4532 = vmatpush2.msra.mxu0 0.0
    %4533 = vmatprep.subr.mxu0 0.0
    %4534 = vmatpush2.msra.mxu0 0.0
    %4535 = vmatprep.subr.mxu0 0.0
    %4536 = vmatpush2.msra.mxu0 0.0
    %4537 = vmatprep.subr.mxu0 0.0
    %4538 = vmatpush2.msra.mxu0 0.0
    %4539 = vmatprep.subr.mxu0 0.0
    %4540 = vmatpush2.msra.mxu0 0.0
    %4541 = vmatprep.subr.mxu0 0.0
    %4542 = vmatpush2.msra.mxu0 0.0
    %4543 = vmatprep.subr.mxu0 0.0
    %4544 = vmatpush2.msra.mxu0 0.0
    %4545 = vmatprep.subr.mxu0 0.0
    %4546 = vmatpush2.msra.mxu0 0.0
    %4547 = vmatprep.subr.mxu0 0.0
    %4548 = vmatpush2.msra.mxu0 0.0
    %4549 = vmatprep.subr.mxu0 0.0
    %4550 = vmatpush2.msra.mxu0 0.0
    %4551 = vmatprep.mubr.f32.mxu0 0.0
    %4552 = vmatmul.mubr.f32.gmra.mxu0 %v4468
    %v4553 = vpop.f32.mrf.mxu0
    %v4554 = vadd.f32 %v4486, %v4553
    %v4555 = vpop.f32.mrf.mxu0
    %4556 = vdwg.mxu0
    %vm4557 = vcmask 7168
    %4558 = vst.msk [vmem:[%s13] sm:$0xff] %vm4557, %v4554
    // Predicated region
    $region74: #{lstm_classifier_v2_forward.1} parent=1 // pred_check
      _
    $region75: #{lstm_classifier_v2_forward.1} parent=1 // pred_check_branch
      %4560 = sbr.rel (0) target = $region77
    $region76: #{lstm_classifier_v2_forward.1} parent=1 // pred_region
      _
    $region77: #{lstm_classifier_v2_forward.1} parent=1 // pred_fallthru
      _
    // Predicated region
    $region78: #{lstm_classifier_v2_forward.1} parent=1 // pred_check
      _
    $region79: #{lstm_classifier_v2_forward.1} parent=1 // pred_check_branch
      %4562 = sbr.rel (0) target = $region81
    $region80: #{lstm_classifier_v2_forward.1} parent=1 // pred_region
      _
    $region81: #{lstm_classifier_v2_forward.1} parent=1 // pred_fallthru
      _
    %4563 = vsyncpa [#allocation4], 1
    %4564 = vsyncpa [#allocation6], 1
    %4565 = vsyncpa [#allocation9], 1

</llo_original>
